<compile_context>
chip_gen: v7x
topology: tpu7x:2x2x1
jax: 0.10.0
libtpu: 0.0.40
codegen_flags: <defaults>
</compile_context>

<pallas_src>
import jax
import jax.numpy as jnp
from jax import lax
from jax.experimental import pallas as pl
from jax.experimental.pallas import tpu as pltpu

C_IN, C_MID, C_OUT = 768, 256, 128     # fixed by the nn.Module definition
K = 3              # Conv1d kernel size
CPAD = 2           # Conv1d padding (= K - 1, a "full" conv)
PK = 2             # MaxPool1d kernel size
PPAD = PK // 2     # MaxPool1d padding, clamped (see TODO above)
EPS = 1e-5         # BatchNorm eps

# bf16 operands give ~2x MXU rate on v6e/v7x and halve x / weight / activation
# DMA bytes; all matmul accumulation and all BatchNorm statistics stay f32.
# Set both to jnp.float32 for exact parity with the PyTorch f32 reference.
MXU_DTYPE = jnp.bfloat16   # conv matmul operand dtype
ACT_DTYPE = jnp.bfloat16   # inter-stage activation storage (y1 / y2)

_UNROLL = 8                # per-sample loop unroll factor (bounded)


def _default_vmem_limit():
    """Scoped-VMEM limit per generation: ~3/4 of physical, clamped to [32,96] MiB.
    v7x (64 MiB physical) -> 48 MiB; v5e/v6e (128 MiB) -> 96 MiB."""
    cap = 64 * 1024 * 1024
    try:
        cap = int(pltpu.get_tpu_info().vmem_capacity_bytes)
    except Exception:
        pass
    return int(min(max(cap * 3 // 4, 32 * 1024 * 1024), 96 * 1024 * 1024))


VMEM_LIMIT_BYTES = _default_vmem_limit()

# Conservative stage-1 VMEM cost per flattened input row (bf16 x double-buffer
# + f32 wide-matmul scratch + bf16 y1 block double-buffer).
_BYTES_PER_ROW = 8 * 1024


def _conv_len(l):
    return l + 2 * CPAD - K + 1


def _pool_len(l):
    return l + 2 * PPAD - PK + 1       # stride 1


def _pick_batch_tile(batch, length, vmem_limit=VMEM_LIMIT_BYTES):
    """Samples per grid step.

    Target ~1.5K flattened rows (BT * L) to amortize the ~0.35 us per-grid-step
    overhead and weight streaming, capped by the VMEM budget; prefer >= 2 grid
    steps (pipeline overlap) and an even grid (v7x's two TensorCores).  The
    flattened (BT*L, C_IN) input block must be 8-sublane tileable unless it
    covers the whole batch.  Ties break toward the LARGER tile.
    """
    target_rows = 1536
    max_rows = max(length, (vmem_limit // 2) // _BYTES_PER_ROW)
    cands = [bt for bt in range(1, batch + 1)
             if batch % bt == 0 and ((bt * length) % 8 == 0 or bt == batch)]

    def score(bt):
        rows = bt * length
        g = batch // bt
        s = min(rows, target_rows)
        if rows > max_rows:                 # strongly penalize VMEM overshoot
            s -= (rows - max_rows)
        if g >= 2:
            s += 256                        # keep the BlockSpec pipeline busy
        if g % 2 == 0:
            s += 64                         # even split across two TCs (v7x)
        return s

    return max(cands, key=lambda bt: (score(bt), bt))


# ---------------------------------------------------------------------------
# Stage 1: Conv1d(768->256, k=3, pad=2) + bias + ReLU, fused BN1 partial stats
# ---------------------------------------------------------------------------
def stage1_kernel(x_ref, w1_ref, b1_ref,              # inputs
                  y1_ref, s1_ref, q1_ref,             # outputs
                  mm_ref):                            # scratch
    # x_ref : (BT*L, 768) flattened batch tile (MXU dtype)
    # w1_ref: (768, 3*256) = [W0 | W1 | W2] concatenated along output channels
    # y1_ref: (BT, L1, 256) = relu(conv + bias) (the BN1 input), ACT dtype
    # s1/q1 : (1, 1, 256) per-tile sum / sum-of-squares over (BT, L1), f32
    bt, l1, _ = y1_ref.shape
    l = x_ref.shape[0] // bt
    b1 = b1_ref[...]                                   # hoisted (1, 256) f32

    # Single wide MXU matmul over the whole flattened batch tile.
    mm_ref[...] = jnp.dot(x_ref[...], w1_ref[...],
                          preferred_element_type=jnp.float32)

    # Hoisted zero rows used by the shifted-read conv assembly.
    z1 = jnp.zeros((1, C_MID), jnp.float32)
    z2 = jnp.zeros((2, C_MID), jnp.float32)

    def per_sample(s, carry):
        acc_sum, acc_sq = carry
        blk = mm_ref[pl.ds(s * l, l), :]               # one load per sample
        t0 = blk[:, 0 * C_MID:1 * C_MID]               # lane-aligned tap slices
        t1 = blk[:, 1 * C_MID:2 * C_MID]
        t2 = blk[:, 2 * C_MID:3 * C_MID]
        # out[i] = tap2[i] + tap1[i-1] + tap0[i-2]  (full conv, pad = 2),
        # assembled by shifting the READS; single aligned store per sample.
        conv = (jnp.concatenate([t2, z2], axis=0)
                + jnp.concatenate([z1, t1, z1], axis=0)
                + jnp.concatenate([z2, t0], axis=0))
        ys = jnp.maximum(conv + b1, 0.0)               # ReLU precedes BN1
        y1_ref[s] = ys.astype(y1_ref.dtype)
        return (acc_sum + jnp.sum(ys, axis=0, keepdims=True),
                acc_sq + jnp.sum(ys * ys, axis=0, keepdims=True))

    zero = jnp.zeros((1, C_MID), jnp.float32)
    acc_sum, acc_sq = lax.fori_loop(0, bt, per_sample, (zero, zero),
                                    unroll=min(bt, _UNROLL))
    s1_ref[0] = acc_sum
    q1_ref[0] = acc_sq


# ---------------------------------------------------------------------------
# Stage 2: BN1-apply + MaxPool1d + Conv1d(256->128) + bias, fused BN2 stats
# ---------------------------------------------------------------------------
def stage2_kernel(y1_ref, sc1_ref, sh1_ref, w2_ref, b2_ref,      # inputs
                  y2_ref, s2_ref, q2_ref,                        # outputs
                  pool_ref, mm_ref):                             # scratch
    bt, l1, _ = y1_ref.shape
    p1 = pool_ref.shape[0] // bt
    scale1 = sc1_ref[...]                              # hoisted (1, 256) f32
    shift1 = sh1_ref[...]
    b2 = b2_ref[...]                                   # (1, 128) f32

    # Pass A: BN1-apply + max-pool (k=2, s=1, pad=1).  Edge-replication is
    # equivalent to -inf padding for a max pool; pooled rows are computed as
    # max(shift-up, shift-down) and written exactly once, already in the MXU
    # dtype, into the flattened conv2 input buffer.
    def bn_pool(s, _):
        bn = y1_ref[s].astype(jnp.float32) * scale1 + shift1        # (L1, 256)
        top = jnp.concatenate([bn[0:1, :], bn], axis=0)             # (P1, 256)
        bot = jnp.concatenate([bn, bn[l1 - 1:l1, :]], axis=0)       # (P1, 256)
        pool_ref[pl.ds(s * p1, p1), :] = jnp.maximum(top, bot).astype(pool_ref.dtype)
        return 0

    lax.fori_loop(0, bt, bn_pool, 0, unroll=min(bt, _UNROLL))

    # Pass B: single wide conv2 matmul over the whole pooled batch tile
    # (w2_ref = [W0 | W1 | W2] along output channels, N = 384).
    mm_ref[...] = jnp.dot(pool_ref[...], w2_ref[...],
                          preferred_element_type=jnp.float32)

    # Pass C: per-sample shifted-read assembly + bias + BN2 partial stats
    # (no ReLU here: BN2 precedes ReLU in stage 2).
    z1 = jnp.zeros((1, C_OUT), jnp.float32)
    z2 = jnp.zeros((2, C_OUT), jnp.float32)

    def per_sample(s, carry):
        acc_sum, acc_sq = carry
        blk = mm_ref[pl.ds(s * p1, p1), :]
        t0 = blk[:, 0 * C_OUT:1 * C_OUT]
        t1 = blk[:, 1 * C_OUT:2 * C_OUT]
        t2 = blk[:, 2 * C_OUT:3 * C_OUT]
        ys = (jnp.concatenate([t2, z2], axis=0)
              + jnp.concatenate([z1, t1, z1], axis=0)
              + jnp.concatenate([z2, t0], axis=0)) + b2              # (L2, 128)
        y2_ref[s] = ys.astype(y2_ref.dtype)
        return (acc_sum + jnp.sum(ys, axis=0, keepdims=True),
                acc_sq + jnp.sum(ys * ys, axis=0, keepdims=True))

    zero = jnp.zeros((1, C_OUT), jnp.float32)
    acc_sum, acc_sq = lax.fori_loop(0, bt, per_sample, (zero, zero),
                                    unroll=min(bt, _UNROLL))
    s2_ref[0] = acc_sum
    q2_ref[0] = acc_sq


# ---------------------------------------------------------------------------
# Stage 3: BN2-apply + ReLU + MaxPool1d, fused into the output write
# ---------------------------------------------------------------------------
def stage3_kernel(y2_ref, sc2_ref, sh2_ref, out_ref):
    bt, l2, _ = y2_ref.shape
    scale2 = sc2_ref[...]
    shift2 = sh2_ref[...]

    def per_sample(s, _):
        r = jnp.maximum(y2_ref[s].astype(jnp.float32) * scale2 + shift2, 0.0)
        top = jnp.concatenate([r[0:1, :], r], axis=0)               # (P2, 128)
        bot = jnp.concatenate([r, r[l2 - 1:l2, :]], axis=0)
        out_ref[s] = jnp.maximum(top, bot).astype(out_ref.dtype)
        return 0

    lax.fori_loop(0, bt, per_sample, 0, unroll=min(bt, _UNROLL))


# ---------------------------------------------------------------------------
# Wrapper
# ---------------------------------------------------------------------------
@jax.jit
def cnn_forward(x, w1, b1, g1, be1, w2, b2, g2, be2):
    """x: (B, L, 768) float32  ->  (B, 128, L_out), matching CNN.forward."""
    B, L, _ = x.shape
    L1 = _conv_len(L)
    P1 = _pool_len(L1)
    L2 = _conv_len(P1)
    P2 = _pool_len(L2)

    BT = _pick_batch_tile(B, L)
    G = B // BT

    cparams = pltpu.CompilerParams(dimension_semantics=("parallel",),
                                   vmem_limit_bytes=VMEM_LIMIT_BYTES)

    # Flatten the batch into the matmul M dim and concatenate the K conv taps
    # along the output-channel axis (layout plumbing done once in XLA).
    x2 = x.reshape(B * L, C_IN).astype(MXU_DTYPE)
    w1_cat = jnp.transpose(w1, (1, 0, 2)).reshape(C_IN, K * C_MID).astype(MXU_DTYPE)
    w2_cat = jnp.transpose(w2, (1, 0, 2)).reshape(C_MID, K * C_OUT).astype(MXU_DTYPE)

    # ---- stage 1: conv1 + bias + ReLU (+ fused BN1 partial statistics) ----
    y1, s1, q1 = pl.pallas_call(
        stage1_kernel,
        out_shape=(jax.ShapeDtypeStruct((B, L1, C_MID), ACT_DTYPE),
                   jax.ShapeDtypeStruct((G, 1, C_MID), jnp.float32),
                   jax.ShapeDtypeStruct((G, 1, C_MID), jnp.float32)),
        grid=(G,),
        in_specs=[pl.BlockSpec((BT * L, C_IN), lambda g: (g, 0)),
                  pl.BlockSpec((C_IN, K * C_MID), lambda g: (0, 0)),
                  pl.BlockSpec((1, C_MID), lambda g: (0, 0))],
        out_specs=[pl.BlockSpec((BT, L1, C_MID), lambda g: (g, 0, 0)),
                   pl.BlockSpec((1, 1, C_MID), lambda g: (g, 0, 0)),
                   pl.BlockSpec((1, 1, C_MID), lambda g: (g, 0, 0))],
        scratch_shapes=[pltpu.VMEM((BT * L, K * C_MID), jnp.float32)],
        compiler_params=cparams,
    )(x2, w1_cat, b1)

    # Tiny cross-tile reduction + rsqrt in plain JAX; BN1 folded to scale/shift.
    n1 = jnp.float32(B * L1)
    mean1 = jnp.sum(s1, axis=0) / n1
    var1 = jnp.maximum(jnp.sum(q1, axis=0) / n1 - mean1 * mean1, 0.0)
    scale1 = g1 * lax.rsqrt(var1 + EPS)
    shift1 = be1 - mean1 * scale1

    # ---- stage 2: BN1-apply + pool1 + conv2 (+ fused BN2 partial stats) ----
    y2, s2, q2 = pl.pallas_call(
        stage2_kernel,
        out_shape=(jax.ShapeDtypeStruct((B, L2, C_OUT), ACT_DTYPE),
                   jax.ShapeDtypeStruct((G, 1, C_OUT), jnp.float32),
                   jax.ShapeDtypeStruct((G, 1, C_OUT), jnp.float32)),
        grid=(G,),
        in_specs=[pl.BlockSpec((BT, L1, C_MID), lambda g: (g, 0, 0)),
                  pl.BlockSpec((1, C_MID), lambda g: (0, 0)),
                  pl.BlockSpec((1, C_MID), lambda g: (0, 0)),
                  pl.BlockSpec((C_MID, K * C_OUT), lambda g: (0, 0)),
                  pl.BlockSpec((1, C_OUT), lambda g: (0, 0))],
        out_specs=[pl.BlockSpec((BT, L2, C_OUT), lambda g: (g, 0, 0)),
                   pl.BlockSpec((1, 1, C_OUT), lambda g: (g, 0, 0)),
                   pl.BlockSpec((1, 1, C_OUT), lambda g: (g, 0, 0))],
        scratch_shapes=[pltpu.VMEM((BT * P1, C_MID), MXU_DTYPE),     # pooled conv2 LHS
                        pltpu.VMEM((BT * P1, K * C_OUT), jnp.float32)],  # wide matmul
        compiler_params=cparams,
    )(y1, scale1, shift1, w2_cat, b2)

    n2 = jnp.float32(B * L2)
    mean2 = jnp.sum(s2, axis=0) / n2
    var2 = jnp.maximum(jnp.sum(q2, axis=0) / n2 - mean2 * mean2, 0.0)
    scale2 = g2 * lax.rsqrt(var2 + EPS)
    shift2 = be2 - mean2 * scale2

    # ---- stage 3: BN2-apply + ReLU + pool2 ---------------------------------
    out_nlc = pl.pallas_call(
        stage3_kernel,
        out_shape=jax.ShapeDtypeStruct((B, P2, C_OUT), jnp.float32),
        grid=(G,),
        in_specs=[pl.BlockSpec((BT, L2, C_OUT), lambda g: (g, 0, 0)),
                  pl.BlockSpec((1, C_OUT), lambda g: (0, 0)),
                  pl.BlockSpec((1, C_OUT), lambda g: (0, 0))],
        out_specs=pl.BlockSpec((BT, P2, C_OUT), lambda g: (g, 0, 0)),
        compiler_params=cparams,
    )(y2, scale2, shift2)

    # Kernel output is lane-dense NLC; PyTorch returns NCL (B, 128, L_out).
    # (Consumers that accept NLC can take `out_nlc` directly and skip this
    # HBM round trip.)
    return jnp.transpose(out_nlc, (0, 2, 1))


def make_params(key):
    k1, k2, k3, k4 = jax.random.split(key, 4)
    # PyTorch Conv1d default init: U(-1/sqrt(fan_in), 1/sqrt(fan_in))
    bound1 = 1.0 / (C_IN * K) ** 0.5
    w1_torch = jax.random.uniform(k1, (C_MID, C_IN, K), jnp.float32, -bound1, bound1)
    b1 = jax.random.uniform(k2, (1, C_MID), jnp.float32, -bound1, bound1)
    bound2 = 1.0 / (C_MID * K) ** 0.5
    w2_torch = jax.random.uniform(k3, (C_OUT, C_MID, K), jnp.float32, -bound2, bound2)
    b2 = jax.random.uniform(k4, (1, C_OUT), jnp.float32, -bound2, bound2)
    return dict(
        # rearrange (Cout, Cin, K) -> per-tap matmul weights (K, Cin, Cout)
        w1=jnp.transpose(w1_torch, (2, 1, 0)),
        b1=b1,
        g1=jnp.ones((1, C_MID), jnp.float32),    # BatchNorm default weight
        be1=jnp.zeros((1, C_MID), jnp.float32),  # BatchNorm default bias
        w2=jnp.transpose(w2_torch, (2, 1, 0)),
        b2=b2,
        g2=jnp.ones((1, C_OUT), jnp.float32),
        be2=jnp.zeros((1, C_OUT), jnp.float32),
    )


if __name__ == "__main__":
    key = jax.random.PRNGKey(0)
    kx, kp = jax.random.split(key)
    B, L = 2, 8
    x = jax.random.normal(kx, (B, L, C_IN), jnp.float32)
    p = make_params(kp)
    out = cnn_forward(x, p["w1"], p["b1"], p["g1"], p["be1"],
                      p["w2"], p["b2"], p["g2"], p["be2"])
    jax.block_until_ready(out)
    expected_lout = _pool_len(_conv_len(_pool_len(_conv_len(L))))
    assert out.shape == (B, C_OUT, expected_lout), out.shape
    assert bool(jnp.all(jnp.isfinite(out))), "non-finite values in output"
    print("KERNEL_OK")
</pallas_src>

<mosaic_0001>
module attributes {stable_mosaic.version = 11 : i64} {
  func.func @stage1_kernel(%arg0: i32, %arg1: memref<8x768xbf16, #tpu.memory_space<vmem>>, %arg2: memref<768x768xbf16, #tpu.memory_space<vmem>>, %arg3: memref<1x256xf32, #tpu.memory_space<vmem>>, %arg4: memref<1x10x256xbf16, #tpu.memory_space<vmem>>, %arg5: memref<1x1x256xf32, #tpu.memory_space<vmem>>, %arg6: memref<1x1x256xf32, #tpu.memory_space<vmem>>, %arg7: memref<8x768xf32, #tpu.memory_space<vmem>>) attributes {dimension_semantics = [#tpu.dimension_semantics<parallel>], iteration_bounds = array<i64: 2>, scalar_prefetch = 0 : i64, scratch_operands = 1 : i64, tpu.core_type = #tpu.core_type<tc>, window_params = [{transform_indices = @transform_0, window_bounds = array<i64: 8, 768>}, {pipeline_mode = #tpu.pipeline_mode<synchronous>, transform_indices = @transform_1, window_bounds = array<i64: 768, 768>}, {pipeline_mode = #tpu.pipeline_mode<synchronous>, transform_indices = @transform_2, window_bounds = array<i64: 1, 256>}, {transform_indices = @transform_3, window_bounds = array<i64: 1, 10, 256>}, {transform_indices = @transform_4, window_bounds = array<i64: 1, 1, 256>}, {transform_indices = @transform_5, window_bounds = array<i64: 1, 1, 256>}]} {
    %c0 = arith.constant 0 : index
    %c0_0 = arith.constant 0 : index
    %0 = vector.load %arg3[%c0, %c0_0] : memref<1x256xf32, #tpu.memory_space<vmem>>, vector<1x256xf32>
    %c0_1 = arith.constant 0 : index
    %c0_2 = arith.constant 0 : index
    %1 = vector.load %arg1[%c0_1, %c0_2] : memref<8x768xbf16, #tpu.memory_space<vmem>>, vector<8x768xbf16>
    %c0_3 = arith.constant 0 : index
    %c0_4 = arith.constant 0 : index
    %2 = vector.load %arg2[%c0_3, %c0_4] : memref<768x768xbf16, #tpu.memory_space<vmem>>, vector<768x768xbf16>
    %cst = arith.constant dense<0.000000e+00> : vector<8x768xf32>
    %3 = tpu.matmul %1, %2, %cst {dimension_numbers = #tpu.dot_dimension_numbers<[1], [0], [0], [1], [0, 0, 1, 1], [], []>} : vector<8x768xbf16>, vector<768x768xbf16>, vector<8x768xf32> -> vector<8x768xf32>
    %c0_5 = arith.constant 0 : index
    %c0_6 = arith.constant 0 : index
    %4 = vector.load %arg7[%c0_5, %c0_6] : memref<8x768xf32, #tpu.memory_space<vmem>>, vector<8x768xf32>
    tpu.vector_store %arg7[%c0_5, %c0_6], %3 {strides = array<i32>} : memref<8x768xf32, #tpu.memory_space<vmem>>, vector<8x768xf32>,
    %cst_7 = arith.constant 0.000000e+00 : f32
    %5 = vector.broadcast %cst_7 : f32 to vector<1x256xf32>
    %cst_8 = arith.constant 0.000000e+00 : f32
    %6 = vector.broadcast %cst_8 : f32 to vector<2x256xf32>
    %cst_9 = arith.constant 0.000000e+00 : f32
    %7 = vector.broadcast %cst_9 : f32 to vector<1x256xf32>
    %c0_i32 = arith.constant 0 : i32
    %c8_i32 = arith.constant 8 : i32
    %8 = arith.muli %c0_i32, %c8_i32 : i32
    %9 = arith.index_cast %8 : i32 to index
    %c0_10 = arith.constant 0 : index
    %10 = vector.load %arg7[%9, %c0_10] : memref<8x768xf32, #tpu.memory_space<vmem>>, vector<8x768xf32>
    %11 = vector.extract_strided_slice %10 {offsets = [0, 0], sizes = [8, 256], strides = [1, 1]} : vector<8x768xf32> to vector<8x256xf32>
    %12 = vector.extract_strided_slice %10 {offsets = [0, 256], sizes = [8, 256], strides = [1, 1]} : vector<8x768xf32> to vector<8x256xf32>
    %13 = vector.extract_strided_slice %10 {offsets = [0, 512], sizes = [8, 256], strides = [1, 1]} : vector<8x768xf32> to vector<8x256xf32>
    %14 = tpu.concatenate %13, %6 in 0 : vector<8x256xf32>, vector<2x256xf32> -> vector<10x256xf32>
    %15 = tpu.concatenate %5, %12, %5 in 0 : vector<1x256xf32>, vector<8x256xf32>, vector<1x256xf32> -> vector<10x256xf32>
    %16 = arith.addf %14, %15 : vector<10x256xf32>
    %17 = tpu.concatenate %6, %11 in 0 : vector<2x256xf32>, vector<8x256xf32> -> vector<10x256xf32>
    %18 = arith.addf %16, %17 : vector<10x256xf32>
    %19 = vector.broadcast %0 : vector<1x256xf32> to vector<10x256xf32>
    %20 = arith.addf %18, %19 : vector<10x256xf32>
    %cst_11 = arith.constant 0.000000e+00 : f32
    %21 = vector.broadcast %cst_11 : f32 to vector<10x256xf32>
    %22 = arith.maximumf %20, %21 : vector<10x256xf32>
    %23 = arith.truncf %22 : vector<10x256xf32> to vector<10x256xbf16>
    %24 = arith.index_cast %c0_i32 : i32 to index
    %c0_12 = arith.constant 0 : index
    %c0_13 = arith.constant 0 : index
    %25 = vector.load %arg4[%24, %c0_12, %c0_13] : memref<1x10x256xbf16, #tpu.memory_space<vmem>>, vector<1x10x256xbf16>
    %26 = vector.shape_cast %25 : vector<1x10x256xbf16> to vector<10x256xbf16>
    %27 = vector.shape_cast %23 : vector<10x256xbf16> to vector<1x10x256xbf16>
    tpu.vector_store %arg4[%24, %c0_12, %c0_13], %27 {strides = array<i32>} : memref<1x10x256xbf16, #tpu.memory_space<vmem>>, vector<1x10x256xbf16>,
    %cst_14 = arith.constant dense<0.000000e+00> : vector<256xf32>
    %28 = vector.multi_reduction <add>, %22, %cst_14 [0] : vector<10x256xf32> to vector<256xf32>
    %29 = vector.shape_cast %28 : vector<256xf32> to vector<1x256xf32>
    %30 = arith.addf %7, %29 : vector<1x256xf32>
    %31 = arith.mulf %22, %22 : vector<10x256xf32>
    %cst_15 = arith.constant dense<0.000000e+00> : vector<256xf32>
    %32 = vector.multi_reduction <add>, %31, %cst_15 [0] : vector<10x256xf32> to vector<256xf32>
    %33 = vector.shape_cast %32 : vector<256xf32> to vector<1x256xf32>
    %34 = arith.addf %7, %33 : vector<1x256xf32>
    %c1_i32 = arith.constant 1 : i32
    %c0_16 = arith.constant 0 : index
    %c0_17 = arith.constant 0 : index
    %c0_18 = arith.constant 0 : index
    %35 = vector.load %arg5[%c0_16, %c0_17, %c0_18] : memref<1x1x256xf32, #tpu.memory_space<vmem>>, vector<1x1x256xf32>
    %36 = vector.shape_cast %35 : vector<1x1x256xf32> to vector<1x256xf32>
    %37 = vector.shape_cast %30 : vector<1x256xf32> to vector<1x1x256xf32>
    tpu.vector_store %arg5[%c0_16, %c0_17, %c0_18], %37 {strides = array<i32>} : memref<1x1x256xf32, #tpu.memory_space<vmem>>, vector<1x1x256xf32>,
    %c0_19 = arith.constant 0 : index
    %c0_20 = arith.constant 0 : index
    %c0_21 = arith.constant 0 : index
    %38 = vector.load %arg6[%c0_19, %c0_20, %c0_21] : memref<1x1x256xf32, #tpu.memory_space<vmem>>, vector<1x1x256xf32>
    %39 = vector.shape_cast %38 : vector<1x1x256xf32> to vector<1x256xf32>
    %40 = vector.shape_cast %34 : vector<1x256xf32> to vector<1x1x256xf32>
    tpu.vector_store %arg6[%c0_19, %c0_20, %c0_21], %40 {strides = array<i32>} : memref<1x1x256xf32, #tpu.memory_space<vmem>>, vector<1x1x256xf32>,
    return
  }
  func.func @transform_0(%arg0: i32) -> (i32, i32) {
    %c0_i32 = arith.constant 0 : i32
    %c0_i32_0 = arith.constant 0 : i32
    return %arg0, %c0_i32 : i32, i32
  }
  func.func @transform_1(%arg0: i32) -> (i32, i32) {
    %c0_i32 = arith.constant 0 : i32
    %c0_i32_0 = arith.constant 0 : i32
    %c0_i32_1 = arith.constant 0 : i32
    return %c0_i32, %c0_i32_0 : i32, i32
  }
  func.func @transform_2(%arg0: i32) -> (i32, i32) {
    %c0_i32 = arith.constant 0 : i32
    %c0_i32_0 = arith.constant 0 : i32
    %c0_i32_1 = arith.constant 0 : i32
    return %c0_i32, %c0_i32_0 : i32, i32
  }
  func.func @transform_3(%arg0: i32) -> (i32, i32, i32) {
    %c0_i32 = arith.constant 0 : i32
    %c0_i32_0 = arith.constant 0 : i32
    %c0_i32_1 = arith.constant 0 : i32
    return %arg0, %c0_i32, %c0_i32_0 : i32, i32, i32
  }
  func.func @transform_4(%arg0: i32) -> (i32, i32, i32) {
    %c0_i32 = arith.constant 0 : i32
    %c0_i32_0 = arith.constant 0 : i32
    %c0_i32_1 = arith.constant 0 : i32
    return %arg0, %c0_i32, %c0_i32_0 : i32, i32, i32
  }
  func.func @transform_5(%arg0: i32) -> (i32, i32, i32) {
    %c0_i32 = arith.constant 0 : i32
    %c0_i32_0 = arith.constant 0 : i32
    %c0_i32_1 = arith.constant 0 : i32
    return %arg0, %c0_i32, %c0_i32_0 : i32, i32, i32
  }
}

module attributes {stable_mosaic.version = 11 : i64} {
  func.func @stage2_kernel(%arg0: i32, %arg1: memref<1x10x256xbf16, #tpu.memory_space<vmem>>, %arg2: memref<1x256xf32, #tpu.memory_space<vmem>>, %arg3: memref<1x256xf32, #tpu.memory_space<vmem>>, %arg4: memref<256x384xbf16, #tpu.memory_space<vmem>>, %arg5: memref<1x128xf32, #tpu.memory_space<vmem>>, %arg6: memref<1x13x128xbf16, #tpu.memory_space<vmem>>, %arg7: memref<1x1x128xf32, #tpu.memory_space<vmem>>, %arg8: memref<1x1x128xf32, #tpu.memory_space<vmem>>, %arg9: memref<11x256xbf16, #tpu.memory_space<vmem>>, %arg10: memref<11x384xf32, #tpu.memory_space<vmem>>) attributes {dimension_semantics = [#tpu.dimension_semantics<parallel>], iteration_bounds = array<i64: 2>, scalar_prefetch = 0 : i64, scratch_operands = 2 : i64, tpu.core_type = #tpu.core_type<tc>, window_params = [{transform_indices = @transform_0, window_bounds = array<i64: 1, 10, 256>}, {pipeline_mode = #tpu.pipeline_mode<synchronous>, transform_indices = @transform_1, window_bounds = array<i64: 1, 256>}, {pipeline_mode = #tpu.pipeline_mode<synchronous>, transform_indices = @transform_2, window_bounds = array<i64: 1, 256>}, {pipeline_mode = #tpu.pipeline_mode<synchronous>, transform_indices = @transform_3, window_bounds = array<i64: 256, 384>}, {pipeline_mode = #tpu.pipeline_mode<synchronous>, transform_indices = @transform_4, window_bounds = array<i64: 1, 128>}, {transform_indices = @transform_5, window_bounds = array<i64: 1, 13, 128>}, {transform_indices = @transform_6, window_bounds = array<i64: 1, 1, 128>}, {transform_indices = @transform_7, window_bounds = array<i64: 1, 1, 128>}]} {
    %c0 = arith.constant 0 : index
    %c0_0 = arith.constant 0 : index
    %0 = vector.load %arg2[%c0, %c0_0] : memref<1x256xf32, #tpu.memory_space<vmem>>, vector<1x256xf32>
    %c0_1 = arith.constant 0 : index
    %c0_2 = arith.constant 0 : index
    %1 = vector.load %arg3[%c0_1, %c0_2] : memref<1x256xf32, #tpu.memory_space<vmem>>, vector<1x256xf32>
    %c0_3 = arith.constant 0 : index
    %c0_4 = arith.constant 0 : index
    %2 = vector.load %arg5[%c0_3, %c0_4] : memref<1x128xf32, #tpu.memory_space<vmem>>, vector<1x128xf32>
    %c0_i32 = arith.constant 0 : i32
    %3 = arith.index_cast %c0_i32 : i32 to index
    %c0_5 = arith.constant 0 : index
    %c0_6 = arith.constant 0 : index
    %4 = vector.load %arg1[%3, %c0_5, %c0_6] : memref<1x10x256xbf16, #tpu.memory_space<vmem>>, vector<1x10x256xbf16>
    %5 = vector.shape_cast %4 : vector<1x10x256xbf16> to vector<10x256xbf16>
    %6 = arith.extf %5 : vector<10x256xbf16> to vector<10x256xf32>
    %7 = vector.broadcast %0 : vector<1x256xf32> to vector<10x256xf32>
    %8 = arith.mulf %6, %7 : vector<10x256xf32>
    %9 = vector.broadcast %1 : vector<1x256xf32> to vector<10x256xf32>
    %10 = arith.addf %8, %9 : vector<10x256xf32>
    %11 = vector.extract_strided_slice %10 {offsets = [0, 0], sizes = [1, 256], strides = [1, 1]} : vector<10x256xf32> to vector<1x256xf32>
    %12 = tpu.concatenate %11, %10 in 0 : vector<1x256xf32>, vector<10x256xf32> -> vector<11x256xf32>
    %13 = vector.extract_strided_slice %10 {offsets = [9, 0], sizes = [1, 256], strides = [1, 1]} : vector<10x256xf32> to vector<1x256xf32>
    %14 = tpu.concatenate %10, %13 in 0 : vector<10x256xf32>, vector<1x256xf32> -> vector<11x256xf32>
    %15 = arith.maximumf %12, %14 : vector<11x256xf32>
    %16 = arith.truncf %15 : vector<11x256xf32> to vector<11x256xbf16>
    %c11_i32 = arith.constant 11 : i32
    %17 = arith.muli %c0_i32, %c11_i32 : i32
    %18 = arith.index_cast %17 : i32 to index
    %c0_7 = arith.constant 0 : index
    %19 = vector.load %arg9[%18, %c0_7] : memref<11x256xbf16, #tpu.memory_space<vmem>>, vector<11x256xbf16>
    tpu.vector_store %arg9[%18, %c0_7], %16 {strides = array<i32>} : memref<11x256xbf16, #tpu.memory_space<vmem>>, vector<11x256xbf16>,
    %c1_i32 = arith.constant 1 : i32
    %c0_8 = arith.constant 0 : index
    %c0_9 = arith.constant 0 : index
    %20 = vector.load %arg9[%c0_8, %c0_9] : memref<11x256xbf16, #tpu.memory_space<vmem>>, vector<11x256xbf16>
    %c0_10 = arith.constant 0 : index
    %c0_11 = arith.constant 0 : index
    %21 = vector.load %arg4[%c0_10, %c0_11] : memref<256x384xbf16, #tpu.memory_space<vmem>>, vector<256x384xbf16>
    %cst = arith.constant dense<0.000000e+00> : vector<11x384xf32>
    %22 = tpu.matmul %20, %21, %cst {dimension_numbers = #tpu.dot_dimension_numbers<[1], [0], [0], [1], [0, 0, 1, 1], [], []>} : vector<11x256xbf16>, vector<256x384xbf16>, vector<11x384xf32> -> vector<11x384xf32>
    %c0_12 = arith.constant 0 : index
    %c0_13 = arith.constant 0 : index
    %23 = vector.load %arg10[%c0_12, %c0_13] : memref<11x384xf32, #tpu.memory_space<vmem>>, vector<11x384xf32>
    tpu.vector_store %arg10[%c0_12, %c0_13], %22 {strides = array<i32>} : memref<11x384xf32, #tpu.memory_space<vmem>>, vector<11x384xf32>,
    %cst_14 = arith.constant 0.000000e+00 : f32
    %24 = vector.broadcast %cst_14 : f32 to vector<1x128xf32>
    %cst_15 = arith.constant 0.000000e+00 : f32
    %25 = vector.broadcast %cst_15 : f32 to vector<2x128xf32>
    %cst_16 = arith.constant 0.000000e+00 : f32
    %26 = vector.broadcast %cst_16 : f32 to vector<1x128xf32>
    %c0_i32_17 = arith.constant 0 : i32
    %c11_i32_18 = arith.constant 11 : i32
    %27 = arith.muli %c0_i32_17, %c11_i32_18 : i32
    %28 = arith.index_cast %27 : i32 to index
    %c0_19 = arith.constant 0 : index
    %29 = vector.load %arg10[%28, %c0_19] : memref<11x384xf32, #tpu.memory_space<vmem>>, vector<11x384xf32>
    %30 = vector.extract_strided_slice %29 {offsets = [0, 0], sizes = [11, 128], strides = [1, 1]} : vector<11x384xf32> to vector<11x128xf32>
    %31 = vector.extract_strided_slice %29 {offsets = [0, 128], sizes = [11, 128], strides = [1, 1]} : vector<11x384xf32> to vector<11x128xf32>
    %32 = vector.extract_strided_slice %29 {offsets = [0, 256], sizes = [11, 128], strides = [1, 1]} : vector<11x384xf32> to vector<11x128xf32>
    %33 = tpu.concatenate %32, %25 in 0 : vector<11x128xf32>, vector<2x128xf32> -> vector<13x128xf32>
    %34 = tpu.concatenate %24, %31, %24 in 0 : vector<1x128xf32>, vector<11x128xf32>, vector<1x128xf32> -> vector<13x128xf32>
    %35 = arith.addf %33, %34 : vector<13x128xf32>
    %36 = tpu.concatenate %25, %30 in 0 : vector<2x128xf32>, vector<11x128xf32> -> vector<13x128xf32>
    %37 = arith.addf %35, %36 : vector<13x128xf32>
    %38 = vector.broadcast %2 : vector<1x128xf32> to vector<13x128xf32>
    %39 = arith.addf %37, %38 : vector<13x128xf32>
    %40 = arith.truncf %39 : vector<13x128xf32> to vector<13x128xbf16>
    %41 = arith.index_cast %c0_i32_17 : i32 to index
    %c0_20 = arith.constant 0 : index
    %c0_21 = arith.constant 0 : index
    %42 = vector.load %arg6[%41, %c0_20, %c0_21] : memref<1x13x128xbf16, #tpu.memory_space<vmem>>, vector<1x13x128xbf16>
    %43 = vector.shape_cast %42 : vector<1x13x128xbf16> to vector<13x128xbf16>
    %44 = vector.shape_cast %40 : vector<13x128xbf16> to vector<1x13x128xbf16>
    tpu.vector_store %arg6[%41, %c0_20, %c0_21], %44 {strides = array<i32>} : memref<1x13x128xbf16, #tpu.memory_space<vmem>>, vector<1x13x128xbf16>,
    %cst_22 = arith.constant dense<0.000000e+00> : vector<128xf32>
    %45 = vector.multi_reduction <add>, %39, %cst_22 [0] : vector<13x128xf32> to vector<128xf32>
    %46 = vector.shape_cast %45 : vector<128xf32> to vector<1x128xf32>
    %47 = arith.addf %26, %46 : vector<1x128xf32>
    %48 = arith.mulf %39, %39 : vector<13x128xf32>
    %cst_23 = arith.constant dense<0.000000e+00> : vector<128xf32>
    %49 = vector.multi_reduction <add>, %48, %cst_23 [0] : vector<13x128xf32> to vector<128xf32>
    %50 = vector.shape_cast %49 : vector<128xf32> to vector<1x128xf32>
    %51 = arith.addf %26, %50 : vector<1x128xf32>
    %c1_i32_24 = arith.constant 1 : i32
    %c0_25 = arith.constant 0 : index
    %c0_26 = arith.constant 0 : index
    %c0_27 = arith.constant 0 : index
    %52 = vector.load %arg7[%c0_25, %c0_26, %c0_27] : memref<1x1x128xf32, #tpu.memory_space<vmem>>, vector<1x1x128xf32>
    %53 = vector.shape_cast %52 : vector<1x1x128xf32> to vector<1x128xf32>
    %54 = vector.shape_cast %47 : vector<1x128xf32> to vector<1x1x128xf32>
    tpu.vector_store %arg7[%c0_25, %c0_26, %c0_27], %54 {strides = array<i32>} : memref<1x1x128xf32, #tpu.memory_space<vmem>>, vector<1x1x128xf32>,
    %c0_28 = arith.constant 0 : index
    %c0_29 = arith.constant 0 : index
    %c0_30 = arith.constant 0 : index
    %55 = vector.load %arg8[%c0_28, %c0_29, %c0_30] : memref<1x1x128xf32, #tpu.memory_space<vmem>>, vector<1x1x128xf32>
    %56 = vector.shape_cast %55 : vector<1x1x128xf32> to vector<1x128xf32>
    %57 = vector.shape_cast %51 : vector<1x128xf32> to vector<1x1x128xf32>
    tpu.vector_store %arg8[%c0_28, %c0_29, %c0_30], %57 {strides = array<i32>} : memref<1x1x128xf32, #tpu.memory_space<vmem>>, vector<1x1x128xf32>,
    return
  }
  func.func @transform_0(%arg0: i32) -> (i32, i32, i32) {
    %c0_i32 = arith.constant 0 : i32
    %c0_i32_0 = arith.constant 0 : i32
    %c0_i32_1 = arith.constant 0 : i32
    return %arg0, %c0_i32, %c0_i32_0 : i32, i32, i32
  }
  func.func @transform_1(%arg0: i32) -> (i32, i32) {
    %c0_i32 = arith.constant 0 : i32
    %c0_i32_0 = arith.constant 0 : i32
    %c0_i32_1 = arith.constant 0 : i32
    return %c0_i32, %c0_i32_0 : i32, i32
  }
  func.func @transform_2(%arg0: i32) -> (i32, i32) {
    %c0_i32 = arith.constant 0 : i32
    %c0_i32_0 = arith.constant 0 : i32
    %c0_i32_1 = arith.constant 0 : i32
    return %c0_i32, %c0_i32_0 : i32, i32
  }
  func.func @transform_3(%arg0: i32) -> (i32, i32) {
    %c0_i32 = arith.constant 0 : i32
    %c0_i32_0 = arith.constant 0 : i32
    %c0_i32_1 = arith.constant 0 : i32
    return %c0_i32, %c0_i32_0 : i32, i32
  }
  func.func @transform_4(%arg0: i32) -> (i32, i32) {
    %c0_i32 = arith.constant 0 : i32
    %c0_i32_0 = arith.constant 0 : i32
    %c0_i32_1 = arith.constant 0 : i32
    return %c0_i32, %c0_i32_0 : i32, i32
  }
  func.func @transform_5(%arg0: i32) -> (i32, i32, i32) {
    %c0_i32 = arith.constant 0 : i32
    %c0_i32_0 = arith.constant 0 : i32
    %c0_i32_1 = arith.constant 0 : i32
    return %arg0, %c0_i32, %c0_i32_0 : i32, i32, i32
  }
  func.func @transform_6(%arg0: i32) -> (i32, i32, i32) {
    %c0_i32 = arith.constant 0 : i32
    %c0_i32_0 = arith.constant 0 : i32
    %c0_i32_1 = arith.constant 0 : i32
    return %arg0, %c0_i32, %c0_i32_0 : i32, i32, i32
  }
  func.func @transform_7(%arg0: i32) -> (i32, i32, i32) {
    %c0_i32 = arith.constant 0 : i32
    %c0_i32_0 = arith.constant 0 : i32
    %c0_i32_1 = arith.constant 0 : i32
    return %arg0, %c0_i32, %c0_i32_0 : i32, i32, i32
  }
}

module attributes {stable_mosaic.version = 11 : i64} {
  func.func @stage3_kernel(%arg0: i32, %arg1: memref<1x13x128xbf16, #tpu.memory_space<vmem>>, %arg2: memref<1x128xf32, #tpu.memory_space<vmem>>, %arg3: memref<1x128xf32, #tpu.memory_space<vmem>>, %arg4: memref<1x14x128xf32, #tpu.memory_space<vmem>>) attributes {dimension_semantics = [#tpu.dimension_semantics<parallel>], iteration_bounds = array<i64: 2>, scalar_prefetch = 0 : i64, scratch_operands = 0 : i64, tpu.core_type = #tpu.core_type<tc>, window_params = [{transform_indices = @transform_0, window_bounds = array<i64: 1, 13, 128>}, {pipeline_mode = #tpu.pipeline_mode<synchronous>, transform_indices = @transform_1, window_bounds = array<i64: 1, 128>}, {pipeline_mode = #tpu.pipeline_mode<synchronous>, transform_indices = @transform_2, window_bounds = array<i64: 1, 128>}, {transform_indices = @transform_3, window_bounds = array<i64: 1, 14, 128>}]} {
    %c0 = arith.constant 0 : index
    %c0_0 = arith.constant 0 : index
    %0 = vector.load %arg2[%c0, %c0_0] : memref<1x128xf32, #tpu.memory_space<vmem>>, vector<1x128xf32>
    %c0_1 = arith.constant 0 : index
    %c0_2 = arith.constant 0 : index
    %1 = vector.load %arg3[%c0_1, %c0_2] : memref<1x128xf32, #tpu.memory_space<vmem>>, vector<1x128xf32>
    %c0_i32 = arith.constant 0 : i32
    %2 = arith.index_cast %c0_i32 : i32 to index
    %c0_3 = arith.constant 0 : index
    %c0_4 = arith.constant 0 : index
    %3 = vector.load %arg1[%2, %c0_3, %c0_4] : memref<1x13x128xbf16, #tpu.memory_space<vmem>>, vector<1x13x128xbf16>
    %4 = vector.shape_cast %3 : vector<1x13x128xbf16> to vector<13x128xbf16>
    %5 = arith.extf %4 : vector<13x128xbf16> to vector<13x128xf32>
    %6 = vector.broadcast %0 : vector<1x128xf32> to vector<13x128xf32>
    %7 = arith.mulf %5, %6 : vector<13x128xf32>
    %8 = vector.broadcast %1 : vector<1x128xf32> to vector<13x128xf32>
    %9 = arith.addf %7, %8 : vector<13x128xf32>
    %cst = arith.constant 0.000000e+00 : f32
    %10 = vector.broadcast %cst : f32 to vector<13x128xf32>
    %11 = arith.maximumf %9, %10 : vector<13x128xf32>
    %12 = vector.extract_strided_slice %11 {offsets = [0, 0], sizes = [1, 128], strides = [1, 1]} : vector<13x128xf32> to vector<1x128xf32>
    %13 = tpu.concatenate %12, %11 in 0 : vector<1x128xf32>, vector<13x128xf32> -> vector<14x128xf32>
    %14 = vector.extract_strided_slice %11 {offsets = [12, 0], sizes = [1, 128], strides = [1, 1]} : vector<13x128xf32> to vector<1x128xf32>
    %15 = tpu.concatenate %11, %14 in 0 : vector<13x128xf32>, vector<1x128xf32> -> vector<14x128xf32>
    %16 = arith.maximumf %13, %15 : vector<14x128xf32>
    %17 = arith.index_cast %c0_i32 : i32 to index
    %c0_5 = arith.constant 0 : index
    %c0_6 = arith.constant 0 : index
    %18 = vector.load %arg4[%17, %c0_5, %c0_6] : memref<1x14x128xf32, #tpu.memory_space<vmem>>, vector<1x14x128xf32>
    %19 = vector.shape_cast %18 : vector<1x14x128xf32> to vector<14x128xf32>
    %20 = vector.shape_cast %16 : vector<14x128xf32> to vector<1x14x128xf32>
    tpu.vector_store %arg4[%17, %c0_5, %c0_6], %20 {strides = array<i32>} : memref<1x14x128xf32, #tpu.memory_space<vmem>>, vector<1x14x128xf32>,
    %c1_i32 = arith.constant 1 : i32
    return
  }
  func.func @transform_0(%arg0: i32) -> (i32, i32, i32) {
    %c0_i32 = arith.constant 0 : i32
    %c0_i32_0 = arith.constant 0 : i32
    %c0_i32_1 = arith.constant 0 : i32
    return %arg0, %c0_i32, %c0_i32_0 : i32, i32, i32
  }
  func.func @transform_1(%arg0: i32) -> (i32, i32) {
    %c0_i32 = arith.constant 0 : i32
    %c0_i32_0 = arith.constant 0 : i32
    %c0_i32_1 = arith.constant 0 : i32
    return %c0_i32, %c0_i32_0 : i32, i32
  }
  func.func @transform_2(%arg0: i32) -> (i32, i32) {
    %c0_i32 = arith.constant 0 : i32
    %c0_i32_0 = arith.constant 0 : i32
    %c0_i32_1 = arith.constant 0 : i32
    return %c0_i32, %c0_i32_0 : i32, i32
  }
  func.func @transform_3(%arg0: i32) -> (i32, i32, i32) {
    %c0_i32 = arith.constant 0 : i32
    %c0_i32_0 = arith.constant 0 : i32
    %c0_i32_1 = arith.constant 0 : i32
    return %arg0, %c0_i32, %c0_i32_0 : i32, i32, i32
  }
}

</mosaic_0001>

<llo_original>
// kernel: cnn_forward.3
$region0: #{cnn_forward.3}
  #allocation0 [shape = 'u32[]', space=smem, size = 0x4, offset = 0x4, fixed_abs, tag = 'smem constant byte address 0x4 - core index']
  #allocation1 [shape = 'u32[144,128]{1,0:T(1,128)}', space=vmem, size = 0x12000, scoped, tag = 'internal scratch']
  #allocation2 [shape = 'f32[8,768]{1,0:T(8,128)}', space=vmem, size = 0x6000, scoped, tag = 'scratch operand']
  %s0 = inlined_call_operand.vmem [shape: bf16[16,768], index: 0, kind: input, shape index: {}]
  %s1 = inlined_call_operand.vmem [shape: bf16[768,768], index: 1, kind: input, shape index: {}]
  %s2 = inlined_call_operand.vmem [shape: f32[1,256], index: 2, kind: input, shape index: {}]
  %s3 = inlined_call_operand.vmem [shape: bf16[2,10,256], index: 3, kind: output, shape index: {0}]
  %s4 = inlined_call_operand.vmem [shape: f32[2,1,256], index: 4, kind: output, shape index: {1}]
  %s5 = inlined_call_operand.vmem [shape: f32[2,1,256], index: 5, kind: output, shape index: {2}]
  %6 = xla_tuple %s3, %s4, %s5
  %s7 = sld [smem:[#allocation0]]
  $region61: #{cnn_forward.3} parent=0
    _
  %s9 = ssub.s32 1, %s7
  %s10 = scalar_select 0, %s9, %s7
  loop: start=0, step=1, limit=4
  $region2: #{cnn_forward.3} parent=0 // loop_pre_header
    _
  $region3: #{cnn_forward.3} parent=0 // loop_header
    %s12 = sphi 0, %s16
    %p13 = scmp.ge.s32.totalorder %s12, 4
    %s22 = sphi 0, %s24
    %s25 = sphi 0, %s22
    %s26 = sphi 0, %s25
    %s42 = sphi 0, %s26
    %s46 = sphi 0, %s46
    %s48 = sphi 0, %s46
    %s49 = sphi 0, %s48
    %s63 = sphi 0, %s49
    %s67 = sphi 0, %s67
    %s69 = sphi 0, %s67
    %s70 = sphi 0, %s69
    %s84 = sphi 0, %s70
    %s90 = sphi 0, %s92
    %s93 = sphi 0, %s90
    %s94 = sphi 0, %s93
    %s110 = sphi 0, %s94
    %s116 = sphi 0, %s118
    %s119 = sphi 0, %s116
    %s120 = sphi 0, %s119
    %s136 = sphi 0, %s120
    %s142 = sphi 0, %s144
    %s145 = sphi 0, %s142
    %s146 = sphi 0, %s145
    %s162 = sphi 0, %s146
  $region4: #{cnn_forward.3} parent=0 // loop_header_branch
    %15 = sbr.rel (%p13) target = $region8
  $region5: #{cnn_forward.3} parent=0 // loop_body
    %s17 = ssub.s32 %s12, 1
    %s18 = ssub.s32 %s12, 2
    %s19 = sadd.s32 %s12, 1
    %s20 = ssub.s32 %s12, %s19
    %p21 = scmp.eq.s32.totalorder %s20, 0
    %s23 = sadd.s32 %s22, 1
    %s24 = scalar_select %p21, %s22, %s23
    %p27 = pneg %p21
    %p28 = scmp.eq.s32.totalorder %s12, 1
    %p29 = por %p27, %p28
    %p30 = scmp.ne.s32.totalorder %s22, %s25
    %p31 = scmp.eq.s32.totalorder %s12, 0
    %p32 = por %p30, %p31
    %p33 = scmp.ne.s32.totalorder %s22, %s25
    %p34 = scmp.eq.s32.totalorder %s17, 1
    %p35 = por %p33, %p34
    %p36 = scmp.ne.s32.totalorder %s25, %s26
    %p37 = scmp.eq.s32.totalorder %s17, 0
    %p38 = por %p36, %p37
    %p39 = scmp.ne.s32.totalorder %s25, %s26
    %p40 = scmp.eq.s32.totalorder %s18, 1
    %p41 = por %p39, %p40
    %p43 = scmp.ne.s32.totalorder %s26, %s42
    %p44 = scmp.eq.s32.totalorder %s18, 0
    %p45 = por %p43, %p44
    %s47 = sadd.s32 %s46, 1
    %p50 = scmp.eq.s32.totalorder %s12, 1
    %p51 = scmp.ne.s32.totalorder %s46, %s48
    %p52 = scmp.eq.s32.totalorder %s12, 0
    %p53 = por %p51, %p52
    %p54 = scmp.ne.s32.totalorder %s46, %s48
    %p55 = scmp.eq.s32.totalorder %s17, 1
    %p56 = por %p54, %p55
    %p57 = scmp.ne.s32.totalorder %s48, %s49
    %p58 = scmp.eq.s32.totalorder %s17, 0
    %p59 = por %p57, %p58
    %p60 = scmp.ne.s32.totalorder %s48, %s49
    %p61 = scmp.eq.s32.totalorder %s18, 1
    %p62 = por %p60, %p61
    %p64 = scmp.ne.s32.totalorder %s49, %s63
    %p65 = scmp.eq.s32.totalorder %s18, 0
    %p66 = por %p64, %p65
    %s68 = sadd.s32 %s67, 1
    %p71 = scmp.eq.s32.totalorder %s12, 1
    %p72 = scmp.ne.s32.totalorder %s67, %s69
    %p73 = scmp.eq.s32.totalorder %s12, 0
    %p74 = por %p72, %p73
    %p75 = scmp.ne.s32.totalorder %s67, %s69
    %p76 = scmp.eq.s32.totalorder %s17, 1
    %p77 = por %p75, %p76
    %p78 = scmp.ne.s32.totalorder %s69, %s70
    %p79 = scmp.eq.s32.totalorder %s17, 0
    %p80 = por %p78, %p79
    %p81 = scmp.ne.s32.totalorder %s69, %s70
    %p82 = scmp.eq.s32.totalorder %s18, 1
    %p83 = por %p81, %p82
    %p85 = scmp.ne.s32.totalorder %s70, %s84
    %p86 = scmp.eq.s32.totalorder %s18, 0
    %p87 = por %p85, %p86
    %s88 = ssub.s32 %s12, %s19
    %p89 = scmp.eq.s32.totalorder %s88, 0
    %s91 = sadd.s32 %s90, 1
    %s92 = scalar_select %p89, %s90, %s91
    %p95 = pneg %p89
    %p96 = scmp.eq.s32.totalorder %s12, 1
    %p97 = por %p95, %p96
    %p98 = scmp.ne.s32.totalorder %s90, %s93
    %p99 = scmp.eq.s32.totalorder %s12, 0
    %p100 = por %p98, %p99
    %p101 = scmp.ne.s32.totalorder %s90, %s93
    %p102 = scmp.eq.s32.totalorder %s17, 1
    %p103 = por %p101, %p102
    %p104 = scmp.ne.s32.totalorder %s93, %s94
    %p105 = scmp.eq.s32.totalorder %s17, 0
    %p106 = por %p104, %p105
    %p107 = scmp.ne.s32.totalorder %s93, %s94
    %p108 = scmp.eq.s32.totalorder %s18, 1
    %p109 = por %p107, %p108
    %p111 = scmp.ne.s32.totalorder %s94, %s110
    %p112 = scmp.eq.s32.totalorder %s18, 0
    %p113 = por %p111, %p112
    %s114 = ssub.s32 %s12, %s19
    %p115 = scmp.eq.s32.totalorder %s114, 0
    %s117 = sadd.s32 %s116, 1
    %s118 = scalar_select %p115, %s116, %s117
    %p121 = pneg %p115
    %p122 = scmp.eq.s32.totalorder %s12, 1
    %p123 = por %p121, %p122
    %p124 = scmp.ne.s32.totalorder %s116, %s119
    %p125 = scmp.eq.s32.totalorder %s12, 0
    %p126 = por %p124, %p125
    %p127 = scmp.ne.s32.totalorder %s116, %s119
    %p128 = scmp.eq.s32.totalorder %s17, 1
    %p129 = por %p127, %p128
    %p130 = scmp.ne.s32.totalorder %s119, %s120
    %p131 = scmp.eq.s32.totalorder %s17, 0
    %p132 = por %p130, %p131
    %p133 = scmp.ne.s32.totalorder %s119, %s120
    %p134 = scmp.eq.s32.totalorder %s18, 1
    %p135 = por %p133, %p134
    %p137 = scmp.ne.s32.totalorder %s120, %s136
    %p138 = scmp.eq.s32.totalorder %s18, 0
    %p139 = por %p137, %p138
    %s140 = ssub.s32 %s12, %s19
    %p141 = scmp.eq.s32.totalorder %s140, 0
    %s143 = sadd.s32 %s142, 1
    %s144 = scalar_select %p141, %s142, %s143
    %p147 = pneg %p141
    %p148 = scmp.eq.s32.totalorder %s12, 1
    %p149 = por %p147, %p148
    %p150 = scmp.ne.s32.totalorder %s142, %s145
    %p151 = scmp.eq.s32.totalorder %s12, 0
    %p152 = por %p150, %p151
    %p153 = scmp.ne.s32.totalorder %s142, %s145
    %p154 = scmp.eq.s32.totalorder %s17, 1
    %p155 = por %p153, %p154
    %p156 = scmp.ne.s32.totalorder %s145, %s146
    %p157 = scmp.eq.s32.totalorder %s17, 0
    %p158 = por %p156, %p157
    %p159 = scmp.ne.s32.totalorder %s145, %s146
    %p160 = scmp.eq.s32.totalorder %s18, 1
    %p161 = por %p159, %p160
    %p163 = scmp.ne.s32.totalorder %s146, %s162
    %p164 = scmp.eq.s32.totalorder %s18, 0
    %p165 = por %p163, %p164
    %p166 = scmp.le.s32.totalorder 1, %s12
    %p167 = scmp.lt.s32.totalorder %s12, 3
    %p168 = pnand %p166, %p167
    %p169 = pneg %p168
    // Predicated region
    $region9: #{cnn_forward.3} parent=5 // pred_check
      _
    $region10: #{cnn_forward.3} parent=5 // pred_check_branch
      %171 = sbr.rel (%p168) target = $region12
    $region11: #{cnn_forward.3} parent=5 // pred_region
      %s172 = ssub.s32 %s12, 1
      // Predicated region
      $region13: #{cnn_forward.3} parent=11 // pred_check
        %p173 = pneg %p59
      $region14: #{cnn_forward.3} parent=11 // pred_check_branch
        %175 = sbr.rel (%p173) target = $region16
      $region15: #{cnn_forward.3} parent=11 // pred_region
        _
      $region16: #{cnn_forward.3} parent=11 // pred_fallthru
        _
      // Predicated region
      $region17: #{cnn_forward.3} parent=11 // pred_check
        %p176 = pneg %p80
      $region18: #{cnn_forward.3} parent=11 // pred_check_branch
        %178 = sbr.rel (%p176) target = $region20
      $region19: #{cnn_forward.3} parent=11 // pred_region
        _
      $region20: #{cnn_forward.3} parent=11 // pred_fallthru
        _
    $region12: #{cnn_forward.3} parent=5 // pred_fallthru
      _
    %p179 = scmp.lt.s32.totalorder %s12, 2
    // Predicated region
    $region21: #{cnn_forward.3} parent=5 // pred_check
      %p180 = pneg %p179
    $region22: #{cnn_forward.3} parent=5 // pred_check_branch
      %182 = sbr.rel (%p180) target = $region24
    $region23: #{cnn_forward.3} parent=5 // pred_region
      // Predicated region
      $region25: #{cnn_forward.3} parent=23 // pred_check
        %p183 = pneg %p32
      $region26: #{cnn_forward.3} parent=23 // pred_check_branch
        %185 = sbr.rel (%p183) target = $region28
      $region27: #{cnn_forward.3} parent=23 // pred_region
        %p186 = scmp.lt.s32.totalorder %s12, 1
        %s187 = scalar_select %p186, %s12, 1
        %s188 = smul.addr %s187, 6
        %s189 = smul.addr %s188, 4
        %s190 = scalar_lea.vmem %s0, %s189
      $region28: #{cnn_forward.3} parent=23 // pred_fallthru
        _
    $region24: #{cnn_forward.3} parent=5 // pred_fallthru
      _
    %p191 = scmp.le.s32.totalorder 1, %s12
    %p192 = scmp.lt.s32.totalorder %s12, 3
    %p193 = pnand %p191, %p192
    %p194 = pneg %p193
    // Predicated region
    $region29: #{cnn_forward.3} parent=5 // pred_check
      _
    $region30: #{cnn_forward.3} parent=5 // pred_check_branch
      %196 = sbr.rel (%p193) target = $region32
    $region31: #{cnn_forward.3} parent=5 // pred_region
      %s197 = ssub.s32 %s12, 1
      %p198 = scmp.lt.s32.totalorder %s17, 1
      %s199 = scalar_select %p198, %s17, 1
      %s200 = smul.addr %s199, 6
      %s201 = smul.addr %s200, 4
      %s202 = scalar_lea.vmem %s0, %s201
      %p203 = pneg %p38
      %p204 = pneg %p35
      %p205 = pneg %p59
      %p206 = pneg %p56
      %p207 = pneg %p80
      %p208 = pneg %p77
      %p209 = pneg %p106
      %p210 = pneg %p103
      %p211 = scmp.lt.s32.totalorder %s17, 1
      %s212 = scalar_select %p211, %s17, 1
      %s213 = smul.addr %s212, 4
      %s214 = smul.addr %s213, 4
      %s215 = scalar_lea.vmem %s3, %s214
      %p216 = pneg %p132
      %p217 = pneg %p129
      %p218 = scmp.lt.s32.totalorder %s17, 1
      %s219 = scalar_select %p218, %s17, 1
      %s220 = smul.addr %s219, 2
      %s221 = scalar_lea.vmem %s4, %s220
      %p222 = pneg %p158
      %p223 = pneg %p155
      %p224 = scmp.lt.s32.totalorder %s17, 1
      %s225 = scalar_select %p224, %s17, 1
      %s226 = smul.addr %s225, 2
      %s227 = scalar_lea.vmem %s5, %s226
      %p228 = scmp.lt.s32.totalorder %s17, 1
      %s229 = scalar_select %p228, %s17, 1
      %s230 = smul.addr %s229, 6
      %s231 = smul.addr %s230, 4
      %s232 = scalar_lea.vmem %s0, %s231
      %p233 = scmp.lt.s32.totalorder %s17, 1
      %s234 = scalar_select %p233, %s17, 1
      %s235 = smul.addr %s234, 4
      %s236 = smul.addr %s235, 4
      %s237 = scalar_lea.vmem %s3, %s236
      %p238 = scmp.lt.s32.totalorder %s17, 1
      %s239 = scalar_select %p238, %s17, 1
      %s240 = smul.addr %s239, 2
      %s241 = scalar_lea.vmem %s4, %s240
      %p242 = scmp.lt.s32.totalorder %s17, 1
      %s243 = scalar_select %p242, %s17, 1
      %s244 = smul.addr %s243, 2
      %s245 = scalar_lea.vmem %s5, %s244
      %v246 = vld [vmem:[%s2] sm:$0x3]
      %v247 = vld [vmem:[%s232] sm:$0xff]
      %v248 = vld [vmem:[%s232 + $0x8] sm:$0xff]
      %v249 = vld [vmem:[%s232 + $0x10] sm:$0xff]
      %v250 = vld [vmem:[%s1] sm:$0xff]
      %v251 = vld [vmem:[%s1 + $0x8] sm:$0xff]
      %v252 = vld [vmem:[%s1 + $0x10] sm:$0xff]
      %v253 = vld [vmem:[%s1 + $0x18] sm:$0xff]
      %v254 = vld [vmem:[%s1 + $0x20] sm:$0xff]
      %v255 = vld [vmem:[%s1 + $0x28] sm:$0xff]
      %v256 = vld [vmem:[%s1 + $0x30] sm:$0xff]
      %v257 = vld [vmem:[%s1 + $0x38] sm:$0xff]
      %v258 = vld [vmem:[%s1 + $0x40] sm:$0xff]
      %v259 = vld [vmem:[%s1 + $0x48] sm:$0xff]
      %v260 = vld [vmem:[%s1 + $0x50] sm:$0xff]
      %v261 = vld [vmem:[%s1 + $0x58] sm:$0xff]
      %v262 = vld [vmem:[%s1 + $0x60] sm:$0xff]
      %v263 = vld [vmem:[%s1 + $0x68] sm:$0xff]
      %v264 = vld [vmem:[%s1 + $0x70] sm:$0xff]
      %v265 = vld [vmem:[%s1 + $0x78] sm:$0xff]
      %v266 = vld [vmem:[%s1 + $0x80] sm:$0xff]
      %v267 = vld [vmem:[%s1 + $0x88] sm:$0xff]
      %v268 = vld [vmem:[%s1 + $0x90] sm:$0xff]
      %v269 = vld [vmem:[%s1 + $0x98] sm:$0xff]
      %v270 = vld [vmem:[%s1 + $0xa0] sm:$0xff]
      %v271 = vld [vmem:[%s1 + $0xa8] sm:$0xff]
      %v272 = vld [vmem:[%s1 + $0xb0] sm:$0xff]
      %v273 = vld [vmem:[%s1 + $0xb8] sm:$0xff]
      %v274 = vld [vmem:[%s1 + $0xc0] sm:$0xff]
      %v275 = vld [vmem:[%s1 + $0xc8] sm:$0xff]
      %v276 = vld [vmem:[%s1 + $0xd0] sm:$0xff]
      %v277 = vld [vmem:[%s1 + $0xd8] sm:$0xff]
      %v278 = vld [vmem:[%s1 + $0xe0] sm:$0xff]
      %v279 = vld [vmem:[%s1 + $0xe8] sm:$0xff]
      %v280 = vld [vmem:[%s1 + $0xf0] sm:$0xff]
      %v281 = vld [vmem:[%s1 + $0xf8] sm:$0xff]
      %v282 = vld [vmem:[%s1 + $0x100] sm:$0xff]
      %v283 = vld [vmem:[%s1 + $0x108] sm:$0xff]
      %v284 = vld [vmem:[%s1 + $0x110] sm:$0xff]
      %v285 = vld [vmem:[%s1 + $0x118] sm:$0xff]
      %v286 = vld [vmem:[%s1 + $0x120] sm:$0xff]
      %v287 = vld [vmem:[%s1 + $0x128] sm:$0xff]
      %v288 = vld [vmem:[%s1 + $0x130] sm:$0xff]
      %v289 = vld [vmem:[%s1 + $0x138] sm:$0xff]
      %v290 = vld [vmem:[%s1 + $0x140] sm:$0xff]
      %v291 = vld [vmem:[%s1 + $0x148] sm:$0xff]
      %v292 = vld [vmem:[%s1 + $0x150] sm:$0xff]
      %v293 = vld [vmem:[%s1 + $0x158] sm:$0xff]
      %v294 = vld [vmem:[%s1 + $0x160] sm:$0xff]
      %v295 = vld [vmem:[%s1 + $0x168] sm:$0xff]
      %v296 = vld [vmem:[%s1 + $0x170] sm:$0xff]
      %v297 = vld [vmem:[%s1 + $0x178] sm:$0xff]
      %v298 = vld [vmem:[%s1 + $0x180] sm:$0xff]
      %v299 = vld [vmem:[%s1 + $0x188] sm:$0xff]
      %v300 = vld [vmem:[%s1 + $0x190] sm:$0xff]
      %v301 = vld [vmem:[%s1 + $0x198] sm:$0xff]
      %v302 = vld [vmem:[%s1 + $0x1a0] sm:$0xff]
      %v303 = vld [vmem:[%s1 + $0x1a8] sm:$0xff]
      %v304 = vld [vmem:[%s1 + $0x1b0] sm:$0xff]
      %v305 = vld [vmem:[%s1 + $0x1b8] sm:$0xff]
      %v306 = vld [vmem:[%s1 + $0x1c0] sm:$0xff]
      %v307 = vld [vmem:[%s1 + $0x1c8] sm:$0xff]
      %v308 = vld [vmem:[%s1 + $0x1d0] sm:$0xff]
      %v309 = vld [vmem:[%s1 + $0x1d8] sm:$0xff]
      %v310 = vld [vmem:[%s1 + $0x1e0] sm:$0xff]
      %v311 = vld [vmem:[%s1 + $0x1e8] sm:$0xff]
      %v312 = vld [vmem:[%s1 + $0x1f0] sm:$0xff]
      %v313 = vld [vmem:[%s1 + $0x1f8] sm:$0xff]
      %v314 = vld [vmem:[%s1 + $0x200] sm:$0xff]
      %v315 = vld [vmem:[%s1 + $0x208] sm:$0xff]
      %v316 = vld [vmem:[%s1 + $0x210] sm:$0xff]
      %v317 = vld [vmem:[%s1 + $0x218] sm:$0xff]
      %v318 = vld [vmem:[%s1 + $0x220] sm:$0xff]
      %v319 = vld [vmem:[%s1 + $0x228] sm:$0xff]
      %v320 = vld [vmem:[%s1 + $0x230] sm:$0xff]
      %v321 = vld [vmem:[%s1 + $0x238] sm:$0xff]
      %v322 = vld [vmem:[%s1 + $0x240] sm:$0xff]
      %v323 = vld [vmem:[%s1 + $0x248] sm:$0xff]
      %v324 = vld [vmem:[%s1 + $0x250] sm:$0xff]
      %v325 = vld [vmem:[%s1 + $0x258] sm:$0xff]
      %v326 = vld [vmem:[%s1 + $0x260] sm:$0xff]
      %v327 = vld [vmem:[%s1 + $0x268] sm:$0xff]
      %v328 = vld [vmem:[%s1 + $0x270] sm:$0xff]
      %v329 = vld [vmem:[%s1 + $0x278] sm:$0xff]
      %v330 = vld [vmem:[%s1 + $0x280] sm:$0xff]
      %v331 = vld [vmem:[%s1 + $0x288] sm:$0xff]
      %v332 = vld [vmem:[%s1 + $0x290] sm:$0xff]
      %v333 = vld [vmem:[%s1 + $0x298] sm:$0xff]
      %v334 = vld [vmem:[%s1 + $0x2a0] sm:$0xff]
      %v335 = vld [vmem:[%s1 + $0x2a8] sm:$0xff]
      %v336 = vld [vmem:[%s1 + $0x2b0] sm:$0xff]
      %v337 = vld [vmem:[%s1 + $0x2b8] sm:$0xff]
      %v338 = vld [vmem:[%s1 + $0x2c0] sm:$0xff]
      %v339 = vld [vmem:[%s1 + $0x2c8] sm:$0xff]
      %v340 = vld [vmem:[%s1 + $0x2d0] sm:$0xff]
      %v341 = vld [vmem:[%s1 + $0x2d8] sm:$0xff]
      %v342 = vld [vmem:[%s1 + $0x2e0] sm:$0xff]
      %v343 = vld [vmem:[%s1 + $0x2e8] sm:$0xff]
      %v344 = vld [vmem:[%s1 + $0x2f0] sm:$0xff]
      %v345 = vld [vmem:[%s1 + $0x2f8] sm:$0xff]
      %v346 = vld [vmem:[%s1 + $0x300] sm:$0xff]
      %v347 = vld [vmem:[%s1 + $0x308] sm:$0xff]
      %v348 = vld [vmem:[%s1 + $0x310] sm:$0xff]
      %v349 = vld [vmem:[%s1 + $0x318] sm:$0xff]
      %v350 = vld [vmem:[%s1 + $0x320] sm:$0xff]
      %v351 = vld [vmem:[%s1 + $0x328] sm:$0xff]
      %v352 = vld [vmem:[%s1 + $0x330] sm:$0xff]
      %v353 = vld [vmem:[%s1 + $0x338] sm:$0xff]
      %v354 = vld [vmem:[%s1 + $0x340] sm:$0xff]
      %v355 = vld [vmem:[%s1 + $0x348] sm:$0xff]
      %v356 = vld [vmem:[%s1 + $0x350] sm:$0xff]
      %v357 = vld [vmem:[%s1 + $0x358] sm:$0xff]
      %v358 = vld [vmem:[%s1 + $0x360] sm:$0xff]
      %v359 = vld [vmem:[%s1 + $0x368] sm:$0xff]
      %v360 = vld [vmem:[%s1 + $0x370] sm:$0xff]
      %v361 = vld [vmem:[%s1 + $0x378] sm:$0xff]
      %v362 = vld [vmem:[%s1 + $0x380] sm:$0xff]
      %v363 = vld [vmem:[%s1 + $0x388] sm:$0xff]
      %v364 = vld [vmem:[%s1 + $0x390] sm:$0xff]
      %v365 = vld [vmem:[%s1 + $0x398] sm:$0xff]
      %v366 = vld [vmem:[%s1 + $0x3a0] sm:$0xff]
      %v367 = vld [vmem:[%s1 + $0x3a8] sm:$0xff]
      %v368 = vld [vmem:[%s1 + $0x3b0] sm:$0xff]
      %v369 = vld [vmem:[%s1 + $0x3b8] sm:$0xff]
      %v370 = vld [vmem:[%s1 + $0x3c0] sm:$0xff]
      %v371 = vld [vmem:[%s1 + $0x3c8] sm:$0xff]
      %v372 = vld [vmem:[%s1 + $0x3d0] sm:$0xff]
      %v373 = vld [vmem:[%s1 + $0x3d8] sm:$0xff]
      %v374 = vld [vmem:[%s1 + $0x3e0] sm:$0xff]
      %v375 = vld [vmem:[%s1 + $0x3e8] sm:$0xff]
      %v376 = vld [vmem:[%s1 + $0x3f0] sm:$0xff]
      %v377 = vld [vmem:[%s1 + $0x3f8] sm:$0xff]
      %v378 = vld [vmem:[%s1 + $0x400] sm:$0xff]
      %v379 = vld [vmem:[%s1 + $0x408] sm:$0xff]
      %v380 = vld [vmem:[%s1 + $0x410] sm:$0xff]
      %v381 = vld [vmem:[%s1 + $0x418] sm:$0xff]
      %v382 = vld [vmem:[%s1 + $0x420] sm:$0xff]
      %v383 = vld [vmem:[%s1 + $0x428] sm:$0xff]
      %v384 = vld [vmem:[%s1 + $0x430] sm:$0xff]
      %v385 = vld [vmem:[%s1 + $0x438] sm:$0xff]
      %v386 = vld [vmem:[%s1 + $0x440] sm:$0xff]
      %v387 = vld [vmem:[%s1 + $0x448] sm:$0xff]
      %v388 = vld [vmem:[%s1 + $0x450] sm:$0xff]
      %v389 = vld [vmem:[%s1 + $0x458] sm:$0xff]
      %v390 = vld [vmem:[%s1 + $0x460] sm:$0xff]
      %v391 = vld [vmem:[%s1 + $0x468] sm:$0xff]
      %v392 = vld [vmem:[%s1 + $0x470] sm:$0xff]
      %v393 = vld [vmem:[%s1 + $0x478] sm:$0xff]
      %v394 = vld [vmem:[%s1 + $0x480] sm:$0xff]
      %v395 = vld [vmem:[%s1 + $0x488] sm:$0xff]
      %v396 = vld [vmem:[%s1 + $0x490] sm:$0xff]
      %v397 = vld [vmem:[%s1 + $0x498] sm:$0xff]
      %v398 = vld [vmem:[%s1 + $0x4a0] sm:$0xff]
      %v399 = vld [vmem:[%s1 + $0x4a8] sm:$0xff]
      %v400 = vld [vmem:[%s1 + $0x4b0] sm:$0xff]
      %v401 = vld [vmem:[%s1 + $0x4b8] sm:$0xff]
      %v402 = vld [vmem:[%s1 + $0x4c0] sm:$0xff]
      %v403 = vld [vmem:[%s1 + $0x4c8] sm:$0xff]
      %v404 = vld [vmem:[%s1 + $0x4d0] sm:$0xff]
      %v405 = vld [vmem:[%s1 + $0x4d8] sm:$0xff]
      %v406 = vld [vmem:[%s1 + $0x4e0] sm:$0xff]
      %v407 = vld [vmem:[%s1 + $0x4e8] sm:$0xff]
      %v408 = vld [vmem:[%s1 + $0x4f0] sm:$0xff]
      %v409 = vld [vmem:[%s1 + $0x4f8] sm:$0xff]
      %v410 = vld [vmem:[%s1 + $0x500] sm:$0xff]
      %v411 = vld [vmem:[%s1 + $0x508] sm:$0xff]
      %v412 = vld [vmem:[%s1 + $0x510] sm:$0xff]
      %v413 = vld [vmem:[%s1 + $0x518] sm:$0xff]
      %v414 = vld [vmem:[%s1 + $0x520] sm:$0xff]
      %v415 = vld [vmem:[%s1 + $0x528] sm:$0xff]
      %v416 = vld [vmem:[%s1 + $0x530] sm:$0xff]
      %v417 = vld [vmem:[%s1 + $0x538] sm:$0xff]
      %v418 = vld [vmem:[%s1 + $0x540] sm:$0xff]
      %v419 = vld [vmem:[%s1 + $0x548] sm:$0xff]
      %v420 = vld [vmem:[%s1 + $0x550] sm:$0xff]
      %v421 = vld [vmem:[%s1 + $0x558] sm:$0xff]
      %v422 = vld [vmem:[%s1 + $0x560] sm:$0xff]
      %v423 = vld [vmem:[%s1 + $0x568] sm:$0xff]
      %v424 = vld [vmem:[%s1 + $0x570] sm:$0xff]
      %v425 = vld [vmem:[%s1 + $0x578] sm:$0xff]
      %v426 = vld [vmem:[%s1 + $0x580] sm:$0xff]
      %v427 = vld [vmem:[%s1 + $0x588] sm:$0xff]
      %v428 = vld [vmem:[%s1 + $0x590] sm:$0xff]
      %v429 = vld [vmem:[%s1 + $0x598] sm:$0xff]
      %v430 = vld [vmem:[%s1 + $0x5a0] sm:$0xff]
      %v431 = vld [vmem:[%s1 + $0x5a8] sm:$0xff]
      %v432 = vld [vmem:[%s1 + $0x5b0] sm:$0xff]
      %v433 = vld [vmem:[%s1 + $0x5b8] sm:$0xff]
      %v434 = vld [vmem:[%s1 + $0x5c0] sm:$0xff]
      %v435 = vld [vmem:[%s1 + $0x5c8] sm:$0xff]
      %v436 = vld [vmem:[%s1 + $0x5d0] sm:$0xff]
      %v437 = vld [vmem:[%s1 + $0x5d8] sm:$0xff]
      %v438 = vld [vmem:[%s1 + $0x5e0] sm:$0xff]
      %v439 = vld [vmem:[%s1 + $0x5e8] sm:$0xff]
      %v440 = vld [vmem:[%s1 + $0x5f0] sm:$0xff]
      %v441 = vld [vmem:[%s1 + $0x5f8] sm:$0xff]
      %v442 = vld [vmem:[%s1 + $0x600] sm:$0xff]
      %v443 = vld [vmem:[%s1 + $0x608] sm:$0xff]
      %v444 = vld [vmem:[%s1 + $0x610] sm:$0xff]
      %v445 = vld [vmem:[%s1 + $0x618] sm:$0xff]
      %v446 = vld [vmem:[%s1 + $0x620] sm:$0xff]
      %v447 = vld [vmem:[%s1 + $0x628] sm:$0xff]
      %v448 = vld [vmem:[%s1 + $0x630] sm:$0xff]
      %v449 = vld [vmem:[%s1 + $0x638] sm:$0xff]
      %v450 = vld [vmem:[%s1 + $0x640] sm:$0xff]
      %v451 = vld [vmem:[%s1 + $0x648] sm:$0xff]
      %v452 = vld [vmem:[%s1 + $0x650] sm:$0xff]
      %v453 = vld [vmem:[%s1 + $0x658] sm:$0xff]
      %v454 = vld [vmem:[%s1 + $0x660] sm:$0xff]
      %v455 = vld [vmem:[%s1 + $0x668] sm:$0xff]
      %v456 = vld [vmem:[%s1 + $0x670] sm:$0xff]
      %v457 = vld [vmem:[%s1 + $0x678] sm:$0xff]
      %v458 = vld [vmem:[%s1 + $0x680] sm:$0xff]
      %v459 = vld [vmem:[%s1 + $0x688] sm:$0xff]
      %v460 = vld [vmem:[%s1 + $0x690] sm:$0xff]
      %v461 = vld [vmem:[%s1 + $0x698] sm:$0xff]
      %v462 = vld [vmem:[%s1 + $0x6a0] sm:$0xff]
      %v463 = vld [vmem:[%s1 + $0x6a8] sm:$0xff]
      %v464 = vld [vmem:[%s1 + $0x6b0] sm:$0xff]
      %v465 = vld [vmem:[%s1 + $0x6b8] sm:$0xff]
      %v466 = vld [vmem:[%s1 + $0x6c0] sm:$0xff]
      %v467 = vld [vmem:[%s1 + $0x6c8] sm:$0xff]
      %v468 = vld [vmem:[%s1 + $0x6d0] sm:$0xff]
      %v469 = vld [vmem:[%s1 + $0x6d8] sm:$0xff]
      %v470 = vld [vmem:[%s1 + $0x6e0] sm:$0xff]
      %v471 = vld [vmem:[%s1 + $0x6e8] sm:$0xff]
      %v472 = vld [vmem:[%s1 + $0x6f0] sm:$0xff]
      %v473 = vld [vmem:[%s1 + $0x6f8] sm:$0xff]
      %v474 = vld [vmem:[%s1 + $0x700] sm:$0xff]
      %v475 = vld [vmem:[%s1 + $0x708] sm:$0xff]
      %v476 = vld [vmem:[%s1 + $0x710] sm:$0xff]
      %v477 = vld [vmem:[%s1 + $0x718] sm:$0xff]
      %v478 = vld [vmem:[%s1 + $0x720] sm:$0xff]
      %v479 = vld [vmem:[%s1 + $0x728] sm:$0xff]
      %v480 = vld [vmem:[%s1 + $0x730] sm:$0xff]
      %v481 = vld [vmem:[%s1 + $0x738] sm:$0xff]
      %v482 = vld [vmem:[%s1 + $0x740] sm:$0xff]
      %v483 = vld [vmem:[%s1 + $0x748] sm:$0xff]
      %v484 = vld [vmem:[%s1 + $0x750] sm:$0xff]
      %v485 = vld [vmem:[%s1 + $0x758] sm:$0xff]
      %v486 = vld [vmem:[%s1 + $0x760] sm:$0xff]
      %v487 = vld [vmem:[%s1 + $0x768] sm:$0xff]
      %v488 = vld [vmem:[%s1 + $0x770] sm:$0xff]
      %v489 = vld [vmem:[%s1 + $0x778] sm:$0xff]
      %v490 = vld [vmem:[%s1 + $0x780] sm:$0xff]
      %v491 = vld [vmem:[%s1 + $0x788] sm:$0xff]
      %v492 = vld [vmem:[%s1 + $0x790] sm:$0xff]
      %v493 = vld [vmem:[%s1 + $0x798] sm:$0xff]
      %v494 = vld [vmem:[%s1 + $0x7a0] sm:$0xff]
      %v495 = vld [vmem:[%s1 + $0x7a8] sm:$0xff]
      %v496 = vld [vmem:[%s1 + $0x7b0] sm:$0xff]
      %v497 = vld [vmem:[%s1 + $0x7b8] sm:$0xff]
      %v498 = vld [vmem:[%s1 + $0x7c0] sm:$0xff]
      %v499 = vld [vmem:[%s1 + $0x7c8] sm:$0xff]
      %v500 = vld [vmem:[%s1 + $0x7d0] sm:$0xff]
      %v501 = vld [vmem:[%s1 + $0x7d8] sm:$0xff]
      %v502 = vld [vmem:[%s1 + $0x7e0] sm:$0xff]
      %v503 = vld [vmem:[%s1 + $0x7e8] sm:$0xff]
      %v504 = vld [vmem:[%s1 + $0x7f0] sm:$0xff]
      %v505 = vld [vmem:[%s1 + $0x7f8] sm:$0xff]
      %v506 = vld [vmem:[%s1 + $0x800] sm:$0xff]
      %v507 = vld [vmem:[%s1 + $0x808] sm:$0xff]
      %v508 = vld [vmem:[%s1 + $0x810] sm:$0xff]
      %v509 = vld [vmem:[%s1 + $0x818] sm:$0xff]
      %v510 = vld [vmem:[%s1 + $0x820] sm:$0xff]
      %v511 = vld [vmem:[%s1 + $0x828] sm:$0xff]
      %v512 = vld [vmem:[%s1 + $0x830] sm:$0xff]
      %v513 = vld [vmem:[%s1 + $0x838] sm:$0xff]
      %v514 = vld [vmem:[%s1 + $0x840] sm:$0xff]
      %v515 = vld [vmem:[%s1 + $0x848] sm:$0xff]
      %v516 = vld [vmem:[%s1 + $0x850] sm:$0xff]
      %v517 = vld [vmem:[%s1 + $0x858] sm:$0xff]
      %v518 = vld [vmem:[%s1 + $0x860] sm:$0xff]
      %v519 = vld [vmem:[%s1 + $0x868] sm:$0xff]
      %v520 = vld [vmem:[%s1 + $0x870] sm:$0xff]
      %v521 = vld [vmem:[%s1 + $0x878] sm:$0xff]
      %v522 = vld [vmem:[%s1 + $0x880] sm:$0xff]
      %v523 = vld [vmem:[%s1 + $0x888] sm:$0xff]
      %v524 = vld [vmem:[%s1 + $0x890] sm:$0xff]
      %v525 = vld [vmem:[%s1 + $0x898] sm:$0xff]
      %v526 = vld [vmem:[%s1 + $0x8a0] sm:$0xff]
      %v527 = vld [vmem:[%s1 + $0x8a8] sm:$0xff]
      %v528 = vld [vmem:[%s1 + $0x8b0] sm:$0xff]
      %v529 = vld [vmem:[%s1 + $0x8b8] sm:$0xff]
      %v530 = vld [vmem:[%s1 + $0x8c0] sm:$0xff]
      %v531 = vld [vmem:[%s1 + $0x8c8] sm:$0xff]
      %v532 = vld [vmem:[%s1 + $0x8d0] sm:$0xff]
      %v533 = vld [vmem:[%s1 + $0x8d8] sm:$0xff]
      %v534 = vld [vmem:[%s1 + $0x8e0] sm:$0xff]
      %v535 = vld [vmem:[%s1 + $0x8e8] sm:$0xff]
      %v536 = vld [vmem:[%s1 + $0x8f0] sm:$0xff]
      %v537 = vld [vmem:[%s1 + $0x8f8] sm:$0xff]
      %v541 = vunpack.c.l.b16 %v247
      %v542 = vunpack.c.h.b16 %v247
      %v543 = vunpack.c.l.b16 %v248
      %v544 = vunpack.c.h.b16 %v248
      %v545 = vunpack.c.l.b16 %v249
      %v546 = vunpack.c.h.b16 %v249
      %v547 = vpack.c.b16 %v541, %v541
      %v548 = vpack.c.b16 %v542, %v542
      %v549 = vpack.c.b16 %v543, %v543
      %v550 = vpack.c.b16 %v544, %v544
      %v551 = vpack.c.b16 %v545, %v545
      %v552 = vpack.c.b16 %v546, %v546
      %v847 = vunpack.c.l.b16 %v250
      %v848 = vunpack.c.h.b16 %v250
      %v849 = vunpack.c.l.b16 %v251
      %v850 = vunpack.c.h.b16 %v251
      %v851 = vunpack.c.l.b16 %v252
      %v852 = vunpack.c.h.b16 %v252
      %v853 = vunpack.c.l.b16 %v253
      %v854 = vunpack.c.h.b16 %v253
      %v855 = vunpack.c.l.b16 %v254
      %v856 = vunpack.c.h.b16 %v254
      %v857 = vunpack.c.l.b16 %v255
      %v858 = vunpack.c.h.b16 %v255
      %v859 = vunpack.c.l.b16 %v256
      %v860 = vunpack.c.h.b16 %v256
      %v861 = vunpack.c.l.b16 %v257
      %v862 = vunpack.c.h.b16 %v257
      %v863 = vunpack.c.l.b16 %v258
      %v864 = vunpack.c.h.b16 %v258
      %v865 = vunpack.c.l.b16 %v259
      %v866 = vunpack.c.h.b16 %v259
      %v867 = vunpack.c.l.b16 %v260
      %v868 = vunpack.c.h.b16 %v260
      %v869 = vunpack.c.l.b16 %v261
      %v870 = vunpack.c.h.b16 %v261
      %v871 = vunpack.c.l.b16 %v262
      %v872 = vunpack.c.h.b16 %v262
      %v873 = vunpack.c.l.b16 %v263
      %v874 = vunpack.c.h.b16 %v263
      %v875 = vunpack.c.l.b16 %v264
      %v876 = vunpack.c.h.b16 %v264
      %v877 = vunpack.c.l.b16 %v265
      %v878 = vunpack.c.h.b16 %v265
      %v879 = vunpack.c.l.b16 %v266
      %v880 = vunpack.c.h.b16 %v266
      %v881 = vunpack.c.l.b16 %v267
      %v882 = vunpack.c.h.b16 %v267
      %v883 = vunpack.c.l.b16 %v268
      %v884 = vunpack.c.h.b16 %v268
      %v885 = vunpack.c.l.b16 %v269
      %v886 = vunpack.c.h.b16 %v269
      %v887 = vunpack.c.l.b16 %v270
      %v888 = vunpack.c.h.b16 %v270
      %v889 = vunpack.c.l.b16 %v271
      %v890 = vunpack.c.h.b16 %v271
      %v891 = vunpack.c.l.b16 %v272
      %v892 = vunpack.c.h.b16 %v272
      %v893 = vunpack.c.l.b16 %v273
      %v894 = vunpack.c.h.b16 %v273
      %v895 = vunpack.c.l.b16 %v274
      %v896 = vunpack.c.h.b16 %v274
      %v897 = vunpack.c.l.b16 %v275
      %v898 = vunpack.c.h.b16 %v275
      %v899 = vunpack.c.l.b16 %v276
      %v900 = vunpack.c.h.b16 %v276
      %v901 = vunpack.c.l.b16 %v277
      %v902 = vunpack.c.h.b16 %v277
      %v903 = vunpack.c.l.b16 %v278
      %v904 = vunpack.c.h.b16 %v278
      %v905 = vunpack.c.l.b16 %v279
      %v906 = vunpack.c.h.b16 %v279
      %v907 = vunpack.c.l.b16 %v280
      %v908 = vunpack.c.h.b16 %v280
      %v909 = vunpack.c.l.b16 %v281
      %v910 = vunpack.c.h.b16 %v281
      %v911 = vunpack.c.l.b16 %v282
      %v912 = vunpack.c.h.b16 %v282
      %v913 = vunpack.c.l.b16 %v283
      %v914 = vunpack.c.h.b16 %v283
      %v915 = vunpack.c.l.b16 %v284
      %v916 = vunpack.c.h.b16 %v284
      %v917 = vunpack.c.l.b16 %v285
      %v918 = vunpack.c.h.b16 %v285
      %v919 = vunpack.c.l.b16 %v286
      %v920 = vunpack.c.h.b16 %v286
      %v921 = vunpack.c.l.b16 %v287
      %v922 = vunpack.c.h.b16 %v287
      %v923 = vunpack.c.l.b16 %v288
      %v924 = vunpack.c.h.b16 %v288
      %v925 = vunpack.c.l.b16 %v289
      %v926 = vunpack.c.h.b16 %v289
      %v927 = vunpack.c.l.b16 %v290
      %v928 = vunpack.c.h.b16 %v290
      %v929 = vunpack.c.l.b16 %v291
      %v930 = vunpack.c.h.b16 %v291
      %v931 = vunpack.c.l.b16 %v292
      %v932 = vunpack.c.h.b16 %v292
      %v933 = vunpack.c.l.b16 %v293
      %v934 = vunpack.c.h.b16 %v293
      %v935 = vunpack.c.l.b16 %v294
      %v936 = vunpack.c.h.b16 %v294
      %v937 = vunpack.c.l.b16 %v295
      %v938 = vunpack.c.h.b16 %v295
      %v939 = vunpack.c.l.b16 %v296
      %v940 = vunpack.c.h.b16 %v296
      %v941 = vunpack.c.l.b16 %v297
      %v942 = vunpack.c.h.b16 %v297
      %v943 = vunpack.c.l.b16 %v298
      %v944 = vunpack.c.h.b16 %v298
      %v945 = vunpack.c.l.b16 %v299
      %v946 = vunpack.c.h.b16 %v299
      %v947 = vunpack.c.l.b16 %v300
      %v948 = vunpack.c.h.b16 %v300
      %v949 = vunpack.c.l.b16 %v301
      %v950 = vunpack.c.h.b16 %v301
      %v951 = vunpack.c.l.b16 %v302
      %v952 = vunpack.c.h.b16 %v302
      %v953 = vunpack.c.l.b16 %v303
      %v954 = vunpack.c.h.b16 %v303
      %v955 = vunpack.c.l.b16 %v304
      %v956 = vunpack.c.h.b16 %v304
      %v957 = vunpack.c.l.b16 %v305
      %v958 = vunpack.c.h.b16 %v305
      %v959 = vunpack.c.l.b16 %v306
      %v960 = vunpack.c.h.b16 %v306
      %v961 = vunpack.c.l.b16 %v307
      %v962 = vunpack.c.h.b16 %v307
      %v963 = vunpack.c.l.b16 %v308
      %v964 = vunpack.c.h.b16 %v308
      %v965 = vunpack.c.l.b16 %v309
      %v966 = vunpack.c.h.b16 %v309
      %v967 = vunpack.c.l.b16 %v310
      %v968 = vunpack.c.h.b16 %v310
      %v969 = vunpack.c.l.b16 %v311
      %v970 = vunpack.c.h.b16 %v311
      %v971 = vunpack.c.l.b16 %v312
      %v972 = vunpack.c.h.b16 %v312
      %v973 = vunpack.c.l.b16 %v313
      %v974 = vunpack.c.h.b16 %v313
      %v975 = vunpack.c.l.b16 %v314
      %v976 = vunpack.c.h.b16 %v314
      %v977 = vunpack.c.l.b16 %v315
      %v978 = vunpack.c.h.b16 %v315
      %v979 = vunpack.c.l.b16 %v316
      %v980 = vunpack.c.h.b16 %v316
      %v981 = vunpack.c.l.b16 %v317
      %v982 = vunpack.c.h.b16 %v317
      %v983 = vunpack.c.l.b16 %v318
      %v984 = vunpack.c.h.b16 %v318
      %v985 = vunpack.c.l.b16 %v319
      %v986 = vunpack.c.h.b16 %v319
      %v987 = vunpack.c.l.b16 %v320
      %v988 = vunpack.c.h.b16 %v320
      %v989 = vunpack.c.l.b16 %v321
      %v990 = vunpack.c.h.b16 %v321
      %v991 = vunpack.c.l.b16 %v322
      %v992 = vunpack.c.h.b16 %v322
      %v993 = vunpack.c.l.b16 %v323
      %v994 = vunpack.c.h.b16 %v323
      %v995 = vunpack.c.l.b16 %v324
      %v996 = vunpack.c.h.b16 %v324
      %v997 = vunpack.c.l.b16 %v325
      %v998 = vunpack.c.h.b16 %v325
      %v999 = vunpack.c.l.b16 %v326
      %v1000 = vunpack.c.h.b16 %v326
      %v1001 = vunpack.c.l.b16 %v327
      %v1002 = vunpack.c.h.b16 %v327
      %v1003 = vunpack.c.l.b16 %v328
      %v1004 = vunpack.c.h.b16 %v328
      %v1005 = vunpack.c.l.b16 %v329
      %v1006 = vunpack.c.h.b16 %v329
      %v1007 = vunpack.c.l.b16 %v330
      %v1008 = vunpack.c.h.b16 %v330
      %v1009 = vunpack.c.l.b16 %v331
      %v1010 = vunpack.c.h.b16 %v331
      %v1011 = vunpack.c.l.b16 %v332
      %v1012 = vunpack.c.h.b16 %v332
      %v1013 = vunpack.c.l.b16 %v333
      %v1014 = vunpack.c.h.b16 %v333
      %v1015 = vunpack.c.l.b16 %v334
      %v1016 = vunpack.c.h.b16 %v334
      %v1017 = vunpack.c.l.b16 %v335
      %v1018 = vunpack.c.h.b16 %v335
      %v1019 = vunpack.c.l.b16 %v336
      %v1020 = vunpack.c.h.b16 %v336
      %v1021 = vunpack.c.l.b16 %v337
      %v1022 = vunpack.c.h.b16 %v337
      %v1023 = vunpack.c.l.b16 %v338
      %v1024 = vunpack.c.h.b16 %v338
      %v1025 = vunpack.c.l.b16 %v339
      %v1026 = vunpack.c.h.b16 %v339
      %v1027 = vunpack.c.l.b16 %v340
      %v1028 = vunpack.c.h.b16 %v340
      %v1029 = vunpack.c.l.b16 %v341
      %v1030 = vunpack.c.h.b16 %v341
      %v1031 = vunpack.c.l.b16 %v342
      %v1032 = vunpack.c.h.b16 %v342
      %v1033 = vunpack.c.l.b16 %v343
      %v1034 = vunpack.c.h.b16 %v343
      %v1035 = vunpack.c.l.b16 %v344
      %v1036 = vunpack.c.h.b16 %v344
      %v1037 = vunpack.c.l.b16 %v345
      %v1038 = vunpack.c.h.b16 %v345
      %v1039 = vunpack.c.l.b16 %v346
      %v1040 = vunpack.c.h.b16 %v346
      %v1041 = vunpack.c.l.b16 %v347
      %v1042 = vunpack.c.h.b16 %v347
      %v1043 = vunpack.c.l.b16 %v348
      %v1044 = vunpack.c.h.b16 %v348
      %v1045 = vunpack.c.l.b16 %v349
      %v1046 = vunpack.c.h.b16 %v349
      %v1047 = vunpack.c.l.b16 %v350
      %v1048 = vunpack.c.h.b16 %v350
      %v1049 = vunpack.c.l.b16 %v351
      %v1050 = vunpack.c.h.b16 %v351
      %v1051 = vunpack.c.l.b16 %v352
      %v1052 = vunpack.c.h.b16 %v352
      %v1053 = vunpack.c.l.b16 %v353
      %v1054 = vunpack.c.h.b16 %v353
      %v1055 = vunpack.c.l.b16 %v354
      %v1056 = vunpack.c.h.b16 %v354
      %v1057 = vunpack.c.l.b16 %v355
      %v1058 = vunpack.c.h.b16 %v355
      %v1059 = vunpack.c.l.b16 %v356
      %v1060 = vunpack.c.h.b16 %v356
      %v1061 = vunpack.c.l.b16 %v357
      %v1062 = vunpack.c.h.b16 %v357
      %v1063 = vunpack.c.l.b16 %v358
      %v1064 = vunpack.c.h.b16 %v358
      %v1065 = vunpack.c.l.b16 %v359
      %v1066 = vunpack.c.h.b16 %v359
      %v1067 = vunpack.c.l.b16 %v360
      %v1068 = vunpack.c.h.b16 %v360
      %v1069 = vunpack.c.l.b16 %v361
      %v1070 = vunpack.c.h.b16 %v361
      %v1071 = vunpack.c.l.b16 %v362
      %v1072 = vunpack.c.h.b16 %v362
      %v1073 = vunpack.c.l.b16 %v363
      %v1074 = vunpack.c.h.b16 %v363
      %v1075 = vunpack.c.l.b16 %v364
      %v1076 = vunpack.c.h.b16 %v364
      %v1077 = vunpack.c.l.b16 %v365
      %v1078 = vunpack.c.h.b16 %v365
      %v1079 = vunpack.c.l.b16 %v366
      %v1080 = vunpack.c.h.b16 %v366
      %v1081 = vunpack.c.l.b16 %v367
      %v1082 = vunpack.c.h.b16 %v367
      %v1083 = vunpack.c.l.b16 %v368
      %v1084 = vunpack.c.h.b16 %v368
      %v1085 = vunpack.c.l.b16 %v369
      %v1086 = vunpack.c.h.b16 %v369
      %v1087 = vunpack.c.l.b16 %v370
      %v1088 = vunpack.c.h.b16 %v370
      %v1089 = vunpack.c.l.b16 %v371
      %v1090 = vunpack.c.h.b16 %v371
      %v1091 = vunpack.c.l.b16 %v372
      %v1092 = vunpack.c.h.b16 %v372
      %v1093 = vunpack.c.l.b16 %v373
      %v1094 = vunpack.c.h.b16 %v373
      %v1095 = vunpack.c.l.b16 %v374
      %v1096 = vunpack.c.h.b16 %v374
      %v1097 = vunpack.c.l.b16 %v375
      %v1098 = vunpack.c.h.b16 %v375
      %v1099 = vunpack.c.l.b16 %v376
      %v1100 = vunpack.c.h.b16 %v376
      %v1101 = vunpack.c.l.b16 %v377
      %v1102 = vunpack.c.h.b16 %v377
      %v1103 = vunpack.c.l.b16 %v378
      %v1104 = vunpack.c.h.b16 %v378
      %v1105 = vunpack.c.l.b16 %v379
      %v1106 = vunpack.c.h.b16 %v379
      %v1107 = vunpack.c.l.b16 %v380
      %v1108 = vunpack.c.h.b16 %v380
      %v1109 = vunpack.c.l.b16 %v381
      %v1110 = vunpack.c.h.b16 %v381
      %v1111 = vunpack.c.l.b16 %v382
      %v1112 = vunpack.c.h.b16 %v382
      %v1113 = vunpack.c.l.b16 %v383
      %v1114 = vunpack.c.h.b16 %v383
      %v1115 = vunpack.c.l.b16 %v384
      %v1116 = vunpack.c.h.b16 %v384
      %v1117 = vunpack.c.l.b16 %v385
      %v1118 = vunpack.c.h.b16 %v385
      %v1119 = vunpack.c.l.b16 %v386
      %v1120 = vunpack.c.h.b16 %v386
      %v1121 = vunpack.c.l.b16 %v387
      %v1122 = vunpack.c.h.b16 %v387
      %v1123 = vunpack.c.l.b16 %v388
      %v1124 = vunpack.c.h.b16 %v388
      %v1125 = vunpack.c.l.b16 %v389
      %v1126 = vunpack.c.h.b16 %v389
      %v1127 = vunpack.c.l.b16 %v390
      %v1128 = vunpack.c.h.b16 %v390
      %v1129 = vunpack.c.l.b16 %v391
      %v1130 = vunpack.c.h.b16 %v391
      %v1131 = vunpack.c.l.b16 %v392
      %v1132 = vunpack.c.h.b16 %v392
      %v1133 = vunpack.c.l.b16 %v393
      %v1134 = vunpack.c.h.b16 %v393
      %v1135 = vunpack.c.l.b16 %v394
      %v1136 = vunpack.c.h.b16 %v394
      %v1137 = vunpack.c.l.b16 %v395
      %v1138 = vunpack.c.h.b16 %v395
      %v1139 = vunpack.c.l.b16 %v396
      %v1140 = vunpack.c.h.b16 %v396
      %v1141 = vunpack.c.l.b16 %v397
      %v1142 = vunpack.c.h.b16 %v397
      %v1143 = vunpack.c.l.b16 %v398
      %v1144 = vunpack.c.h.b16 %v398
      %v1145 = vunpack.c.l.b16 %v399
      %v1146 = vunpack.c.h.b16 %v399
      %v1147 = vunpack.c.l.b16 %v400
      %v1148 = vunpack.c.h.b16 %v400
      %v1149 = vunpack.c.l.b16 %v401
      %v1150 = vunpack.c.h.b16 %v401
      %v1151 = vunpack.c.l.b16 %v402
      %v1152 = vunpack.c.h.b16 %v402
      %v1153 = vunpack.c.l.b16 %v403
      %v1154 = vunpack.c.h.b16 %v403
      %v1155 = vunpack.c.l.b16 %v404
      %v1156 = vunpack.c.h.b16 %v404
      %v1157 = vunpack.c.l.b16 %v405
      %v1158 = vunpack.c.h.b16 %v405
      %v1159 = vunpack.c.l.b16 %v406
      %v1160 = vunpack.c.h.b16 %v406
      %v1161 = vunpack.c.l.b16 %v407
      %v1162 = vunpack.c.h.b16 %v407
      %v1163 = vunpack.c.l.b16 %v408
      %v1164 = vunpack.c.h.b16 %v408
      %v1165 = vunpack.c.l.b16 %v409
      %v1166 = vunpack.c.h.b16 %v409
      %v1167 = vunpack.c.l.b16 %v410
      %v1168 = vunpack.c.h.b16 %v410
      %v1169 = vunpack.c.l.b16 %v411
      %v1170 = vunpack.c.h.b16 %v411
      %v1171 = vunpack.c.l.b16 %v412
      %v1172 = vunpack.c.h.b16 %v412
      %v1173 = vunpack.c.l.b16 %v413
      %v1174 = vunpack.c.h.b16 %v413
      %v1175 = vunpack.c.l.b16 %v414
      %v1176 = vunpack.c.h.b16 %v414
      %v1177 = vunpack.c.l.b16 %v415
      %v1178 = vunpack.c.h.b16 %v415
      %v1179 = vunpack.c.l.b16 %v416
      %v1180 = vunpack.c.h.b16 %v416
      %v1181 = vunpack.c.l.b16 %v417
      %v1182 = vunpack.c.h.b16 %v417
      %v1183 = vunpack.c.l.b16 %v418
      %v1184 = vunpack.c.h.b16 %v418
      %v1185 = vunpack.c.l.b16 %v419
      %v1186 = vunpack.c.h.b16 %v419
      %v1187 = vunpack.c.l.b16 %v420
      %v1188 = vunpack.c.h.b16 %v420
      %v1189 = vunpack.c.l.b16 %v421
      %v1190 = vunpack.c.h.b16 %v421
      %v1191 = vunpack.c.l.b16 %v422
      %v1192 = vunpack.c.h.b16 %v422
      %v1193 = vunpack.c.l.b16 %v423
      %v1194 = vunpack.c.h.b16 %v423
      %v1195 = vunpack.c.l.b16 %v424
      %v1196 = vunpack.c.h.b16 %v424
      %v1197 = vunpack.c.l.b16 %v425
      %v1198 = vunpack.c.h.b16 %v425
      %v1199 = vunpack.c.l.b16 %v426
      %v1200 = vunpack.c.h.b16 %v426
      %v1201 = vunpack.c.l.b16 %v427
      %v1202 = vunpack.c.h.b16 %v427
      %v1203 = vunpack.c.l.b16 %v428
      %v1204 = vunpack.c.h.b16 %v428
      %v1205 = vunpack.c.l.b16 %v429
      %v1206 = vunpack.c.h.b16 %v429
      %v1207 = vunpack.c.l.b16 %v430
      %v1208 = vunpack.c.h.b16 %v430
      %v1209 = vunpack.c.l.b16 %v431
      %v1210 = vunpack.c.h.b16 %v431
      %v1211 = vunpack.c.l.b16 %v432
      %v1212 = vunpack.c.h.b16 %v432
      %v1213 = vunpack.c.l.b16 %v433
      %v1214 = vunpack.c.h.b16 %v433
      %v1215 = vunpack.c.l.b16 %v434
      %v1216 = vunpack.c.h.b16 %v434
      %v1217 = vunpack.c.l.b16 %v435
      %v1218 = vunpack.c.h.b16 %v435
      %v1219 = vunpack.c.l.b16 %v436
      %v1220 = vunpack.c.h.b16 %v436
      %v1221 = vunpack.c.l.b16 %v437
      %v1222 = vunpack.c.h.b16 %v437
      %v1223 = vunpack.c.l.b16 %v438
      %v1224 = vunpack.c.h.b16 %v438
      %v1225 = vunpack.c.l.b16 %v439
      %v1226 = vunpack.c.h.b16 %v439
      %v1227 = vunpack.c.l.b16 %v440
      %v1228 = vunpack.c.h.b16 %v440
      %v1229 = vunpack.c.l.b16 %v441
      %v1230 = vunpack.c.h.b16 %v441
      %v1231 = vunpack.c.l.b16 %v442
      %v1232 = vunpack.c.h.b16 %v442
      %v1233 = vunpack.c.l.b16 %v443
      %v1234 = vunpack.c.h.b16 %v443
      %v1235 = vunpack.c.l.b16 %v444
      %v1236 = vunpack.c.h.b16 %v444
      %v1237 = vunpack.c.l.b16 %v445
      %v1238 = vunpack.c.h.b16 %v445
      %v1239 = vunpack.c.l.b16 %v446
      %v1240 = vunpack.c.h.b16 %v446
      %v1241 = vunpack.c.l.b16 %v447
      %v1242 = vunpack.c.h.b16 %v447
      %v1243 = vunpack.c.l.b16 %v448
      %v1244 = vunpack.c.h.b16 %v448
      %v1245 = vunpack.c.l.b16 %v449
      %v1246 = vunpack.c.h.b16 %v449
      %v1247 = vunpack.c.l.b16 %v450
      %v1248 = vunpack.c.h.b16 %v450
      %v1249 = vunpack.c.l.b16 %v451
      %v1250 = vunpack.c.h.b16 %v451
      %v1251 = vunpack.c.l.b16 %v452
      %v1252 = vunpack.c.h.b16 %v452
      %v1253 = vunpack.c.l.b16 %v453
      %v1254 = vunpack.c.h.b16 %v453
      %v1255 = vunpack.c.l.b16 %v454
      %v1256 = vunpack.c.h.b16 %v454
      %v1257 = vunpack.c.l.b16 %v455
      %v1258 = vunpack.c.h.b16 %v455
      %v1259 = vunpack.c.l.b16 %v456
      %v1260 = vunpack.c.h.b16 %v456
      %v1261 = vunpack.c.l.b16 %v457
      %v1262 = vunpack.c.h.b16 %v457
      %v1263 = vunpack.c.l.b16 %v458
      %v1264 = vunpack.c.h.b16 %v458
      %v1265 = vunpack.c.l.b16 %v459
      %v1266 = vunpack.c.h.b16 %v459
      %v1267 = vunpack.c.l.b16 %v460
      %v1268 = vunpack.c.h.b16 %v460
      %v1269 = vunpack.c.l.b16 %v461
      %v1270 = vunpack.c.h.b16 %v461
      %v1271 = vunpack.c.l.b16 %v462
      %v1272 = vunpack.c.h.b16 %v462
      %v1273 = vunpack.c.l.b16 %v463
      %v1274 = vunpack.c.h.b16 %v463
      %v1275 = vunpack.c.l.b16 %v464
      %v1276 = vunpack.c.h.b16 %v464
      %v1277 = vunpack.c.l.b16 %v465
      %v1278 = vunpack.c.h.b16 %v465
      %v1279 = vunpack.c.l.b16 %v466
      %v1280 = vunpack.c.h.b16 %v466
      %v1281 = vunpack.c.l.b16 %v467
      %v1282 = vunpack.c.h.b16 %v467
      %v1283 = vunpack.c.l.b16 %v468
      %v1284 = vunpack.c.h.b16 %v468
      %v1285 = vunpack.c.l.b16 %v469
      %v1286 = vunpack.c.h.b16 %v469
      %v1287 = vunpack.c.l.b16 %v470
      %v1288 = vunpack.c.h.b16 %v470
      %v1289 = vunpack.c.l.b16 %v471
      %v1290 = vunpack.c.h.b16 %v471
      %v1291 = vunpack.c.l.b16 %v472
      %v1292 = vunpack.c.h.b16 %v472
      %v1293 = vunpack.c.l.b16 %v473
      %v1294 = vunpack.c.h.b16 %v473
      %v1295 = vunpack.c.l.b16 %v474
      %v1296 = vunpack.c.h.b16 %v474
      %v1297 = vunpack.c.l.b16 %v475
      %v1298 = vunpack.c.h.b16 %v475
      %v1299 = vunpack.c.l.b16 %v476
      %v1300 = vunpack.c.h.b16 %v476
      %v1301 = vunpack.c.l.b16 %v477
      %v1302 = vunpack.c.h.b16 %v477
      %v1303 = vunpack.c.l.b16 %v478
      %v1304 = vunpack.c.h.b16 %v478
      %v1305 = vunpack.c.l.b16 %v479
      %v1306 = vunpack.c.h.b16 %v479
      %v1307 = vunpack.c.l.b16 %v480
      %v1308 = vunpack.c.h.b16 %v480
      %v1309 = vunpack.c.l.b16 %v481
      %v1310 = vunpack.c.h.b16 %v481
      %v1311 = vunpack.c.l.b16 %v482
      %v1312 = vunpack.c.h.b16 %v482
      %v1313 = vunpack.c.l.b16 %v483
      %v1314 = vunpack.c.h.b16 %v483
      %v1315 = vunpack.c.l.b16 %v484
      %v1316 = vunpack.c.h.b16 %v484
      %v1317 = vunpack.c.l.b16 %v485
      %v1318 = vunpack.c.h.b16 %v485
      %v1319 = vunpack.c.l.b16 %v486
      %v1320 = vunpack.c.h.b16 %v486
      %v1321 = vunpack.c.l.b16 %v487
      %v1322 = vunpack.c.h.b16 %v487
      %v1323 = vunpack.c.l.b16 %v488
      %v1324 = vunpack.c.h.b16 %v488
      %v1325 = vunpack.c.l.b16 %v489
      %v1326 = vunpack.c.h.b16 %v489
      %v1327 = vunpack.c.l.b16 %v490
      %v1328 = vunpack.c.h.b16 %v490
      %v1329 = vunpack.c.l.b16 %v491
      %v1330 = vunpack.c.h.b16 %v491
      %v1331 = vunpack.c.l.b16 %v492
      %v1332 = vunpack.c.h.b16 %v492
      %v1333 = vunpack.c.l.b16 %v493
      %v1334 = vunpack.c.h.b16 %v493
      %v1335 = vunpack.c.l.b16 %v494
      %v1336 = vunpack.c.h.b16 %v494
      %v1337 = vunpack.c.l.b16 %v495
      %v1338 = vunpack.c.h.b16 %v495
      %v1339 = vunpack.c.l.b16 %v496
      %v1340 = vunpack.c.h.b16 %v496
      %v1341 = vunpack.c.l.b16 %v497
      %v1342 = vunpack.c.h.b16 %v497
      %v1343 = vunpack.c.l.b16 %v498
      %v1344 = vunpack.c.h.b16 %v498
      %v1345 = vunpack.c.l.b16 %v499
      %v1346 = vunpack.c.h.b16 %v499
      %v1347 = vunpack.c.l.b16 %v500
      %v1348 = vunpack.c.h.b16 %v500
      %v1349 = vunpack.c.l.b16 %v501
      %v1350 = vunpack.c.h.b16 %v501
      %v1351 = vunpack.c.l.b16 %v502
      %v1352 = vunpack.c.h.b16 %v502
      %v1353 = vunpack.c.l.b16 %v503
      %v1354 = vunpack.c.h.b16 %v503
      %v1355 = vunpack.c.l.b16 %v504
      %v1356 = vunpack.c.h.b16 %v504
      %v1357 = vunpack.c.l.b16 %v505
      %v1358 = vunpack.c.h.b16 %v505
      %v1359 = vunpack.c.l.b16 %v506
      %v1360 = vunpack.c.h.b16 %v506
      %v1361 = vunpack.c.l.b16 %v507
      %v1362 = vunpack.c.h.b16 %v507
      %v1363 = vunpack.c.l.b16 %v508
      %v1364 = vunpack.c.h.b16 %v508
      %v1365 = vunpack.c.l.b16 %v509
      %v1366 = vunpack.c.h.b16 %v509
      %v1367 = vunpack.c.l.b16 %v510
      %v1368 = vunpack.c.h.b16 %v510
      %v1369 = vunpack.c.l.b16 %v511
      %v1370 = vunpack.c.h.b16 %v511
      %v1371 = vunpack.c.l.b16 %v512
      %v1372 = vunpack.c.h.b16 %v512
      %v1373 = vunpack.c.l.b16 %v513
      %v1374 = vunpack.c.h.b16 %v513
      %v1375 = vunpack.c.l.b16 %v514
      %v1376 = vunpack.c.h.b16 %v514
      %v1377 = vunpack.c.l.b16 %v515
      %v1378 = vunpack.c.h.b16 %v515
      %v1379 = vunpack.c.l.b16 %v516
      %v1380 = vunpack.c.h.b16 %v516
      %v1381 = vunpack.c.l.b16 %v517
      %v1382 = vunpack.c.h.b16 %v517
      %v1383 = vunpack.c.l.b16 %v518
      %v1384 = vunpack.c.h.b16 %v518
      %v1385 = vunpack.c.l.b16 %v519
      %v1386 = vunpack.c.h.b16 %v519
      %v1387 = vunpack.c.l.b16 %v520
      %v1388 = vunpack.c.h.b16 %v520
      %v1389 = vunpack.c.l.b16 %v521
      %v1390 = vunpack.c.h.b16 %v521
      %v1391 = vunpack.c.l.b16 %v522
      %v1392 = vunpack.c.h.b16 %v522
      %v1393 = vunpack.c.l.b16 %v523
      %v1394 = vunpack.c.h.b16 %v523
      %v1395 = vunpack.c.l.b16 %v524
      %v1396 = vunpack.c.h.b16 %v524
      %v1397 = vunpack.c.l.b16 %v525
      %v1398 = vunpack.c.h.b16 %v525
      %v1399 = vunpack.c.l.b16 %v526
      %v1400 = vunpack.c.h.b16 %v526
      %v1401 = vunpack.c.l.b16 %v527
      %v1402 = vunpack.c.h.b16 %v527
      %v1403 = vunpack.c.l.b16 %v528
      %v1404 = vunpack.c.h.b16 %v528
      %v1405 = vunpack.c.l.b16 %v529
      %v1406 = vunpack.c.h.b16 %v529
      %v1407 = vunpack.c.l.b16 %v530
      %v1408 = vunpack.c.h.b16 %v530
      %v1409 = vunpack.c.l.b16 %v531
      %v1410 = vunpack.c.h.b16 %v531
      %v1411 = vunpack.c.l.b16 %v532
      %v1412 = vunpack.c.h.b16 %v532
      %v1413 = vunpack.c.l.b16 %v533
      %v1414 = vunpack.c.h.b16 %v533
      %v1415 = vunpack.c.l.b16 %v534
      %v1416 = vunpack.c.h.b16 %v534
      %v1417 = vunpack.c.l.b16 %v535
      %v1418 = vunpack.c.h.b16 %v535
      %v1419 = vunpack.c.l.b16 %v536
      %v1420 = vunpack.c.h.b16 %v536
      %v1421 = vunpack.c.l.b16 %v537
      %v1422 = vunpack.c.h.b16 %v537
      %v1423 = vpack.c.b16 %v853, %v847
      %v1424 = vpack.c.b16 %v854, %v848
      %v1425 = vpack.c.b16 %v855, %v849
      %v1426 = vpack.c.b16 %v856, %v850
      %v1427 = vpack.c.b16 %v857, %v851
      %v1428 = vpack.c.b16 %v858, %v852
      %v1429 = vpack.c.b16 %v865, %v859
      %v1430 = vpack.c.b16 %v866, %v860
      %v1431 = vpack.c.b16 %v867, %v861
      %v1432 = vpack.c.b16 %v868, %v862
      %v1433 = vpack.c.b16 %v869, %v863
      %v1434 = vpack.c.b16 %v870, %v864
      %v1435 = vpack.c.b16 %v877, %v871
      %v1436 = vpack.c.b16 %v878, %v872
      %v1437 = vpack.c.b16 %v879, %v873
      %v1438 = vpack.c.b16 %v880, %v874
      %v1439 = vpack.c.b16 %v881, %v875
      %v1440 = vpack.c.b16 %v882, %v876
      %v1441 = vpack.c.b16 %v889, %v883
      %v1442 = vpack.c.b16 %v890, %v884
      %v1443 = vpack.c.b16 %v891, %v885
      %v1444 = vpack.c.b16 %v892, %v886
      %v1445 = vpack.c.b16 %v893, %v887
      %v1446 = vpack.c.b16 %v894, %v888
      %v1447 = vpack.c.b16 %v901, %v895
      %v1448 = vpack.c.b16 %v902, %v896
      %v1449 = vpack.c.b16 %v903, %v897
      %v1450 = vpack.c.b16 %v904, %v898
      %v1451 = vpack.c.b16 %v905, %v899
      %v1452 = vpack.c.b16 %v906, %v900
      %v1453 = vpack.c.b16 %v913, %v907
      %v1454 = vpack.c.b16 %v914, %v908
      %v1455 = vpack.c.b16 %v915, %v909
      %v1456 = vpack.c.b16 %v916, %v910
      %v1457 = vpack.c.b16 %v917, %v911
      %v1458 = vpack.c.b16 %v918, %v912
      %v1459 = vpack.c.b16 %v925, %v919
      %v1460 = vpack.c.b16 %v926, %v920
      %v1461 = vpack.c.b16 %v927, %v921
      %v1462 = vpack.c.b16 %v928, %v922
      %v1463 = vpack.c.b16 %v929, %v923
      %v1464 = vpack.c.b16 %v930, %v924
      %v1465 = vpack.c.b16 %v937, %v931
      %v1466 = vpack.c.b16 %v938, %v932
      %v1467 = vpack.c.b16 %v939, %v933
      %v1468 = vpack.c.b16 %v940, %v934
      %v1469 = vpack.c.b16 %v941, %v935
      %v1470 = vpack.c.b16 %v942, %v936
      %v1471 = vpack.c.b16 %v949, %v943
      %v1472 = vpack.c.b16 %v950, %v944
      %v1473 = vpack.c.b16 %v951, %v945
      %v1474 = vpack.c.b16 %v952, %v946
      %v1475 = vpack.c.b16 %v953, %v947
      %v1476 = vpack.c.b16 %v954, %v948
      %v1477 = vpack.c.b16 %v961, %v955
      %v1478 = vpack.c.b16 %v962, %v956
      %v1479 = vpack.c.b16 %v963, %v957
      %v1480 = vpack.c.b16 %v964, %v958
      %v1481 = vpack.c.b16 %v965, %v959
      %v1482 = vpack.c.b16 %v966, %v960
      %v1483 = vpack.c.b16 %v973, %v967
      %v1484 = vpack.c.b16 %v974, %v968
      %v1485 = vpack.c.b16 %v975, %v969
      %v1486 = vpack.c.b16 %v976, %v970
      %v1487 = vpack.c.b16 %v977, %v971
      %v1488 = vpack.c.b16 %v978, %v972
      %v1489 = vpack.c.b16 %v985, %v979
      %v1490 = vpack.c.b16 %v986, %v980
      %v1491 = vpack.c.b16 %v987, %v981
      %v1492 = vpack.c.b16 %v988, %v982
      %v1493 = vpack.c.b16 %v989, %v983
      %v1494 = vpack.c.b16 %v990, %v984
      %v1495 = vpack.c.b16 %v997, %v991
      %v1496 = vpack.c.b16 %v998, %v992
      %v1497 = vpack.c.b16 %v999, %v993
      %v1498 = vpack.c.b16 %v1000, %v994
      %v1499 = vpack.c.b16 %v1001, %v995
      %v1500 = vpack.c.b16 %v1002, %v996
      %v1501 = vpack.c.b16 %v1009, %v1003
      %v1502 = vpack.c.b16 %v1010, %v1004
      %v1503 = vpack.c.b16 %v1011, %v1005
      %v1504 = vpack.c.b16 %v1012, %v1006
      %v1505 = vpack.c.b16 %v1013, %v1007
      %v1506 = vpack.c.b16 %v1014, %v1008
      %v1507 = vpack.c.b16 %v1021, %v1015
      %v1508 = vpack.c.b16 %v1022, %v1016
      %v1509 = vpack.c.b16 %v1023, %v1017
      %v1510 = vpack.c.b16 %v1024, %v1018
      %v1511 = vpack.c.b16 %v1025, %v1019
      %v1512 = vpack.c.b16 %v1026, %v1020
      %v1513 = vpack.c.b16 %v1033, %v1027
      %v1514 = vpack.c.b16 %v1034, %v1028
      %v1515 = vpack.c.b16 %v1035, %v1029
      %v1516 = vpack.c.b16 %v1036, %v1030
      %v1517 = vpack.c.b16 %v1037, %v1031
      %v1518 = vpack.c.b16 %v1038, %v1032
      %v1519 = vpack.c.b16 %v1045, %v1039
      %v1520 = vpack.c.b16 %v1046, %v1040
      %v1521 = vpack.c.b16 %v1047, %v1041
      %v1522 = vpack.c.b16 %v1048, %v1042
      %v1523 = vpack.c.b16 %v1049, %v1043
      %v1524 = vpack.c.b16 %v1050, %v1044
      %v1525 = vpack.c.b16 %v1057, %v1051
      %v1526 = vpack.c.b16 %v1058, %v1052
      %v1527 = vpack.c.b16 %v1059, %v1053
      %v1528 = vpack.c.b16 %v1060, %v1054
      %v1529 = vpack.c.b16 %v1061, %v1055
      %v1530 = vpack.c.b16 %v1062, %v1056
      %v1531 = vpack.c.b16 %v1069, %v1063
      %v1532 = vpack.c.b16 %v1070, %v1064
      %v1533 = vpack.c.b16 %v1071, %v1065
      %v1534 = vpack.c.b16 %v1072, %v1066
      %v1535 = vpack.c.b16 %v1073, %v1067
      %v1536 = vpack.c.b16 %v1074, %v1068
      %v1537 = vpack.c.b16 %v1081, %v1075
      %v1538 = vpack.c.b16 %v1082, %v1076
      %v1539 = vpack.c.b16 %v1083, %v1077
      %v1540 = vpack.c.b16 %v1084, %v1078
      %v1541 = vpack.c.b16 %v1085, %v1079
      %v1542 = vpack.c.b16 %v1086, %v1080
      %v1543 = vpack.c.b16 %v1093, %v1087
      %v1544 = vpack.c.b16 %v1094, %v1088
      %v1545 = vpack.c.b16 %v1095, %v1089
      %v1546 = vpack.c.b16 %v1096, %v1090
      %v1547 = vpack.c.b16 %v1097, %v1091
      %v1548 = vpack.c.b16 %v1098, %v1092
      %v1549 = vpack.c.b16 %v1105, %v1099
      %v1550 = vpack.c.b16 %v1106, %v1100
      %v1551 = vpack.c.b16 %v1107, %v1101
      %v1552 = vpack.c.b16 %v1108, %v1102
      %v1553 = vpack.c.b16 %v1109, %v1103
      %v1554 = vpack.c.b16 %v1110, %v1104
      %v1555 = vpack.c.b16 %v1117, %v1111
      %v1556 = vpack.c.b16 %v1118, %v1112
      %v1557 = vpack.c.b16 %v1119, %v1113
      %v1558 = vpack.c.b16 %v1120, %v1114
      %v1559 = vpack.c.b16 %v1121, %v1115
      %v1560 = vpack.c.b16 %v1122, %v1116
      %v1561 = vpack.c.b16 %v1129, %v1123
      %v1562 = vpack.c.b16 %v1130, %v1124
      %v1563 = vpack.c.b16 %v1131, %v1125
      %v1564 = vpack.c.b16 %v1132, %v1126
      %v1565 = vpack.c.b16 %v1133, %v1127
      %v1566 = vpack.c.b16 %v1134, %v1128
      %v1567 = vpack.c.b16 %v1141, %v1135
      %v1568 = vpack.c.b16 %v1142, %v1136
      %v1569 = vpack.c.b16 %v1143, %v1137
      %v1570 = vpack.c.b16 %v1144, %v1138
      %v1571 = vpack.c.b16 %v1145, %v1139
      %v1572 = vpack.c.b16 %v1146, %v1140
      %v1573 = vpack.c.b16 %v1153, %v1147
      %v1574 = vpack.c.b16 %v1154, %v1148
      %v1575 = vpack.c.b16 %v1155, %v1149
      %v1576 = vpack.c.b16 %v1156, %v1150
      %v1577 = vpack.c.b16 %v1157, %v1151
      %v1578 = vpack.c.b16 %v1158, %v1152
      %v1579 = vpack.c.b16 %v1165, %v1159
      %v1580 = vpack.c.b16 %v1166, %v1160
      %v1581 = vpack.c.b16 %v1167, %v1161
      %v1582 = vpack.c.b16 %v1168, %v1162
      %v1583 = vpack.c.b16 %v1169, %v1163
      %v1584 = vpack.c.b16 %v1170, %v1164
      %v1585 = vpack.c.b16 %v1177, %v1171
      %v1586 = vpack.c.b16 %v1178, %v1172
      %v1587 = vpack.c.b16 %v1179, %v1173
      %v1588 = vpack.c.b16 %v1180, %v1174
      %v1589 = vpack.c.b16 %v1181, %v1175
      %v1590 = vpack.c.b16 %v1182, %v1176
      %v1591 = vpack.c.b16 %v1189, %v1183
      %v1592 = vpack.c.b16 %v1190, %v1184
      %v1593 = vpack.c.b16 %v1191, %v1185
      %v1594 = vpack.c.b16 %v1192, %v1186
      %v1595 = vpack.c.b16 %v1193, %v1187
      %v1596 = vpack.c.b16 %v1194, %v1188
      %v1597 = vpack.c.b16 %v1201, %v1195
      %v1598 = vpack.c.b16 %v1202, %v1196
      %v1599 = vpack.c.b16 %v1203, %v1197
      %v1600 = vpack.c.b16 %v1204, %v1198
      %v1601 = vpack.c.b16 %v1205, %v1199
      %v1602 = vpack.c.b16 %v1206, %v1200
      %v1603 = vpack.c.b16 %v1213, %v1207
      %v1604 = vpack.c.b16 %v1214, %v1208
      %v1605 = vpack.c.b16 %v1215, %v1209
      %v1606 = vpack.c.b16 %v1216, %v1210
      %v1607 = vpack.c.b16 %v1217, %v1211
      %v1608 = vpack.c.b16 %v1218, %v1212
      %v1609 = vpack.c.b16 %v1225, %v1219
      %v1610 = vpack.c.b16 %v1226, %v1220
      %v1611 = vpack.c.b16 %v1227, %v1221
      %v1612 = vpack.c.b16 %v1228, %v1222
      %v1613 = vpack.c.b16 %v1229, %v1223
      %v1614 = vpack.c.b16 %v1230, %v1224
      %v1615 = vpack.c.b16 %v1237, %v1231
      %v1616 = vpack.c.b16 %v1238, %v1232
      %v1617 = vpack.c.b16 %v1239, %v1233
      %v1618 = vpack.c.b16 %v1240, %v1234
      %v1619 = vpack.c.b16 %v1241, %v1235
      %v1620 = vpack.c.b16 %v1242, %v1236
      %v1621 = vpack.c.b16 %v1249, %v1243
      %v1622 = vpack.c.b16 %v1250, %v1244
      %v1623 = vpack.c.b16 %v1251, %v1245
      %v1624 = vpack.c.b16 %v1252, %v1246
      %v1625 = vpack.c.b16 %v1253, %v1247
      %v1626 = vpack.c.b16 %v1254, %v1248
      %v1627 = vpack.c.b16 %v1261, %v1255
      %v1628 = vpack.c.b16 %v1262, %v1256
      %v1629 = vpack.c.b16 %v1263, %v1257
      %v1630 = vpack.c.b16 %v1264, %v1258
      %v1631 = vpack.c.b16 %v1265, %v1259
      %v1632 = vpack.c.b16 %v1266, %v1260
      %v1633 = vpack.c.b16 %v1273, %v1267
      %v1634 = vpack.c.b16 %v1274, %v1268
      %v1635 = vpack.c.b16 %v1275, %v1269
      %v1636 = vpack.c.b16 %v1276, %v1270
      %v1637 = vpack.c.b16 %v1277, %v1271
      %v1638 = vpack.c.b16 %v1278, %v1272
      %v1639 = vpack.c.b16 %v1285, %v1279
      %v1640 = vpack.c.b16 %v1286, %v1280
      %v1641 = vpack.c.b16 %v1287, %v1281
      %v1642 = vpack.c.b16 %v1288, %v1282
      %v1643 = vpack.c.b16 %v1289, %v1283
      %v1644 = vpack.c.b16 %v1290, %v1284
      %v1645 = vpack.c.b16 %v1297, %v1291
      %v1646 = vpack.c.b16 %v1298, %v1292
      %v1647 = vpack.c.b16 %v1299, %v1293
      %v1648 = vpack.c.b16 %v1300, %v1294
      %v1649 = vpack.c.b16 %v1301, %v1295
      %v1650 = vpack.c.b16 %v1302, %v1296
      %v1651 = vpack.c.b16 %v1309, %v1303
      %v1652 = vpack.c.b16 %v1310, %v1304
      %v1653 = vpack.c.b16 %v1311, %v1305
      %v1654 = vpack.c.b16 %v1312, %v1306
      %v1655 = vpack.c.b16 %v1313, %v1307
      %v1656 = vpack.c.b16 %v1314, %v1308
      %v1657 = vpack.c.b16 %v1321, %v1315
      %v1658 = vpack.c.b16 %v1322, %v1316
      %v1659 = vpack.c.b16 %v1323, %v1317
      %v1660 = vpack.c.b16 %v1324, %v1318
      %v1661 = vpack.c.b16 %v1325, %v1319
      %v1662 = vpack.c.b16 %v1326, %v1320
      %v1663 = vpack.c.b16 %v1333, %v1327
      %v1664 = vpack.c.b16 %v1334, %v1328
      %v1665 = vpack.c.b16 %v1335, %v1329
      %v1666 = vpack.c.b16 %v1336, %v1330
      %v1667 = vpack.c.b16 %v1337, %v1331
      %v1668 = vpack.c.b16 %v1338, %v1332
      %v1669 = vpack.c.b16 %v1345, %v1339
      %v1670 = vpack.c.b16 %v1346, %v1340
      %v1671 = vpack.c.b16 %v1347, %v1341
      %v1672 = vpack.c.b16 %v1348, %v1342
      %v1673 = vpack.c.b16 %v1349, %v1343
      %v1674 = vpack.c.b16 %v1350, %v1344
      %v1675 = vpack.c.b16 %v1357, %v1351
      %v1676 = vpack.c.b16 %v1358, %v1352
      %v1677 = vpack.c.b16 %v1359, %v1353
      %v1678 = vpack.c.b16 %v1360, %v1354
      %v1679 = vpack.c.b16 %v1361, %v1355
      %v1680 = vpack.c.b16 %v1362, %v1356
      %v1681 = vpack.c.b16 %v1369, %v1363
      %v1682 = vpack.c.b16 %v1370, %v1364
      %v1683 = vpack.c.b16 %v1371, %v1365
      %v1684 = vpack.c.b16 %v1372, %v1366
      %v1685 = vpack.c.b16 %v1373, %v1367
      %v1686 = vpack.c.b16 %v1374, %v1368
      %v1687 = vpack.c.b16 %v1381, %v1375
      %v1688 = vpack.c.b16 %v1382, %v1376
      %v1689 = vpack.c.b16 %v1383, %v1377
      %v1690 = vpack.c.b16 %v1384, %v1378
      %v1691 = vpack.c.b16 %v1385, %v1379
      %v1692 = vpack.c.b16 %v1386, %v1380
      %v1693 = vpack.c.b16 %v1393, %v1387
      %v1694 = vpack.c.b16 %v1394, %v1388
      %v1695 = vpack.c.b16 %v1395, %v1389
      %v1696 = vpack.c.b16 %v1396, %v1390
      %v1697 = vpack.c.b16 %v1397, %v1391
      %v1698 = vpack.c.b16 %v1398, %v1392
      %v1699 = vpack.c.b16 %v1405, %v1399
      %v1700 = vpack.c.b16 %v1406, %v1400
      %v1701 = vpack.c.b16 %v1407, %v1401
      %v1702 = vpack.c.b16 %v1408, %v1402
      %v1703 = vpack.c.b16 %v1409, %v1403
      %v1704 = vpack.c.b16 %v1410, %v1404
      %v1705 = vpack.c.b16 %v1417, %v1411
      %v1706 = vpack.c.b16 %v1418, %v1412
      %v1707 = vpack.c.b16 %v1419, %v1413
      %v1708 = vpack.c.b16 %v1420, %v1414
      %v1709 = vpack.c.b16 %v1421, %v1415
      %v1710 = vpack.c.b16 %v1422, %v1416
      %1999 = vmatprep.subr.bf16.mxu0 %v1424
      %2000 = vmatpush1.bf16.msra.mxu0 %v1423
      %2001 = vmatprep.subr.bf16.mxu0 %v1430
      %2002 = vmatpush1.bf16.msra.mxu0 %v1429
      %2003 = vmatprep.subr.bf16.mxu0 %v1436
      %2004 = vmatpush1.bf16.msra.mxu0 %v1435
      %2005 = vmatprep.subr.bf16.mxu0 %v1442
      %2006 = vmatpush1.bf16.msra.mxu0 %v1441
      %2007 = vmatprep.subr.bf16.mxu0 %v1448
      %2008 = vmatpush1.bf16.msra.mxu0 %v1447
      %2009 = vmatprep.subr.bf16.mxu0 %v1454
      %2010 = vmatpush1.bf16.msra.mxu0 %v1453
      %2011 = vmatprep.subr.bf16.mxu0 %v1460
      %2012 = vmatpush1.bf16.msra.mxu0 %v1459
      %2013 = vmatprep.subr.bf16.mxu0 %v1466
      %2014 = vmatpush1.bf16.msra.mxu0 %v1465
      %2015 = vmatprep.subr.bf16.mxu0 %v1472
      %2016 = vmatpush1.bf16.msra.mxu0 %v1471
      %2017 = vmatprep.subr.bf16.mxu0 %v1478
      %2018 = vmatpush1.bf16.msra.mxu0 %v1477
      %2019 = vmatprep.subr.bf16.mxu0 %v1484
      %2020 = vmatpush1.bf16.msra.mxu0 %v1483
      %2021 = vmatprep.subr.bf16.mxu0 %v1490
      %2022 = vmatpush1.bf16.msra.mxu0 %v1489
      %2023 = vmatprep.subr.bf16.mxu0 %v1496
      %2024 = vmatpush1.bf16.msra.mxu0 %v1495
      %2025 = vmatprep.subr.bf16.mxu0 %v1502
      %2026 = vmatpush1.bf16.msra.mxu0 %v1501
      %2027 = vmatprep.subr.bf16.mxu0 %v1508
      %2028 = vmatpush1.bf16.msra.mxu0 %v1507
      %2029 = vmatprep.subr.bf16.mxu0 %v1514
      %2030 = vmatpush1.bf16.msra.mxu0 %v1513
      %2031 = vmatprep.mubr.bf16.mxu0 %v548
      %2032 = vmatmul.mubr.bf16.gmra.mrb[0].mxu0 %v547
      %v2033 = vpop.f32.mrb[0].mxu0
      %v2034 = vadd.f32 0.0, %v2033
      %v2035 = vpop.f32.mrb[0].mxu0
      %v2036 = vadd.f32 0.0, %v2035
      %v2037 = vpop.f32.mrb[0].mxu0
      %v2038 = vpop.f32.mrb[0].mxu0
      %2039 = vdwg.mxu0
      %2040 = vmatprep.subr.bf16.mxu0 %v1520
      %2041 = vmatpush1.bf16.msra.mxu0 %v1519
      %2042 = vmatprep.subr.bf16.mxu0 %v1526
      %2043 = vmatpush1.bf16.msra.mxu0 %v1525
      %2044 = vmatprep.subr.bf16.mxu0 %v1532
      %2045 = vmatpush1.bf16.msra.mxu0 %v1531
      %2046 = vmatprep.subr.bf16.mxu0 %v1538
      %2047 = vmatpush1.bf16.msra.mxu0 %v1537
      %2048 = vmatprep.subr.bf16.mxu0 %v1544
      %2049 = vmatpush1.bf16.msra.mxu0 %v1543
      %2050 = vmatprep.subr.bf16.mxu0 %v1550
      %2051 = vmatpush1.bf16.msra.mxu0 %v1549
      %2052 = vmatprep.subr.bf16.mxu0 %v1556
      %2053 = vmatpush1.bf16.msra.mxu0 %v1555
      %2054 = vmatprep.subr.bf16.mxu0 %v1562
      %2055 = vmatpush1.bf16.msra.mxu0 %v1561
      %2056 = vmatprep.subr.bf16.mxu0 %v1568
      %2057 = vmatpush1.bf16.msra.mxu0 %v1567
      %2058 = vmatprep.subr.bf16.mxu0 %v1574
      %2059 = vmatpush1.bf16.msra.mxu0 %v1573
      %2060 = vmatprep.subr.bf16.mxu0 %v1580
      %2061 = vmatpush1.bf16.msra.mxu0 %v1579
      %2062 = vmatprep.subr.bf16.mxu0 %v1586
      %2063 = vmatpush1.bf16.msra.mxu0 %v1585
      %2064 = vmatprep.subr.bf16.mxu0 %v1592
      %2065 = vmatpush1.bf16.msra.mxu0 %v1591
      %2066 = vmatprep.subr.bf16.mxu0 %v1598
      %2067 = vmatpush1.bf16.msra.mxu0 %v1597
      %2068 = vmatprep.subr.bf16.mxu0 %v1604
      %2069 = vmatpush1.bf16.msra.mxu0 %v1603
      %2070 = vmatprep.subr.bf16.mxu0 %v1610
      %2071 = vmatpush1.bf16.msra.mxu0 %v1609
      %2072 = vmatprep.mubr.bf16.mxu0 %v550
      %2073 = vmatmul.mubr.bf16.gmra.mrb[0].mxu0 %v549
      %v2074 = vpop.f32.mrb[0].mxu0
      %v2075 = vadd.f32 %v2034, %v2074
      %v2076 = vpop.f32.mrb[0].mxu0
      %v2077 = vadd.f32 %v2036, %v2076
      %v2078 = vpop.f32.mrb[0].mxu0
      %v2079 = vpop.f32.mrb[0].mxu0
      %2080 = vdwg.mxu0
      %2081 = vmatprep.subr.bf16.mxu0 %v1616
      %2082 = vmatpush1.bf16.msra.mxu0 %v1615
      %2083 = vmatprep.subr.bf16.mxu0 %v1622
      %2084 = vmatpush1.bf16.msra.mxu0 %v1621
      %2085 = vmatprep.subr.bf16.mxu0 %v1628
      %2086 = vmatpush1.bf16.msra.mxu0 %v1627
      %2087 = vmatprep.subr.bf16.mxu0 %v1634
      %2088 = vmatpush1.bf16.msra.mxu0 %v1633
      %2089 = vmatprep.subr.bf16.mxu0 %v1640
      %2090 = vmatpush1.bf16.msra.mxu0 %v1639
      %2091 = vmatprep.subr.bf16.mxu0 %v1646
      %2092 = vmatpush1.bf16.msra.mxu0 %v1645
      %2093 = vmatprep.subr.bf16.mxu0 %v1652
      %2094 = vmatpush1.bf16.msra.mxu0 %v1651
      %2095 = vmatprep.subr.bf16.mxu0 %v1658
      %2096 = vmatpush1.bf16.msra.mxu0 %v1657
      %2097 = vmatprep.subr.bf16.mxu0 %v1664
      %2098 = vmatpush1.bf16.msra.mxu0 %v1663
      %2099 = vmatprep.subr.bf16.mxu0 %v1670
      %2100 = vmatpush1.bf16.msra.mxu0 %v1669
      %2101 = vmatprep.subr.bf16.mxu0 %v1676
      %2102 = vmatpush1.bf16.msra.mxu0 %v1675
      %2103 = vmatprep.subr.bf16.mxu0 %v1682
      %2104 = vmatpush1.bf16.msra.mxu0 %v1681
      %2105 = vmatprep.subr.bf16.mxu0 %v1688
      %2106 = vmatpush1.bf16.msra.mxu0 %v1687
      %2107 = vmatprep.subr.bf16.mxu0 %v1694
      %2108 = vmatpush1.bf16.msra.mxu0 %v1693
      %2109 = vmatprep.subr.bf16.mxu0 %v1700
      %2110 = vmatpush1.bf16.msra.mxu0 %v1699
      %2111 = vmatprep.subr.bf16.mxu0 %v1706
      %2112 = vmatpush1.bf16.msra.mxu0 %v1705
      %2113 = vmatprep.mubr.bf16.mxu0 %v552
      %2114 = vmatmul.mubr.bf16.gmra.mrb[0].mxu0 %v551
      %v2115 = vpop.f32.mrb[0].mxu0
      %v2116 = vadd.f32 %v2075, %v2115
      %v2117 = vpop.f32.mrb[0].mxu0
      %v2118 = vadd.f32 %v2077, %v2117
      %v2119 = vpop.f32.mrb[0].mxu0
      %v2120 = vpop.f32.mrb[0].mxu0
      %2121 = vdwg.mxu0
      %2122 = vmatprep.subr.bf16.mxu0 %v1426
      %2123 = vmatpush1.bf16.msra.mxu0 %v1425
      %2124 = vmatprep.subr.bf16.mxu0 %v1432
      %2125 = vmatpush1.bf16.msra.mxu0 %v1431
      %2126 = vmatprep.subr.bf16.mxu0 %v1438
      %2127 = vmatpush1.bf16.msra.mxu0 %v1437
      %2128 = vmatprep.subr.bf16.mxu0 %v1444
      %2129 = vmatpush1.bf16.msra.mxu0 %v1443
      %2130 = vmatprep.subr.bf16.mxu0 %v1450
      %2131 = vmatpush1.bf16.msra.mxu0 %v1449
      %2132 = vmatprep.subr.bf16.mxu0 %v1456
      %2133 = vmatpush1.bf16.msra.mxu0 %v1455
      %2134 = vmatprep.subr.bf16.mxu0 %v1462
      %2135 = vmatpush1.bf16.msra.mxu0 %v1461
      %2136 = vmatprep.subr.bf16.mxu0 %v1468
      %2137 = vmatpush1.bf16.msra.mxu0 %v1467
      %2138 = vmatprep.subr.bf16.mxu0 %v1474
      %2139 = vmatpush1.bf16.msra.mxu0 %v1473
      %2140 = vmatprep.subr.bf16.mxu0 %v1480
      %2141 = vmatpush1.bf16.msra.mxu0 %v1479
      %2142 = vmatprep.subr.bf16.mxu0 %v1486
      %2143 = vmatpush1.bf16.msra.mxu0 %v1485
      %2144 = vmatprep.subr.bf16.mxu0 %v1492
      %2145 = vmatpush1.bf16.msra.mxu0 %v1491
      %2146 = vmatprep.subr.bf16.mxu0 %v1498
      %2147 = vmatpush1.bf16.msra.mxu0 %v1497
      %2148 = vmatprep.subr.bf16.mxu0 %v1504
      %2149 = vmatpush1.bf16.msra.mxu0 %v1503
      %2150 = vmatprep.subr.bf16.mxu0 %v1510
      %2151 = vmatpush1.bf16.msra.mxu0 %v1509
      %2152 = vmatprep.subr.bf16.mxu0 %v1516
      %2153 = vmatpush1.bf16.msra.mxu0 %v1515
      %2154 = vmatprep.mubr.bf16.mxu0 %v548
      %2155 = vmatmul.mubr.bf16.gmra.mrb[0].mxu0 %v547
      %v2156 = vpop.f32.mrb[0].mxu0
      %v2157 = vadd.f32 0.0, %v2156
      %v2158 = vpop.f32.mrb[0].mxu0
      %v2159 = vadd.f32 0.0, %v2158
      %v2160 = vpop.f32.mrb[0].mxu0
      %v2161 = vpop.f32.mrb[0].mxu0
      %2162 = vdwg.mxu0
      %2163 = vmatprep.subr.bf16.mxu0 %v1522
      %2164 = vmatpush1.bf16.msra.mxu0 %v1521
      %2165 = vmatprep.subr.bf16.mxu0 %v1528
      %2166 = vmatpush1.bf16.msra.mxu0 %v1527
      %2167 = vmatprep.subr.bf16.mxu0 %v1534
      %2168 = vmatpush1.bf16.msra.mxu0 %v1533
      %2169 = vmatprep.subr.bf16.mxu0 %v1540
      %2170 = vmatpush1.bf16.msra.mxu0 %v1539
      %2171 = vmatprep.subr.bf16.mxu0 %v1546
      %2172 = vmatpush1.bf16.msra.mxu0 %v1545
      %2173 = vmatprep.subr.bf16.mxu0 %v1552
      %2174 = vmatpush1.bf16.msra.mxu0 %v1551
      %2175 = vmatprep.subr.bf16.mxu0 %v1558
      %2176 = vmatpush1.bf16.msra.mxu0 %v1557
      %2177 = vmatprep.subr.bf16.mxu0 %v1564
      %2178 = vmatpush1.bf16.msra.mxu0 %v1563
      %2179 = vmatprep.subr.bf16.mxu0 %v1570
      %2180 = vmatpush1.bf16.msra.mxu0 %v1569
      %2181 = vmatprep.subr.bf16.mxu0 %v1576
      %2182 = vmatpush1.bf16.msra.mxu0 %v1575
      %2183 = vmatprep.subr.bf16.mxu0 %v1582
      %2184 = vmatpush1.bf16.msra.mxu0 %v1581
      %2185 = vmatprep.subr.bf16.mxu0 %v1588
      %2186 = vmatpush1.bf16.msra.mxu0 %v1587
      %2187 = vmatprep.subr.bf16.mxu0 %v1594
      %2188 = vmatpush1.bf16.msra.mxu0 %v1593
      %2189 = vmatprep.subr.bf16.mxu0 %v1600
      %2190 = vmatpush1.bf16.msra.mxu0 %v1599
      %2191 = vmatprep.subr.bf16.mxu0 %v1606
      %2192 = vmatpush1.bf16.msra.mxu0 %v1605
      %2193 = vmatprep.subr.bf16.mxu0 %v1612
      %2194 = vmatpush1.bf16.msra.mxu0 %v1611
      %2195 = vmatprep.mubr.bf16.mxu0 %v550
      %2196 = vmatmul.mubr.bf16.gmra.mrb[0].mxu0 %v549
      %v2197 = vpop.f32.mrb[0].mxu0
      %v2198 = vadd.f32 %v2157, %v2197
      %v2199 = vpop.f32.mrb[0].mxu0
      %v2200 = vadd.f32 %v2159, %v2199
      %v2201 = vpop.f32.mrb[0].mxu0
      %v2202 = vpop.f32.mrb[0].mxu0
      %2203 = vdwg.mxu0
      %2204 = vmatprep.subr.bf16.mxu0 %v1618
      %2205 = vmatpush1.bf16.msra.mxu0 %v1617
      %2206 = vmatprep.subr.bf16.mxu0 %v1624
      %2207 = vmatpush1.bf16.msra.mxu0 %v1623
      %2208 = vmatprep.subr.bf16.mxu0 %v1630
      %2209 = vmatpush1.bf16.msra.mxu0 %v1629
      %2210 = vmatprep.subr.bf16.mxu0 %v1636
      %2211 = vmatpush1.bf16.msra.mxu0 %v1635
      %2212 = vmatprep.subr.bf16.mxu0 %v1642
      %2213 = vmatpush1.bf16.msra.mxu0 %v1641
      %2214 = vmatprep.subr.bf16.mxu0 %v1648
      %2215 = vmatpush1.bf16.msra.mxu0 %v1647
      %2216 = vmatprep.subr.bf16.mxu0 %v1654
      %2217 = vmatpush1.bf16.msra.mxu0 %v1653
      %2218 = vmatprep.subr.bf16.mxu0 %v1660
      %2219 = vmatpush1.bf16.msra.mxu0 %v1659
      %2220 = vmatprep.subr.bf16.mxu0 %v1666
      %2221 = vmatpush1.bf16.msra.mxu0 %v1665
      %2222 = vmatprep.subr.bf16.mxu0 %v1672
      %2223 = vmatpush1.bf16.msra.mxu0 %v1671
      %2224 = vmatprep.subr.bf16.mxu0 %v1678
      %2225 = vmatpush1.bf16.msra.mxu0 %v1677
      %2226 = vmatprep.subr.bf16.mxu0 %v1684
      %2227 = vmatpush1.bf16.msra.mxu0 %v1683
      %2228 = vmatprep.subr.bf16.mxu0 %v1690
      %2229 = vmatpush1.bf16.msra.mxu0 %v1689
      %2230 = vmatprep.subr.bf16.mxu0 %v1696
      %2231 = vmatpush1.bf16.msra.mxu0 %v1695
      %2232 = vmatprep.subr.bf16.mxu0 %v1702
      %2233 = vmatpush1.bf16.msra.mxu0 %v1701
      %2234 = vmatprep.subr.bf16.mxu0 %v1708
      %2235 = vmatpush1.bf16.msra.mxu0 %v1707
      %2236 = vmatprep.mubr.bf16.mxu0 %v552
      %2237 = vmatmul.mubr.bf16.gmra.mrb[0].mxu0 %v551
      %v2238 = vpop.f32.mrb[0].mxu0
      %v2239 = vadd.f32 %v2198, %v2238
      %v2240 = vpop.f32.mrb[0].mxu0
      %v2241 = vadd.f32 %v2200, %v2240
      %v2242 = vpop.f32.mrb[0].mxu0
      %v2243 = vpop.f32.mrb[0].mxu0
      %2244 = vdwg.mxu0
      %2245 = vmatprep.subr.bf16.mxu0 %v1428
      %2246 = vmatpush1.bf16.msra.mxu0 %v1427
      %2247 = vmatprep.subr.bf16.mxu0 %v1434
      %2248 = vmatpush1.bf16.msra.mxu0 %v1433
      %2249 = vmatprep.subr.bf16.mxu0 %v1440
      %2250 = vmatpush1.bf16.msra.mxu0 %v1439
      %2251 = vmatprep.subr.bf16.mxu0 %v1446
      %2252 = vmatpush1.bf16.msra.mxu0 %v1445
      %2253 = vmatprep.subr.bf16.mxu0 %v1452
      %2254 = vmatpush1.bf16.msra.mxu0 %v1451
      %2255 = vmatprep.subr.bf16.mxu0 %v1458
      %2256 = vmatpush1.bf16.msra.mxu0 %v1457
      %2257 = vmatprep.subr.bf16.mxu0 %v1464
      %2258 = vmatpush1.bf16.msra.mxu0 %v1463
      %2259 = vmatprep.subr.bf16.mxu0 %v1470
      %2260 = vmatpush1.bf16.msra.mxu0 %v1469
      %2261 = vmatprep.subr.bf16.mxu0 %v1476
      %2262 = vmatpush1.bf16.msra.mxu0 %v1475
      %2263 = vmatprep.subr.bf16.mxu0 %v1482
      %2264 = vmatpush1.bf16.msra.mxu0 %v1481
      %2265 = vmatprep.subr.bf16.mxu0 %v1488
      %2266 = vmatpush1.bf16.msra.mxu0 %v1487
      %2267 = vmatprep.subr.bf16.mxu0 %v1494
      %2268 = vmatpush1.bf16.msra.mxu0 %v1493
      %2269 = vmatprep.subr.bf16.mxu0 %v1500
      %2270 = vmatpush1.bf16.msra.mxu0 %v1499
      %2271 = vmatprep.subr.bf16.mxu0 %v1506
      %2272 = vmatpush1.bf16.msra.mxu0 %v1505
      %2273 = vmatprep.subr.bf16.mxu0 %v1512
      %2274 = vmatpush1.bf16.msra.mxu0 %v1511
      %2275 = vmatprep.subr.bf16.mxu0 %v1518
      %2276 = vmatpush1.bf16.msra.mxu0 %v1517
      %2277 = vmatprep.mubr.bf16.mxu0 %v548
      %2278 = vmatmul.mubr.bf16.gmra.mrb[0].mxu0 %v547
      %v2279 = vpop.f32.mrb[0].mxu0
      %v2280 = vadd.f32 0.0, %v2279
      %v2281 = vpop.f32.mrb[0].mxu0
      %v2282 = vadd.f32 0.0, %v2281
      %v2283 = vpop.f32.mrb[0].mxu0
      %v2284 = vpop.f32.mrb[0].mxu0
      %2285 = vdwg.mxu0
      %2286 = vmatprep.subr.bf16.mxu0 %v1524
      %2287 = vmatpush1.bf16.msra.mxu0 %v1523
      %2288 = vmatprep.subr.bf16.mxu0 %v1530
      %2289 = vmatpush1.bf16.msra.mxu0 %v1529
      %2290 = vmatprep.subr.bf16.mxu0 %v1536
      %2291 = vmatpush1.bf16.msra.mxu0 %v1535
      %2292 = vmatprep.subr.bf16.mxu0 %v1542
      %2293 = vmatpush1.bf16.msra.mxu0 %v1541
      %2294 = vmatprep.subr.bf16.mxu0 %v1548
      %2295 = vmatpush1.bf16.msra.mxu0 %v1547
      %2296 = vmatprep.subr.bf16.mxu0 %v1554
      %2297 = vmatpush1.bf16.msra.mxu0 %v1553
      %2298 = vmatprep.subr.bf16.mxu0 %v1560
      %2299 = vmatpush1.bf16.msra.mxu0 %v1559
      %2300 = vmatprep.subr.bf16.mxu0 %v1566
      %2301 = vmatpush1.bf16.msra.mxu0 %v1565
      %2302 = vmatprep.subr.bf16.mxu0 %v1572
      %2303 = vmatpush1.bf16.msra.mxu0 %v1571
      %2304 = vmatprep.subr.bf16.mxu0 %v1578
      %2305 = vmatpush1.bf16.msra.mxu0 %v1577
      %2306 = vmatprep.subr.bf16.mxu0 %v1584
      %2307 = vmatpush1.bf16.msra.mxu0 %v1583
      %2308 = vmatprep.subr.bf16.mxu0 %v1590
      %2309 = vmatpush1.bf16.msra.mxu0 %v1589
      %2310 = vmatprep.subr.bf16.mxu0 %v1596
      %2311 = vmatpush1.bf16.msra.mxu0 %v1595
      %2312 = vmatprep.subr.bf16.mxu0 %v1602
      %2313 = vmatpush1.bf16.msra.mxu0 %v1601
      %2314 = vmatprep.subr.bf16.mxu0 %v1608
      %2315 = vmatpush1.bf16.msra.mxu0 %v1607
      %2316 = vmatprep.subr.bf16.mxu0 %v1614
      %2317 = vmatpush1.bf16.msra.mxu0 %v1613
      %2318 = vmatprep.mubr.bf16.mxu0 %v550
      %2319 = vmatmul.mubr.bf16.gmra.mrb[0].mxu0 %v549
      %v2320 = vpop.f32.mrb[0].mxu0
      %v2321 = vadd.f32 %v2280, %v2320
      %v2322 = vpop.f32.mrb[0].mxu0
      %v2323 = vadd.f32 %v2282, %v2322
      %v2324 = vpop.f32.mrb[0].mxu0
      %v2325 = vpop.f32.mrb[0].mxu0
      %2326 = vdwg.mxu0
      %2327 = vmatprep.subr.bf16.mxu0 %v1620
      %2328 = vmatpush1.bf16.msra.mxu0 %v1619
      %2329 = vmatprep.subr.bf16.mxu0 %v1626
      %2330 = vmatpush1.bf16.msra.mxu0 %v1625
      %2331 = vmatprep.subr.bf16.mxu0 %v1632
      %2332 = vmatpush1.bf16.msra.mxu0 %v1631
      %2333 = vmatprep.subr.bf16.mxu0 %v1638
      %2334 = vmatpush1.bf16.msra.mxu0 %v1637
      %2335 = vmatprep.subr.bf16.mxu0 %v1644
      %2336 = vmatpush1.bf16.msra.mxu0 %v1643
      %2337 = vmatprep.subr.bf16.mxu0 %v1650
      %2338 = vmatpush1.bf16.msra.mxu0 %v1649
      %2339 = vmatprep.subr.bf16.mxu0 %v1656
      %2340 = vmatpush1.bf16.msra.mxu0 %v1655
      %2341 = vmatprep.subr.bf16.mxu0 %v1662
      %2342 = vmatpush1.bf16.msra.mxu0 %v1661
      %2343 = vmatprep.subr.bf16.mxu0 %v1668
      %2344 = vmatpush1.bf16.msra.mxu0 %v1667
      %2345 = vmatprep.subr.bf16.mxu0 %v1674
      %2346 = vmatpush1.bf16.msra.mxu0 %v1673
      %2347 = vmatprep.subr.bf16.mxu0 %v1680
      %2348 = vmatpush1.bf16.msra.mxu0 %v1679
      %2349 = vmatprep.subr.bf16.mxu0 %v1686
      %2350 = vmatpush1.bf16.msra.mxu0 %v1685
      %2351 = vmatprep.subr.bf16.mxu0 %v1692
      %2352 = vmatpush1.bf16.msra.mxu0 %v1691
      %2353 = vmatprep.subr.bf16.mxu0 %v1698
      %2354 = vmatpush1.bf16.msra.mxu0 %v1697
      %2355 = vmatprep.subr.bf16.mxu0 %v1704
      %2356 = vmatpush1.bf16.msra.mxu0 %v1703
      %2357 = vmatprep.subr.bf16.mxu0 %v1710
      %2358 = vmatpush1.bf16.msra.mxu0 %v1709
      %2359 = vmatprep.mubr.bf16.mxu0 %v552
      %2360 = vmatmul.mubr.bf16.gmra.mrb[0].mxu0 %v551
      %v2361 = vpop.f32.mrb[0].mxu0
      %v2362 = vadd.f32 %v2321, %v2361
      %v2363 = vpop.f32.mrb[0].mxu0
      %v2364 = vadd.f32 %v2323, %v2363
      %v2365 = vpop.f32.mrb[0].mxu0
      %v2366 = vpop.f32.mrb[0].mxu0
      %2367 = vdwg.mxu0
      %2368 = vst [vmem:[#allocation2] sm:$0xff] %v2116
      %2369 = vst [vmem:[#allocation2 + $0x8] sm:$0xff] %v2118
      %2370 = vst [vmem:[#allocation2 + $0x10] sm:$0xff] %v2239
      %2371 = vst [vmem:[#allocation2 + $0x18] sm:$0xff] %v2241
      %2372 = vst [vmem:[#allocation2 + $0x20] sm:$0xff] %v2362
      %2373 = vst [vmem:[#allocation2 + $0x28] sm:$0xff] %v2364
      %v2374 = vld [vmem:[#allocation2] sm:$0xff]
      %v2375 = vld [vmem:[#allocation2 + $0x8] sm:$0xff]
      %v2376 = vld [vmem:[#allocation2 + $0x10] sm:$0xff]
      %v2377 = vld [vmem:[#allocation2 + $0x18] sm:$0xff]
      %v2378 = vld [vmem:[#allocation2 + $0x20] sm:$0xff]
      %v2379 = vld [vmem:[#allocation2 + $0x28] sm:$0xff]
      %v2382 = vrot.slane %v2376, 7
      %v2383 = vrot.slane %v2377, 7
      %vm2386 = vcmask 1040384
      %v2387 = vsel %vm2386, 0.0, %v2382
      %v2388 = vsel %vm2386, 0.0, %v2383
      %v2389 = vsel %vm2386, %v2382, 0.0
      %v2390 = vsel %vm2386, %v2383, 0.0
      %v2391 = vadd.f32 %v2378, %v2387
      %v2392 = vadd.f32 %v2379, %v2388
      %v2393 = vadd.f32 %v2389, 0.0
      %v2394 = vadd.f32 %v2390, 0.0
      %v2397 = vrot.slane %v2374, 6
      %v2398 = vrot.slane %v2375, 6
      %vm2401 = vcmask 1041408
      %v2402 = vsel %vm2401, 0.0, %v2397
      %v2403 = vsel %vm2401, 0.0, %v2398
      %v2404 = vadd.f32 %v2391, %v2402
      %v2405 = vadd.f32 %v2392, %v2403
      %v2406 = vadd.f32 %v2393, %v2397
      %v2407 = vadd.f32 %v2394, %v2398
      %v2409 = vlaneseq
      %v2410 = vshrl.u32 %v2409, 7
      %v2411 = vsub.s32 0, %v2410
      %v2412 = vrot.slane %v246, %v2411
      %v2413 = vlaneseq
      %v2414 = vshrl.u32 %v2413, 7
      %v2415 = vsub.s32 1, %v2414
      %v2416 = vrot.slane %v246, %v2415
      %v2419 = vadd.f32 %v2404, %v2412
      %v2420 = vadd.f32 %v2405, %v2416
      %v2421 = vadd.f32 %v2406, %v2412
      %v2422 = vadd.f32 %v2407, %v2416
      %v2423 = vmax.f32 %v2419, 0.0
      %v2424 = vmax.f32 %v2420, 0.0
      %v2425 = vmax.f32 %v2421, 0.0
      %v2426 = vmax.f32 %v2422, 0.0
      %v2427 = vpack.c.bf16 %v2425, %v2423
      %v2428 = vpack.c.bf16 %v2426, %v2424
      %v2431 = vunpack.c.l.b16 %v2427
      %v2432 = vunpack.c.l.b16 %v2428
      %v2433 = vunpack.c.h.b16 %v2427
      %v2434 = vunpack.c.h.b16 %v2428
      %v2435 = vpack.c.b16 %v2432, %v2431
      %v2436 = vpack.c.b16 %v2434, %v2433
      %2439 = vst [vmem:[%s237] sm:$0xff] %v2435
      %2440 = vst [vmem:[%s237 + $0x8] sm:$0x11] %v2436
      %v2441 = vsel %vm2401, %v2425, 0.0
      %v2442 = vadd.f32 %v2423, %v2441
      %v2443 = vrot.slane %v2442, 4
      %v2444 = vadd.f32 %v2442, %v2443
      %v2445 = vrot.slane %v2444, 2
      %v2446 = vadd.f32 %v2444, %v2445
      %v2447 = vrot.slane %v2446, 1
      %v2448 = vadd.f32 %v2446, %v2447
      %v2449 = vsel %vm2401, %v2426, 0.0
      %v2450 = vadd.f32 %v2424, %v2449
      %v2451 = vrot.slane %v2450, 4
      %v2452 = vadd.f32 %v2450, %v2451
      %v2453 = vrot.slane %v2452, 2
      %v2454 = vadd.f32 %v2452, %v2453
      %v2455 = vrot.slane %v2454, 1
      %v2456 = vadd.f32 %v2454, %v2455
      %v2457 = vadd.f32 %v2448, 0.0
      %v2458 = vadd.f32 %v2456, 0.0
      %v2459 = vmul.f32 %v2423, %v2423
      %v2460 = vmul.f32 %v2424, %v2424
      %v2461 = vmul.f32 %v2425, %v2425
      %v2462 = vmul.f32 %v2426, %v2426
      %v2463 = vsel %vm2401, %v2461, 0.0
      %v2464 = vadd.f32 %v2459, %v2463
      %v2465 = vrot.slane %v2464, 4
      %v2466 = vadd.f32 %v2464, %v2465
      %v2467 = vrot.slane %v2466, 2
      %v2468 = vadd.f32 %v2466, %v2467
      %v2469 = vrot.slane %v2468, 1
      %v2470 = vadd.f32 %v2468, %v2469
      %v2471 = vsel %vm2401, %v2462, 0.0
      %v2472 = vadd.f32 %v2460, %v2471
      %v2473 = vrot.slane %v2472, 4
      %v2474 = vadd.f32 %v2472, %v2473
      %v2475 = vrot.slane %v2474, 2
      %v2476 = vadd.f32 %v2474, %v2475
      %v2477 = vrot.slane %v2476, 1
      %v2478 = vadd.f32 %v2476, %v2477
      %v2479 = vadd.f32 %v2470, 0.0
      %v2480 = vadd.f32 %v2478, 0.0
      %v2483 = vcombine.low %v2457, %v2458
      %v2485 = vunpack.c.l.s4 1966171168
      %v2486 = vunpack.c.0.s8 %v2485
      %v2487 = vlaneseq
      %v2488 = vshrl.u32 %v2487, 7
      %v2489 = vsub.s32 %v2486, %v2488
      %v2490 = vrot.slane %v2483, %v2489
      %v2492 = vunpack.c.l.s4 1966171168
      %v2493 = vunpack.c.0.s8 %v2492
      %v2494 = vlaneseq
      %v2495 = vshrl.u32 %v2494, 7
      %v2496 = vsub.s32 %v2493, %v2495
      %v2497 = vrot.slane %v2490, %v2496
      %v2499 = vlaneseq
      %vm2500 = vcmp.ge.s32.totalorder %v2499, 0
      %vm2501 = vcmp.lt.s32.totalorder %v2499, 256
      %vm2502 = vmand %vm2500, %vm2501
      %2503 = vst.msk [vmem:[%s241] sm:$0x3] %vm2502, %v2497
      %v2506 = vcombine.low %v2479, %v2480
      %v2508 = vunpack.c.l.s4 1966171168
      %v2509 = vunpack.c.0.s8 %v2508
      %v2510 = vlaneseq
      %v2511 = vshrl.u32 %v2510, 7
      %v2512 = vsub.s32 %v2509, %v2511
      %v2513 = vrot.slane %v2506, %v2512
      %v2515 = vunpack.c.l.s4 1966171168
      %v2516 = vunpack.c.0.s8 %v2515
      %v2517 = vlaneseq
      %v2518 = vshrl.u32 %v2517, 7
      %v2519 = vsub.s32 %v2516, %v2518
      %v2520 = vrot.slane %v2513, %v2519
      %2522 = vst.msk [vmem:[%s245] sm:$0x3] %vm2502, %v2520
      %p2523 = scmp.lt.s32.totalorder %s17, 1
      %s2524 = scalar_select %p2523, %s17, 1
      %s2525 = smul.addr %s2524, 4
      %s2526 = smul.addr %s2525, 4
      %s2527 = scalar_lea.vmem %s3, %s2526
      %p2528 = scmp.lt.s32.totalorder %s17, 1
      %s2529 = scalar_select %p2528, %s17, 1
      %s2530 = smul.addr %s2529, 2
      %s2531 = scalar_lea.vmem %s4, %s2530
      %p2532 = scmp.lt.s32.totalorder %s17, 1
      %s2533 = scalar_select %p2532, %s17, 1
      %s2534 = smul.addr %s2533, 2
      %s2535 = scalar_lea.vmem %s5, %s2534
      // Predicated region
      $region33: #{cnn_forward.3} parent=31 // pred_check
        %p2536 = pneg %p103
      $region34: #{cnn_forward.3} parent=31 // pred_check_branch
        %2538 = sbr.rel (%p2536) target = $region36
      $region35: #{cnn_forward.3} parent=31 // pred_region
        _
      $region36: #{cnn_forward.3} parent=31 // pred_fallthru
        _
      // Predicated region
      $region37: #{cnn_forward.3} parent=31 // pred_check
        %p2539 = pneg %p129
      $region38: #{cnn_forward.3} parent=31 // pred_check_branch
        %2541 = sbr.rel (%p2539) target = $region40
      $region39: #{cnn_forward.3} parent=31 // pred_region
        _
      $region40: #{cnn_forward.3} parent=31 // pred_fallthru
        _
      // Predicated region
      $region41: #{cnn_forward.3} parent=31 // pred_check
        %p2542 = pneg %p155
      $region42: #{cnn_forward.3} parent=31 // pred_check_branch
        %2544 = sbr.rel (%p2542) target = $region44
      $region43: #{cnn_forward.3} parent=31 // pred_region
        _
      $region44: #{cnn_forward.3} parent=31 // pred_fallthru
        _
    $region32: #{cnn_forward.3} parent=5 // pred_fallthru
      _
    %p2545 = scmp.le.s32.totalorder 2, %s12
    // Predicated region
    $region45: #{cnn_forward.3} parent=5 // pred_check
      %p2546 = pneg %p2545
    $region46: #{cnn_forward.3} parent=5 // pred_check_branch
      %2548 = sbr.rel (%p2546) target = $region48
    $region47: #{cnn_forward.3} parent=5 // pred_region
      %s2549 = ssub.s32 %s12, 2
      // Predicated region
      $region49: #{cnn_forward.3} parent=47 // pred_check
        %p2550 = pneg %p109
      $region50: #{cnn_forward.3} parent=47 // pred_check_branch
        %2552 = sbr.rel (%p2550) target = $region52
      $region51: #{cnn_forward.3} parent=47 // pred_region
        %p2553 = scmp.lt.s32.totalorder %s18, 1
        %s2554 = scalar_select %p2553, %s18, 1
        %s2555 = smul.addr %s2554, 4
        %s2556 = smul.addr %s2555, 4
        %s2557 = scalar_lea.vmem %s3, %s2556
      $region52: #{cnn_forward.3} parent=47 // pred_fallthru
        _
      // Predicated region
      $region53: #{cnn_forward.3} parent=47 // pred_check
        %p2558 = pneg %p135
      $region54: #{cnn_forward.3} parent=47 // pred_check_branch
        %2560 = sbr.rel (%p2558) target = $region56
      $region55: #{cnn_forward.3} parent=47 // pred_region
        %p2561 = scmp.lt.s32.totalorder %s18, 1
        %s2562 = scalar_select %p2561, %s18, 1
        %s2563 = smul.addr %s2562, 2
        %s2564 = scalar_lea.vmem %s4, %s2563
      $region56: #{cnn_forward.3} parent=47 // pred_fallthru
        _
      // Predicated region
      $region57: #{cnn_forward.3} parent=47 // pred_check
        %p2565 = pneg %p161
      $region58: #{cnn_forward.3} parent=47 // pred_check_branch
        %2567 = sbr.rel (%p2565) target = $region60
      $region59: #{cnn_forward.3} parent=47 // pred_region
        %p2568 = scmp.lt.s32.totalorder %s18, 1
        %s2569 = scalar_select %p2568, %s18, 1
        %s2570 = smul.addr %s2569, 2
        %s2571 = scalar_lea.vmem %s5, %s2570
      $region60: #{cnn_forward.3} parent=47 // pred_fallthru
        _
    $region48: #{cnn_forward.3} parent=5 // pred_fallthru
      _
  $region6: #{cnn_forward.3} parent=0 // loop_footer
    %s16 = sadd.s32 1, %s12
  $region7: #{cnn_forward.3} parent=0 // loop_footer_branch
    %11 = sbr.rel target = $region3
  $region8: #{cnn_forward.3} parent=0 // loop_exit
    _

// kernel: cnn_forward.5
$region0: #{cnn_forward.5}
  #allocation0 [shape = 'u32[]', space=smem, size = 0x4, offset = 0x4, fixed_abs, tag = 'smem constant byte address 0x4 - core index']
  #allocation1 [shape = 'u32[144,128]{1,0:T(1,128)}', space=vmem, size = 0x12000, scoped, tag = 'internal scratch']
  %s0 = inlined_call_operand.vmem [shape: bf16[2,13,128], index: 0, kind: input, shape index: {}]
  %s1 = inlined_call_operand.vmem [shape: f32[1,128], index: 1, kind: input, shape index: {}]
  %s2 = inlined_call_operand.vmem [shape: f32[1,128], index: 2, kind: input, shape index: {}]
  %s3 = inlined_call_operand.vmem [shape: f32[2,14,128], index: 3, kind: output, shape index: {}]
  %s4 = sld [smem:[#allocation0]]
  $region45: #{cnn_forward.5} parent=0
    _
  %s6 = ssub.s32 1, %s4
  %s7 = scalar_select 0, %s6, %s4
  loop: start=0, step=1, limit=4
  $region2: #{cnn_forward.5} parent=0 // loop_pre_header
    _
  $region3: #{cnn_forward.5} parent=0 // loop_header
    %s9 = sphi 0, %s13
    %p10 = scmp.ge.s32.totalorder %s9, 4
    %s19 = sphi 0, %s21
    %s22 = sphi 0, %s19
    %s23 = sphi 0, %s22
    %s39 = sphi 0, %s23
    %s43 = sphi 0, %s43
    %s45 = sphi 0, %s43
    %s46 = sphi 0, %s45
    %s60 = sphi 0, %s46
    %s64 = sphi 0, %s64
    %s66 = sphi 0, %s64
    %s67 = sphi 0, %s66
    %s81 = sphi 0, %s67
    %s87 = sphi 0, %s89
    %s90 = sphi 0, %s87
    %s91 = sphi 0, %s90
    %s107 = sphi 0, %s91
  $region4: #{cnn_forward.5} parent=0 // loop_header_branch
    %12 = sbr.rel (%p10) target = $region8
  $region5: #{cnn_forward.5} parent=0 // loop_body
    %s14 = ssub.s32 %s9, 1
    %s15 = ssub.s32 %s9, 2
    %s16 = sadd.s32 %s9, 1
    %s17 = ssub.s32 %s9, %s16
    %p18 = scmp.eq.s32.totalorder %s17, 0
    %s20 = sadd.s32 %s19, 1
    %s21 = scalar_select %p18, %s19, %s20
    %p24 = pneg %p18
    %p25 = scmp.eq.s32.totalorder %s9, 1
    %p26 = por %p24, %p25
    %p27 = scmp.ne.s32.totalorder %s19, %s22
    %p28 = scmp.eq.s32.totalorder %s9, 0
    %p29 = por %p27, %p28
    %p30 = scmp.ne.s32.totalorder %s19, %s22
    %p31 = scmp.eq.s32.totalorder %s14, 1
    %p32 = por %p30, %p31
    %p33 = scmp.ne.s32.totalorder %s22, %s23
    %p34 = scmp.eq.s32.totalorder %s14, 0
    %p35 = por %p33, %p34
    %p36 = scmp.ne.s32.totalorder %s22, %s23
    %p37 = scmp.eq.s32.totalorder %s15, 1
    %p38 = por %p36, %p37
    %p40 = scmp.ne.s32.totalorder %s23, %s39
    %p41 = scmp.eq.s32.totalorder %s15, 0
    %p42 = por %p40, %p41
    %s44 = sadd.s32 %s43, 1
    %p47 = scmp.eq.s32.totalorder %s9, 1
    %p48 = scmp.ne.s32.totalorder %s43, %s45
    %p49 = scmp.eq.s32.totalorder %s9, 0
    %p50 = por %p48, %p49
    %p51 = scmp.ne.s32.totalorder %s43, %s45
    %p52 = scmp.eq.s32.totalorder %s14, 1
    %p53 = por %p51, %p52
    %p54 = scmp.ne.s32.totalorder %s45, %s46
    %p55 = scmp.eq.s32.totalorder %s14, 0
    %p56 = por %p54, %p55
    %p57 = scmp.ne.s32.totalorder %s45, %s46
    %p58 = scmp.eq.s32.totalorder %s15, 1
    %p59 = por %p57, %p58
    %p61 = scmp.ne.s32.totalorder %s46, %s60
    %p62 = scmp.eq.s32.totalorder %s15, 0
    %p63 = por %p61, %p62
    %s65 = sadd.s32 %s64, 1
    %p68 = scmp.eq.s32.totalorder %s9, 1
    %p69 = scmp.ne.s32.totalorder %s64, %s66
    %p70 = scmp.eq.s32.totalorder %s9, 0
    %p71 = por %p69, %p70
    %p72 = scmp.ne.s32.totalorder %s64, %s66
    %p73 = scmp.eq.s32.totalorder %s14, 1
    %p74 = por %p72, %p73
    %p75 = scmp.ne.s32.totalorder %s66, %s67
    %p76 = scmp.eq.s32.totalorder %s14, 0
    %p77 = por %p75, %p76
    %p78 = scmp.ne.s32.totalorder %s66, %s67
    %p79 = scmp.eq.s32.totalorder %s15, 1
    %p80 = por %p78, %p79
    %p82 = scmp.ne.s32.totalorder %s67, %s81
    %p83 = scmp.eq.s32.totalorder %s15, 0
    %p84 = por %p82, %p83
    %s85 = ssub.s32 %s9, %s16
    %p86 = scmp.eq.s32.totalorder %s85, 0
    %s88 = sadd.s32 %s87, 1
    %s89 = scalar_select %p86, %s87, %s88
    %p92 = pneg %p86
    %p93 = scmp.eq.s32.totalorder %s9, 1
    %p94 = por %p92, %p93
    %p95 = scmp.ne.s32.totalorder %s87, %s90
    %p96 = scmp.eq.s32.totalorder %s9, 0
    %p97 = por %p95, %p96
    %p98 = scmp.ne.s32.totalorder %s87, %s90
    %p99 = scmp.eq.s32.totalorder %s14, 1
    %p100 = por %p98, %p99
    %p101 = scmp.ne.s32.totalorder %s90, %s91
    %p102 = scmp.eq.s32.totalorder %s14, 0
    %p103 = por %p101, %p102
    %p104 = scmp.ne.s32.totalorder %s90, %s91
    %p105 = scmp.eq.s32.totalorder %s15, 1
    %p106 = por %p104, %p105
    %p108 = scmp.ne.s32.totalorder %s91, %s107
    %p109 = scmp.eq.s32.totalorder %s15, 0
    %p110 = por %p108, %p109
    %p111 = scmp.le.s32.totalorder 1, %s9
    %p112 = scmp.lt.s32.totalorder %s9, 3
    %p113 = pnand %p111, %p112
    %p114 = pneg %p113
    // Predicated region
    $region9: #{cnn_forward.5} parent=5 // pred_check
      _
    $region10: #{cnn_forward.5} parent=5 // pred_check_branch
      %116 = sbr.rel (%p113) target = $region12
    $region11: #{cnn_forward.5} parent=5 // pred_region
      %s117 = ssub.s32 %s9, 1
      // Predicated region
      $region13: #{cnn_forward.5} parent=11 // pred_check
        %p118 = pneg %p56
      $region14: #{cnn_forward.5} parent=11 // pred_check_branch
        %120 = sbr.rel (%p118) target = $region16
      $region15: #{cnn_forward.5} parent=11 // pred_region
        _
      $region16: #{cnn_forward.5} parent=11 // pred_fallthru
        _
      // Predicated region
      $region17: #{cnn_forward.5} parent=11 // pred_check
        %p121 = pneg %p77
      $region18: #{cnn_forward.5} parent=11 // pred_check_branch
        %123 = sbr.rel (%p121) target = $region20
      $region19: #{cnn_forward.5} parent=11 // pred_region
        _
      $region20: #{cnn_forward.5} parent=11 // pred_fallthru
        _
    $region12: #{cnn_forward.5} parent=5 // pred_fallthru
      _
    %p124 = scmp.lt.s32.totalorder %s9, 2
    // Predicated region
    $region21: #{cnn_forward.5} parent=5 // pred_check
      %p125 = pneg %p124
    $region22: #{cnn_forward.5} parent=5 // pred_check_branch
      %127 = sbr.rel (%p125) target = $region24
    $region23: #{cnn_forward.5} parent=5 // pred_region
      // Predicated region
      $region25: #{cnn_forward.5} parent=23 // pred_check
        %p128 = pneg %p29
      $region26: #{cnn_forward.5} parent=23 // pred_check_branch
        %130 = sbr.rel (%p128) target = $region28
      $region27: #{cnn_forward.5} parent=23 // pred_region
        %p131 = scmp.lt.s32.totalorder %s9, 1
        %s132 = scalar_select %p131, %s9, 1
        %s133 = smul.addr %s132, 2
        %s134 = smul.addr %s133, 4
        %s135 = scalar_lea.vmem %s0, %s134
      $region28: #{cnn_forward.5} parent=23 // pred_fallthru
        _
    $region24: #{cnn_forward.5} parent=5 // pred_fallthru
      _
    %p136 = scmp.le.s32.totalorder 1, %s9
    %p137 = scmp.lt.s32.totalorder %s9, 3
    %p138 = pnand %p136, %p137
    %p139 = pneg %p138
    // Predicated region
    $region29: #{cnn_forward.5} parent=5 // pred_check
      _
    $region30: #{cnn_forward.5} parent=5 // pred_check_branch
      %141 = sbr.rel (%p138) target = $region32
    $region31: #{cnn_forward.5} parent=5 // pred_region
      %s142 = ssub.s32 %s9, 1
      %p143 = scmp.lt.s32.totalorder %s14, 1
      %s144 = scalar_select %p143, %s14, 1
      %s145 = smul.addr %s144, 2
      %s146 = smul.addr %s145, 4
      %s147 = scalar_lea.vmem %s0, %s146
      %p148 = pneg %p35
      %p149 = pneg %p32
      %p150 = pneg %p56
      %p151 = pneg %p53
      %p152 = pneg %p77
      %p153 = pneg %p74
      %p154 = pneg %p103
      %p155 = pneg %p100
      %p156 = scmp.lt.s32.totalorder %s14, 1
      %s157 = scalar_select %p156, %s14, 1
      %s158 = smul.addr %s157, 2
      %s159 = smul.addr %s158, 8
      %s160 = scalar_lea.vmem %s3, %s159
      %p161 = scmp.lt.s32.totalorder %s14, 1
      %s162 = scalar_select %p161, %s14, 1
      %s163 = smul.addr %s162, 2
      %s164 = smul.addr %s163, 4
      %s165 = scalar_lea.vmem %s0, %s164
      %p166 = scmp.lt.s32.totalorder %s14, 1
      %s167 = scalar_select %p166, %s14, 1
      %s168 = smul.addr %s167, 2
      %s169 = smul.addr %s168, 8
      %s170 = scalar_lea.vmem %s3, %s169
      %v171 = vld [vmem:[%s1] sm:$0x1]
      %v172 = vld [vmem:[%s2] sm:$0x1]
      %v173 = vld [vmem:[%s165] sm:$0xf]
      %v174 = vld [vmem:[%s165 + $0x4] sm:$0x7]
      %v175 = vunpack.c.l.bf16 %v173
      %v176 = vunpack.c.l.bf16 %v174
      %v178 = vlaneseq
      %v179 = vshrl.u32 %v178, 7
      %v180 = vsub.s32 0, %v179
      %v181 = vrot.slane %v171, %v180
      %v183 = vmul.f32 %v175, %v181
      %v184 = vmul.f32 %v176, %v181
      %v186 = vlaneseq
      %v187 = vshrl.u32 %v186, 7
      %v188 = vsub.s32 0, %v187
      %v189 = vrot.slane %v172, %v188
      %v191 = vadd.f32 %v183, %v189
      %v192 = vadd.f32 %v184, %v189
      %v193 = vmax.f32 %v191, 0.0
      %v194 = vmax.f32 %v192, 0.0
      %vm197 = vcmask 1040384
      %v198 = vrot.slane %v193, 7
      %v199 = vrot.slane %v194, 7
      %v200 = vsel %vm197, %v198, %v199
      %v203 = vsel %vm197, %v193, %v198
      %vm205 = vcmask 1044480
      %v206 = vsel %vm205, %v194, %v199
      %v207 = vmax.f32 %v203, %v193
      %v208 = vmax.f32 %v200, %v206
      %209 = vst [vmem:[%s170] sm:$0xff] %v207
      %210 = vst [vmem:[%s170 + $0x8] sm:$0x3f] %v208
      %p211 = scmp.lt.s32.totalorder %s14, 1
      %s212 = scalar_select %p211, %s14, 1
      %s213 = smul.addr %s212, 2
      %s214 = smul.addr %s213, 8
      %s215 = scalar_lea.vmem %s3, %s214
      // Predicated region
      $region33: #{cnn_forward.5} parent=31 // pred_check
        %p216 = pneg %p100
      $region34: #{cnn_forward.5} parent=31 // pred_check_branch
        %218 = sbr.rel (%p216) target = $region36
      $region35: #{cnn_forward.5} parent=31 // pred_region
        _
      $region36: #{cnn_forward.5} parent=31 // pred_fallthru
        _
    $region32: #{cnn_forward.5} parent=5 // pred_fallthru
      _
    %p219 = scmp.le.s32.totalorder 2, %s9
    // Predicated region
    $region37: #{cnn_forward.5} parent=5 // pred_check
      %p220 = pneg %p219
    $region38: #{cnn_forward.5} parent=5 // pred_check_branch
      %222 = sbr.rel (%p220) target = $region40
    $region39: #{cnn_forward.5} parent=5 // pred_region
      %s223 = ssub.s32 %s9, 2
      // Predicated region
      $region41: #{cnn_forward.5} parent=39 // pred_check
        %p224 = pneg %p106
      $region42: #{cnn_forward.5} parent=39 // pred_check_branch
        %226 = sbr.rel (%p224) target = $region44
      $region43: #{cnn_forward.5} parent=39 // pred_region
        %p227 = scmp.lt.s32.totalorder %s15, 1
        %s228 = scalar_select %p227, %s15, 1
        %s229 = smul.addr %s228, 2
        %s230 = smul.addr %s229, 8
        %s231 = scalar_lea.vmem %s3, %s230
      $region44: #{cnn_forward.5} parent=39 // pred_fallthru
        _
    $region40: #{cnn_forward.5} parent=5 // pred_fallthru
      _
  $region6: #{cnn_forward.5} parent=0 // loop_footer
    %s13 = sadd.s32 1, %s9
  $region7: #{cnn_forward.5} parent=0 // loop_footer_branch
    %8 = sbr.rel target = $region3
  $region8: #{cnn_forward.5} parent=0 // loop_exit
    _

// kernel: cnn_forward.4
$region0: #{cnn_forward.4}
  #allocation0 [shape = 'u32[]', space=smem, size = 0x4, offset = 0x4, fixed_abs, tag = 'smem constant byte address 0x4 - core index']
  #allocation1 [shape = 'u32[144,128]{1,0:T(1,128)}', space=vmem, size = 0x12000, scoped, tag = 'internal scratch']
  #allocation2 [shape = 'bf16[11,256]{1,0:T(8,128)(2,1)}', space=vmem, size = 0x2000, scoped, tag = 'scratch operand']
  #allocation3 [shape = 'f32[11,384]{1,0:T(8,128)}', space=vmem, size = 0x6000, scoped, tag = 'scratch operand']
  %s0 = inlined_call_operand.vmem [shape: bf16[2,10,256], index: 0, kind: input, shape index: {}]
  %s1 = inlined_call_operand.vmem [shape: f32[1,256], index: 1, kind: input, shape index: {}]
  %s2 = inlined_call_operand.vmem [shape: f32[1,256], index: 2, kind: input, shape index: {}]
  %s3 = inlined_call_operand.vmem [shape: bf16[256,384], index: 3, kind: input, shape index: {}]
  %s4 = inlined_call_operand.vmem [shape: f32[1,128], index: 4, kind: input, shape index: {}]
  %s5 = inlined_call_operand.vmem [shape: bf16[2,13,128], index: 5, kind: output, shape index: {0}]
  %s6 = inlined_call_operand.vmem [shape: f32[2,1,128], index: 6, kind: output, shape index: {1}]
  %s7 = inlined_call_operand.vmem [shape: f32[2,1,128], index: 7, kind: output, shape index: {2}]
  %8 = xla_tuple %s5, %s6, %s7
  %s9 = sld [smem:[#allocation0]]
  $region69: #{cnn_forward.4} parent=0
    _
  %s11 = ssub.s32 1, %s9
  %s12 = scalar_select 0, %s11, %s9
  loop: start=0, step=1, limit=4
  $region2: #{cnn_forward.4} parent=0 // loop_pre_header
    _
  $region3: #{cnn_forward.4} parent=0 // loop_header
    %s14 = sphi 0, %s18
    %p15 = scmp.ge.s32.totalorder %s14, 4
    %s24 = sphi 0, %s26
    %s27 = sphi 0, %s24
    %s28 = sphi 0, %s27
    %s44 = sphi 0, %s28
    %s48 = sphi 0, %s48
    %s50 = sphi 0, %s48
    %s51 = sphi 0, %s50
    %s65 = sphi 0, %s51
    %s69 = sphi 0, %s69
    %s71 = sphi 0, %s69
    %s72 = sphi 0, %s71
    %s86 = sphi 0, %s72
    %s90 = sphi 0, %s90
    %s92 = sphi 0, %s90
    %s93 = sphi 0, %s92
    %s107 = sphi 0, %s93
    %s111 = sphi 0, %s111
    %s113 = sphi 0, %s111
    %s114 = sphi 0, %s113
    %s128 = sphi 0, %s114
    %s134 = sphi 0, %s136
    %s137 = sphi 0, %s134
    %s138 = sphi 0, %s137
    %s154 = sphi 0, %s138
    %s160 = sphi 0, %s162
    %s163 = sphi 0, %s160
    %s164 = sphi 0, %s163
    %s180 = sphi 0, %s164
    %s186 = sphi 0, %s188
    %s189 = sphi 0, %s186
    %s190 = sphi 0, %s189
    %s206 = sphi 0, %s190
  $region4: #{cnn_forward.4} parent=0 // loop_header_branch
    %17 = sbr.rel (%p15) target = $region8
  $region5: #{cnn_forward.4} parent=0 // loop_body
    %s19 = ssub.s32 %s14, 1
    %s20 = ssub.s32 %s14, 2
    %s21 = sadd.s32 %s14, 1
    %s22 = ssub.s32 %s14, %s21
    %p23 = scmp.eq.s32.totalorder %s22, 0
    %s25 = sadd.s32 %s24, 1
    %s26 = scalar_select %p23, %s24, %s25
    %p29 = pneg %p23
    %p30 = scmp.eq.s32.totalorder %s14, 1
    %p31 = por %p29, %p30
    %p32 = scmp.ne.s32.totalorder %s24, %s27
    %p33 = scmp.eq.s32.totalorder %s14, 0
    %p34 = por %p32, %p33
    %p35 = scmp.ne.s32.totalorder %s24, %s27
    %p36 = scmp.eq.s32.totalorder %s19, 1
    %p37 = por %p35, %p36
    %p38 = scmp.ne.s32.totalorder %s27, %s28
    %p39 = scmp.eq.s32.totalorder %s19, 0
    %p40 = por %p38, %p39
    %p41 = scmp.ne.s32.totalorder %s27, %s28
    %p42 = scmp.eq.s32.totalorder %s20, 1
    %p43 = por %p41, %p42
    %p45 = scmp.ne.s32.totalorder %s28, %s44
    %p46 = scmp.eq.s32.totalorder %s20, 0
    %p47 = por %p45, %p46
    %s49 = sadd.s32 %s48, 1
    %p52 = scmp.eq.s32.totalorder %s14, 1
    %p53 = scmp.ne.s32.totalorder %s48, %s50
    %p54 = scmp.eq.s32.totalorder %s14, 0
    %p55 = por %p53, %p54
    %p56 = scmp.ne.s32.totalorder %s48, %s50
    %p57 = scmp.eq.s32.totalorder %s19, 1
    %p58 = por %p56, %p57
    %p59 = scmp.ne.s32.totalorder %s50, %s51
    %p60 = scmp.eq.s32.totalorder %s19, 0
    %p61 = por %p59, %p60
    %p62 = scmp.ne.s32.totalorder %s50, %s51
    %p63 = scmp.eq.s32.totalorder %s20, 1
    %p64 = por %p62, %p63
    %p66 = scmp.ne.s32.totalorder %s51, %s65
    %p67 = scmp.eq.s32.totalorder %s20, 0
    %p68 = por %p66, %p67
    %s70 = sadd.s32 %s69, 1
    %p73 = scmp.eq.s32.totalorder %s14, 1
    %p74 = scmp.ne.s32.totalorder %s69, %s71
    %p75 = scmp.eq.s32.totalorder %s14, 0
    %p76 = por %p74, %p75
    %p77 = scmp.ne.s32.totalorder %s69, %s71
    %p78 = scmp.eq.s32.totalorder %s19, 1
    %p79 = por %p77, %p78
    %p80 = scmp.ne.s32.totalorder %s71, %s72
    %p81 = scmp.eq.s32.totalorder %s19, 0
    %p82 = por %p80, %p81
    %p83 = scmp.ne.s32.totalorder %s71, %s72
    %p84 = scmp.eq.s32.totalorder %s20, 1
    %p85 = por %p83, %p84
    %p87 = scmp.ne.s32.totalorder %s72, %s86
    %p88 = scmp.eq.s32.totalorder %s20, 0
    %p89 = por %p87, %p88
    %s91 = sadd.s32 %s90, 1
    %p94 = scmp.eq.s32.totalorder %s14, 1
    %p95 = scmp.ne.s32.totalorder %s90, %s92
    %p96 = scmp.eq.s32.totalorder %s14, 0
    %p97 = por %p95, %p96
    %p98 = scmp.ne.s32.totalorder %s90, %s92
    %p99 = scmp.eq.s32.totalorder %s19, 1
    %p100 = por %p98, %p99
    %p101 = scmp.ne.s32.totalorder %s92, %s93
    %p102 = scmp.eq.s32.totalorder %s19, 0
    %p103 = por %p101, %p102
    %p104 = scmp.ne.s32.totalorder %s92, %s93
    %p105 = scmp.eq.s32.totalorder %s20, 1
    %p106 = por %p104, %p105
    %p108 = scmp.ne.s32.totalorder %s93, %s107
    %p109 = scmp.eq.s32.totalorder %s20, 0
    %p110 = por %p108, %p109
    %s112 = sadd.s32 %s111, 1
    %p115 = scmp.eq.s32.totalorder %s14, 1
    %p116 = scmp.ne.s32.totalorder %s111, %s113
    %p117 = scmp.eq.s32.totalorder %s14, 0
    %p118 = por %p116, %p117
    %p119 = scmp.ne.s32.totalorder %s111, %s113
    %p120 = scmp.eq.s32.totalorder %s19, 1
    %p121 = por %p119, %p120
    %p122 = scmp.ne.s32.totalorder %s113, %s114
    %p123 = scmp.eq.s32.totalorder %s19, 0
    %p124 = por %p122, %p123
    %p125 = scmp.ne.s32.totalorder %s113, %s114
    %p126 = scmp.eq.s32.totalorder %s20, 1
    %p127 = por %p125, %p126
    %p129 = scmp.ne.s32.totalorder %s114, %s128
    %p130 = scmp.eq.s32.totalorder %s20, 0
    %p131 = por %p129, %p130
    %s132 = ssub.s32 %s14, %s21
    %p133 = scmp.eq.s32.totalorder %s132, 0
    %s135 = sadd.s32 %s134, 1
    %s136 = scalar_select %p133, %s134, %s135
    %p139 = pneg %p133
    %p140 = scmp.eq.s32.totalorder %s14, 1
    %p141 = por %p139, %p140
    %p142 = scmp.ne.s32.totalorder %s134, %s137
    %p143 = scmp.eq.s32.totalorder %s14, 0
    %p144 = por %p142, %p143
    %p145 = scmp.ne.s32.totalorder %s134, %s137
    %p146 = scmp.eq.s32.totalorder %s19, 1
    %p147 = por %p145, %p146
    %p148 = scmp.ne.s32.totalorder %s137, %s138
    %p149 = scmp.eq.s32.totalorder %s19, 0
    %p150 = por %p148, %p149
    %p151 = scmp.ne.s32.totalorder %s137, %s138
    %p152 = scmp.eq.s32.totalorder %s20, 1
    %p153 = por %p151, %p152
    %p155 = scmp.ne.s32.totalorder %s138, %s154
    %p156 = scmp.eq.s32.totalorder %s20, 0
    %p157 = por %p155, %p156
    %s158 = ssub.s32 %s14, %s21
    %p159 = scmp.eq.s32.totalorder %s158, 0
    %s161 = sadd.s32 %s160, 1
    %s162 = scalar_select %p159, %s160, %s161
    %p165 = pneg %p159
    %p166 = scmp.eq.s32.totalorder %s14, 1
    %p167 = por %p165, %p166
    %p168 = scmp.ne.s32.totalorder %s160, %s163
    %p169 = scmp.eq.s32.totalorder %s14, 0
    %p170 = por %p168, %p169
    %p171 = scmp.ne.s32.totalorder %s160, %s163
    %p172 = scmp.eq.s32.totalorder %s19, 1
    %p173 = por %p171, %p172
    %p174 = scmp.ne.s32.totalorder %s163, %s164
    %p175 = scmp.eq.s32.totalorder %s19, 0
    %p176 = por %p174, %p175
    %p177 = scmp.ne.s32.totalorder %s163, %s164
    %p178 = scmp.eq.s32.totalorder %s20, 1
    %p179 = por %p177, %p178
    %p181 = scmp.ne.s32.totalorder %s164, %s180
    %p182 = scmp.eq.s32.totalorder %s20, 0
    %p183 = por %p181, %p182
    %s184 = ssub.s32 %s14, %s21
    %p185 = scmp.eq.s32.totalorder %s184, 0
    %s187 = sadd.s32 %s186, 1
    %s188 = scalar_select %p185, %s186, %s187
    %p191 = pneg %p185
    %p192 = scmp.eq.s32.totalorder %s14, 1
    %p193 = por %p191, %p192
    %p194 = scmp.ne.s32.totalorder %s186, %s189
    %p195 = scmp.eq.s32.totalorder %s14, 0
    %p196 = por %p194, %p195
    %p197 = scmp.ne.s32.totalorder %s186, %s189
    %p198 = scmp.eq.s32.totalorder %s19, 1
    %p199 = por %p197, %p198
    %p200 = scmp.ne.s32.totalorder %s189, %s190
    %p201 = scmp.eq.s32.totalorder %s19, 0
    %p202 = por %p200, %p201
    %p203 = scmp.ne.s32.totalorder %s189, %s190
    %p204 = scmp.eq.s32.totalorder %s20, 1
    %p205 = por %p203, %p204
    %p207 = scmp.ne.s32.totalorder %s190, %s206
    %p208 = scmp.eq.s32.totalorder %s20, 0
    %p209 = por %p207, %p208
    %p210 = scmp.le.s32.totalorder 1, %s14
    %p211 = scmp.lt.s32.totalorder %s14, 3
    %p212 = pnand %p210, %p211
    %p213 = pneg %p212
    // Predicated region
    $region9: #{cnn_forward.4} parent=5 // pred_check
      _
    $region10: #{cnn_forward.4} parent=5 // pred_check_branch
      %215 = sbr.rel (%p212) target = $region12
    $region11: #{cnn_forward.4} parent=5 // pred_region
      %s216 = ssub.s32 %s14, 1
      // Predicated region
      $region13: #{cnn_forward.4} parent=11 // pred_check
        %p217 = pneg %p61
      $region14: #{cnn_forward.4} parent=11 // pred_check_branch
        %219 = sbr.rel (%p217) target = $region16
      $region15: #{cnn_forward.4} parent=11 // pred_region
        _
      $region16: #{cnn_forward.4} parent=11 // pred_fallthru
        _
      // Predicated region
      $region17: #{cnn_forward.4} parent=11 // pred_check
        %p220 = pneg %p82
      $region18: #{cnn_forward.4} parent=11 // pred_check_branch
        %222 = sbr.rel (%p220) target = $region20
      $region19: #{cnn_forward.4} parent=11 // pred_region
        _
      $region20: #{cnn_forward.4} parent=11 // pred_fallthru
        _
      // Predicated region
      $region21: #{cnn_forward.4} parent=11 // pred_check
        %p223 = pneg %p103
      $region22: #{cnn_forward.4} parent=11 // pred_check_branch
        %225 = sbr.rel (%p223) target = $region24
      $region23: #{cnn_forward.4} parent=11 // pred_region
        _
      $region24: #{cnn_forward.4} parent=11 // pred_fallthru
        _
      // Predicated region
      $region25: #{cnn_forward.4} parent=11 // pred_check
        %p226 = pneg %p124
      $region26: #{cnn_forward.4} parent=11 // pred_check_branch
        %228 = sbr.rel (%p226) target = $region28
      $region27: #{cnn_forward.4} parent=11 // pred_region
        _
      $region28: #{cnn_forward.4} parent=11 // pred_fallthru
        _
    $region12: #{cnn_forward.4} parent=5 // pred_fallthru
      _
    %p229 = scmp.lt.s32.totalorder %s14, 2
    // Predicated region
    $region29: #{cnn_forward.4} parent=5 // pred_check
      %p230 = pneg %p229
    $region30: #{cnn_forward.4} parent=5 // pred_check_branch
      %232 = sbr.rel (%p230) target = $region32
    $region31: #{cnn_forward.4} parent=5 // pred_region
      // Predicated region
      $region33: #{cnn_forward.4} parent=31 // pred_check
        %p233 = pneg %p34
      $region34: #{cnn_forward.4} parent=31 // pred_check_branch
        %235 = sbr.rel (%p233) target = $region36
      $region35: #{cnn_forward.4} parent=31 // pred_region
        %p236 = scmp.lt.s32.totalorder %s14, 1
        %s237 = scalar_select %p236, %s14, 1
        %s238 = smul.addr %s237, 4
        %s239 = smul.addr %s238, 4
        %s240 = scalar_lea.vmem %s0, %s239
      $region36: #{cnn_forward.4} parent=31 // pred_fallthru
        _
    $region32: #{cnn_forward.4} parent=5 // pred_fallthru
      _
    %p241 = scmp.le.s32.totalorder 1, %s14
    %p242 = scmp.lt.s32.totalorder %s14, 3
    %p243 = pnand %p241, %p242
    %p244 = pneg %p243
    // Predicated region
    $region37: #{cnn_forward.4} parent=5 // pred_check
      _
    $region38: #{cnn_forward.4} parent=5 // pred_check_branch
      %246 = sbr.rel (%p243) target = $region40
    $region39: #{cnn_forward.4} parent=5 // pred_region
      %s247 = ssub.s32 %s14, 1
      %p248 = scmp.lt.s32.totalorder %s19, 1
      %s249 = scalar_select %p248, %s19, 1
      %s250 = smul.addr %s249, 4
      %s251 = smul.addr %s250, 4
      %s252 = scalar_lea.vmem %s0, %s251
      %p253 = pneg %p40
      %p254 = pneg %p37
      %p255 = pneg %p61
      %p256 = pneg %p58
      %p257 = pneg %p82
      %p258 = pneg %p79
      %p259 = pneg %p103
      %p260 = pneg %p100
      %p261 = pneg %p124
      %p262 = pneg %p121
      %p263 = pneg %p150
      %p264 = pneg %p147
      %p265 = scmp.lt.s32.totalorder %s19, 1
      %s266 = scalar_select %p265, %s19, 1
      %s267 = smul.addr %s266, 2
      %s268 = smul.addr %s267, 4
      %s269 = scalar_lea.vmem %s5, %s268
      %p270 = pneg %p176
      %p271 = pneg %p173
      %p272 = scmp.lt.s32.totalorder %s19, 1
      %s273 = scalar_select %p272, %s19, 1
      %s274 = scalar_lea.vmem %s6, %s273
      %p275 = pneg %p202
      %p276 = pneg %p199
      %p277 = scmp.lt.s32.totalorder %s19, 1
      %s278 = scalar_select %p277, %s19, 1
      %s279 = scalar_lea.vmem %s7, %s278
      %p280 = scmp.lt.s32.totalorder %s19, 1
      %s281 = scalar_select %p280, %s19, 1
      %s282 = smul.addr %s281, 4
      %s283 = smul.addr %s282, 4
      %s284 = scalar_lea.vmem %s0, %s283
      %p285 = scmp.lt.s32.totalorder %s19, 1
      %s286 = scalar_select %p285, %s19, 1
      %s287 = smul.addr %s286, 2
      %s288 = smul.addr %s287, 4
      %s289 = scalar_lea.vmem %s5, %s288
      %p290 = scmp.lt.s32.totalorder %s19, 1
      %s291 = scalar_select %p290, %s19, 1
      %s292 = scalar_lea.vmem %s6, %s291
      %p293 = scmp.lt.s32.totalorder %s19, 1
      %s294 = scalar_select %p293, %s19, 1
      %s295 = scalar_lea.vmem %s7, %s294
      %v297 = vld [vmem:[%s1] sm:$0x3]
      %v298 = vld [vmem:[%s2] sm:$0x3]
      %v299 = vld [vmem:[%s4] sm:$0x1]
      %v300 = vld [vmem:[%s284] sm:$0xff]
      %v301 = vld [vmem:[%s284 + $0x8] sm:$0x11]
      %v302 = vunpack.c.l.bf16 %v300
      %v303 = vunpack.c.h.bf16 %v300
      %v304 = vunpack.c.l.bf16 %v301
      %v305 = vunpack.c.h.bf16 %v301
      %v307 = vlaneseq
      %v308 = vshrl.u32 %v307, 7
      %v309 = vsub.s32 0, %v308
      %v310 = vrot.slane %v297, %v309
      %v311 = vlaneseq
      %v312 = vshrl.u32 %v311, 7
      %v313 = vsub.s32 1, %v312
      %v314 = vrot.slane %v297, %v313
      %v317 = vmul.f32 %v302, %v310
      %v318 = vmul.f32 %v303, %v314
      %v319 = vmul.f32 %v304, %v310
      %v320 = vmul.f32 %v305, %v314
      %v322 = vlaneseq
      %v323 = vshrl.u32 %v322, 7
      %v324 = vsub.s32 0, %v323
      %v325 = vrot.slane %v298, %v324
      %v326 = vlaneseq
      %v327 = vshrl.u32 %v326, 7
      %v328 = vsub.s32 1, %v327
      %v329 = vrot.slane %v298, %v328
      %v332 = vadd.f32 %v317, %v325
      %v333 = vadd.f32 %v318, %v329
      %v334 = vadd.f32 %v319, %v325
      %v335 = vadd.f32 %v320, %v329
      %vm340 = vcmask 1040384
      %v341 = vrot.slane %v332, 7
      %v342 = vrot.slane %v333, 7
      %v343 = vrot.slane %v334, 7
      %v344 = vsel %vm340, %v341, %v343
      %v345 = vrot.slane %v335, 7
      %v346 = vsel %vm340, %v342, %v345
      %v351 = vsel %vm340, %v332, %v341
      %v352 = vsel %vm340, %v333, %v342
      %vm355 = vcmask 1041408
      %v356 = vsel %vm355, %v334, %v343
      %v357 = vsel %vm355, %v335, %v345
      %v358 = vmax.f32 %v351, %v332
      %v359 = vmax.f32 %v352, %v333
      %v360 = vmax.f32 %v344, %v356
      %v361 = vmax.f32 %v346, %v357
      %v362 = vpack.c.bf16 %v360, %v358
      %v363 = vpack.c.bf16 %v361, %v359
      %v366 = vunpack.c.l.b16 %v362
      %v367 = vunpack.c.l.b16 %v363
      %v368 = vunpack.c.h.b16 %v362
      %v369 = vunpack.c.h.b16 %v363
      %v370 = vpack.c.b16 %v367, %v366
      %v371 = vpack.c.b16 %v369, %v368
      %374 = vst [vmem:[#allocation2] sm:$0xff] %v370
      %vm375 = vcmask 1041408
      %vm376 = vsmask.f32 1280
      %vm377 = vmand %vm375, %vm376
      %vm378 = vcmask 1045508
      %vm379 = vsmask.f32 5376
      %vm380 = vmand %vm378, %vm379
      %vm381 = vmor %vm380, %vm377
      %v382 = vld [vmem:[#allocation2 + $0x8] sm:$0x33]
      %v383 = vsel %vm381, %v371, %v382
      %384 = vst [vmem:[#allocation2 + $0x8] sm:$0x33] %v383
      %v385 = vld [vmem:[#allocation2] sm:$0xff]
      %v386 = vld [vmem:[#allocation2 + $0x8] sm:$0x33]
      %v387 = vld [vmem:[%s3] sm:$0xff]
      %v388 = vld [vmem:[%s3 + $0x8] sm:$0xf]
      %v389 = vld [vmem:[%s3 + $0xc] sm:$0xff]
      %v390 = vld [vmem:[%s3 + $0x14] sm:$0xf]
      %v391 = vld [vmem:[%s3 + $0x18] sm:$0xff]
      %v392 = vld [vmem:[%s3 + $0x20] sm:$0xf]
      %v393 = vld [vmem:[%s3 + $0x24] sm:$0xff]
      %v394 = vld [vmem:[%s3 + $0x2c] sm:$0xf]
      %v395 = vld [vmem:[%s3 + $0x30] sm:$0xff]
      %v396 = vld [vmem:[%s3 + $0x38] sm:$0xf]
      %v397 = vld [vmem:[%s3 + $0x3c] sm:$0xff]
      %v398 = vld [vmem:[%s3 + $0x44] sm:$0xf]
      %v399 = vld [vmem:[%s3 + $0x48] sm:$0xff]
      %v400 = vld [vmem:[%s3 + $0x50] sm:$0xf]
      %v401 = vld [vmem:[%s3 + $0x54] sm:$0xff]
      %v402 = vld [vmem:[%s3 + $0x5c] sm:$0xf]
      %v403 = vld [vmem:[%s3 + $0x60] sm:$0xff]
      %v404 = vld [vmem:[%s3 + $0x68] sm:$0xf]
      %v405 = vld [vmem:[%s3 + $0x6c] sm:$0xff]
      %v406 = vld [vmem:[%s3 + $0x74] sm:$0xf]
      %v407 = vld [vmem:[%s3 + $0x78] sm:$0xff]
      %v408 = vld [vmem:[%s3 + $0x80] sm:$0xf]
      %v409 = vld [vmem:[%s3 + $0x84] sm:$0xff]
      %v410 = vld [vmem:[%s3 + $0x8c] sm:$0xf]
      %v411 = vld [vmem:[%s3 + $0x90] sm:$0xff]
      %v412 = vld [vmem:[%s3 + $0x98] sm:$0xf]
      %v413 = vld [vmem:[%s3 + $0x9c] sm:$0xff]
      %v414 = vld [vmem:[%s3 + $0xa4] sm:$0xf]
      %v415 = vld [vmem:[%s3 + $0xa8] sm:$0xff]
      %v416 = vld [vmem:[%s3 + $0xb0] sm:$0xf]
      %v417 = vld [vmem:[%s3 + $0xb4] sm:$0xff]
      %v418 = vld [vmem:[%s3 + $0xbc] sm:$0xf]
      %v419 = vld [vmem:[%s3 + $0xc0] sm:$0xff]
      %v420 = vld [vmem:[%s3 + $0xc8] sm:$0xf]
      %v421 = vld [vmem:[%s3 + $0xcc] sm:$0xff]
      %v422 = vld [vmem:[%s3 + $0xd4] sm:$0xf]
      %v423 = vld [vmem:[%s3 + $0xd8] sm:$0xff]
      %v424 = vld [vmem:[%s3 + $0xe0] sm:$0xf]
      %v425 = vld [vmem:[%s3 + $0xe4] sm:$0xff]
      %v426 = vld [vmem:[%s3 + $0xec] sm:$0xf]
      %v427 = vld [vmem:[%s3 + $0xf0] sm:$0xff]
      %v428 = vld [vmem:[%s3 + $0xf8] sm:$0xf]
      %v429 = vld [vmem:[%s3 + $0xfc] sm:$0xff]
      %v430 = vld [vmem:[%s3 + $0x104] sm:$0xf]
      %v431 = vld [vmem:[%s3 + $0x108] sm:$0xff]
      %v432 = vld [vmem:[%s3 + $0x110] sm:$0xf]
      %v433 = vld [vmem:[%s3 + $0x114] sm:$0xff]
      %v434 = vld [vmem:[%s3 + $0x11c] sm:$0xf]
      %v435 = vld [vmem:[%s3 + $0x120] sm:$0xff]
      %v436 = vld [vmem:[%s3 + $0x128] sm:$0xf]
      %v437 = vld [vmem:[%s3 + $0x12c] sm:$0xff]
      %v438 = vld [vmem:[%s3 + $0x134] sm:$0xf]
      %v439 = vld [vmem:[%s3 + $0x138] sm:$0xff]
      %v440 = vld [vmem:[%s3 + $0x140] sm:$0xf]
      %v441 = vld [vmem:[%s3 + $0x144] sm:$0xff]
      %v442 = vld [vmem:[%s3 + $0x14c] sm:$0xf]
      %v443 = vld [vmem:[%s3 + $0x150] sm:$0xff]
      %v444 = vld [vmem:[%s3 + $0x158] sm:$0xf]
      %v445 = vld [vmem:[%s3 + $0x15c] sm:$0xff]
      %v446 = vld [vmem:[%s3 + $0x164] sm:$0xf]
      %v447 = vld [vmem:[%s3 + $0x168] sm:$0xff]
      %v448 = vld [vmem:[%s3 + $0x170] sm:$0xf]
      %v449 = vld [vmem:[%s3 + $0x174] sm:$0xff]
      %v450 = vld [vmem:[%s3 + $0x17c] sm:$0xf]
      %v453 = vunpack.c.l.b16 %v385
      %v454 = vunpack.c.h.b16 %v385
      %v455 = vunpack.c.l.b16 %v386
      %v456 = vunpack.c.h.b16 %v386
      %v457 = vpack.c.b16 %v455, %v453
      %v458 = vpack.c.b16 %v456, %v454
      %v525 = vunpack.c.l.b16 %v387
      %v526 = vunpack.c.h.b16 %v387
      %v527 = vunpack.c.l.b16 %v388
      %v528 = vunpack.c.l.b16 %v389
      %v529 = vunpack.c.h.b16 %v389
      %v530 = vunpack.c.l.b16 %v390
      %v531 = vunpack.c.l.b16 %v391
      %v532 = vunpack.c.h.b16 %v391
      %v533 = vunpack.c.l.b16 %v392
      %v534 = vunpack.c.l.b16 %v393
      %v535 = vunpack.c.h.b16 %v393
      %v536 = vunpack.c.l.b16 %v394
      %v537 = vunpack.c.l.b16 %v395
      %v538 = vunpack.c.h.b16 %v395
      %v539 = vunpack.c.l.b16 %v396
      %v540 = vunpack.c.l.b16 %v397
      %v541 = vunpack.c.h.b16 %v397
      %v542 = vunpack.c.l.b16 %v398
      %v543 = vunpack.c.l.b16 %v399
      %v544 = vunpack.c.h.b16 %v399
      %v545 = vunpack.c.l.b16 %v400
      %v546 = vunpack.c.l.b16 %v401
      %v547 = vunpack.c.h.b16 %v401
      %v548 = vunpack.c.l.b16 %v402
      %v549 = vunpack.c.l.b16 %v403
      %v550 = vunpack.c.h.b16 %v403
      %v551 = vunpack.c.l.b16 %v404
      %v552 = vunpack.c.l.b16 %v405
      %v553 = vunpack.c.h.b16 %v405
      %v554 = vunpack.c.l.b16 %v406
      %v555 = vunpack.c.l.b16 %v407
      %v556 = vunpack.c.h.b16 %v407
      %v557 = vunpack.c.l.b16 %v408
      %v558 = vunpack.c.l.b16 %v409
      %v559 = vunpack.c.h.b16 %v409
      %v560 = vunpack.c.l.b16 %v410
      %v561 = vunpack.c.l.b16 %v411
      %v562 = vunpack.c.h.b16 %v411
      %v563 = vunpack.c.l.b16 %v412
      %v564 = vunpack.c.l.b16 %v413
      %v565 = vunpack.c.h.b16 %v413
      %v566 = vunpack.c.l.b16 %v414
      %v567 = vunpack.c.l.b16 %v415
      %v568 = vunpack.c.h.b16 %v415
      %v569 = vunpack.c.l.b16 %v416
      %v570 = vunpack.c.l.b16 %v417
      %v571 = vunpack.c.h.b16 %v417
      %v572 = vunpack.c.l.b16 %v418
      %v573 = vunpack.c.l.b16 %v419
      %v574 = vunpack.c.h.b16 %v419
      %v575 = vunpack.c.l.b16 %v420
      %v576 = vunpack.c.l.b16 %v421
      %v577 = vunpack.c.h.b16 %v421
      %v578 = vunpack.c.l.b16 %v422
      %v579 = vunpack.c.l.b16 %v423
      %v580 = vunpack.c.h.b16 %v423
      %v581 = vunpack.c.l.b16 %v424
      %v582 = vunpack.c.l.b16 %v425
      %v583 = vunpack.c.h.b16 %v425
      %v584 = vunpack.c.l.b16 %v426
      %v585 = vunpack.c.l.b16 %v427
      %v586 = vunpack.c.h.b16 %v427
      %v587 = vunpack.c.l.b16 %v428
      %v588 = vunpack.c.l.b16 %v429
      %v589 = vunpack.c.h.b16 %v429
      %v590 = vunpack.c.l.b16 %v430
      %v591 = vunpack.c.l.b16 %v431
      %v592 = vunpack.c.h.b16 %v431
      %v593 = vunpack.c.l.b16 %v432
      %v594 = vunpack.c.l.b16 %v433
      %v595 = vunpack.c.h.b16 %v433
      %v596 = vunpack.c.l.b16 %v434
      %v597 = vunpack.c.l.b16 %v435
      %v598 = vunpack.c.h.b16 %v435
      %v599 = vunpack.c.l.b16 %v436
      %v600 = vunpack.c.l.b16 %v437
      %v601 = vunpack.c.h.b16 %v437
      %v602 = vunpack.c.l.b16 %v438
      %v603 = vunpack.c.l.b16 %v439
      %v604 = vunpack.c.h.b16 %v439
      %v605 = vunpack.c.l.b16 %v440
      %v606 = vunpack.c.l.b16 %v441
      %v607 = vunpack.c.h.b16 %v441
      %v608 = vunpack.c.l.b16 %v442
      %v609 = vunpack.c.l.b16 %v443
      %v610 = vunpack.c.h.b16 %v443
      %v611 = vunpack.c.l.b16 %v444
      %v612 = vunpack.c.l.b16 %v445
      %v613 = vunpack.c.h.b16 %v445
      %v614 = vunpack.c.l.b16 %v446
      %v615 = vunpack.c.l.b16 %v447
      %v616 = vunpack.c.h.b16 %v447
      %v617 = vunpack.c.l.b16 %v448
      %v618 = vunpack.c.l.b16 %v449
      %v619 = vunpack.c.h.b16 %v449
      %v620 = vunpack.c.l.b16 %v450
      %v621 = vpack.c.b16 %v528, %v525
      %v622 = vpack.c.b16 %v529, %v526
      %v623 = vpack.c.b16 %v530, %v527
      %v624 = vpack.c.b16 %v534, %v531
      %v625 = vpack.c.b16 %v535, %v532
      %v626 = vpack.c.b16 %v536, %v533
      %v627 = vpack.c.b16 %v540, %v537
      %v628 = vpack.c.b16 %v541, %v538
      %v629 = vpack.c.b16 %v542, %v539
      %v630 = vpack.c.b16 %v546, %v543
      %v631 = vpack.c.b16 %v547, %v544
      %v632 = vpack.c.b16 %v548, %v545
      %v633 = vpack.c.b16 %v552, %v549
      %v634 = vpack.c.b16 %v553, %v550
      %v635 = vpack.c.b16 %v554, %v551
      %v636 = vpack.c.b16 %v558, %v555
      %v637 = vpack.c.b16 %v559, %v556
      %v638 = vpack.c.b16 %v560, %v557
      %v639 = vpack.c.b16 %v564, %v561
      %v640 = vpack.c.b16 %v565, %v562
      %v641 = vpack.c.b16 %v566, %v563
      %v642 = vpack.c.b16 %v570, %v567
      %v643 = vpack.c.b16 %v571, %v568
      %v644 = vpack.c.b16 %v572, %v569
      %v645 = vpack.c.b16 %v576, %v573
      %v646 = vpack.c.b16 %v577, %v574
      %v647 = vpack.c.b16 %v578, %v575
      %v648 = vpack.c.b16 %v582, %v579
      %v649 = vpack.c.b16 %v583, %v580
      %v650 = vpack.c.b16 %v584, %v581
      %v651 = vpack.c.b16 %v588, %v585
      %v652 = vpack.c.b16 %v589, %v586
      %v653 = vpack.c.b16 %v590, %v587
      %v654 = vpack.c.b16 %v594, %v591
      %v655 = vpack.c.b16 %v595, %v592
      %v656 = vpack.c.b16 %v596, %v593
      %v657 = vpack.c.b16 %v600, %v597
      %v658 = vpack.c.b16 %v601, %v598
      %v659 = vpack.c.b16 %v602, %v599
      %v660 = vpack.c.b16 %v606, %v603
      %v661 = vpack.c.b16 %v607, %v604
      %v662 = vpack.c.b16 %v608, %v605
      %v663 = vpack.c.b16 %v612, %v609
      %v664 = vpack.c.b16 %v613, %v610
      %v665 = vpack.c.b16 %v614, %v611
      %v666 = vpack.c.b16 %v618, %v615
      %v667 = vpack.c.b16 %v619, %v616
      %v668 = vpack.c.b16 %v620, %v617
      %717 = vmatprep.subr.bf16.mxu0 %v622
      %718 = vmatpush1.bf16.msra.mxu0 %v621
      %719 = vmatprep.subr.bf16.mxu0 %v625
      %720 = vmatpush1.bf16.msra.mxu0 %v624
      %721 = vmatprep.subr.bf16.mxu0 %v628
      %722 = vmatpush1.bf16.msra.mxu0 %v627
      %723 = vmatprep.subr.bf16.mxu0 %v631
      %724 = vmatpush1.bf16.msra.mxu0 %v630
      %725 = vmatprep.subr.bf16.mxu0 %v634
      %726 = vmatpush1.bf16.msra.mxu0 %v633
      %727 = vmatprep.subr.bf16.mxu0 %v637
      %728 = vmatpush1.bf16.msra.mxu0 %v636
      %729 = vmatprep.subr.bf16.mxu0 %v640
      %730 = vmatpush1.bf16.msra.mxu0 %v639
      %731 = vmatprep.subr.bf16.mxu0 %v643
      %732 = vmatpush1.bf16.msra.mxu0 %v642
      %733 = vmatprep.subr.bf16.mxu0 %v646
      %734 = vmatpush1.bf16.msra.mxu0 %v645
      %735 = vmatprep.subr.bf16.mxu0 %v649
      %736 = vmatpush1.bf16.msra.mxu0 %v648
      %737 = vmatprep.subr.bf16.mxu0 %v652
      %738 = vmatpush1.bf16.msra.mxu0 %v651
      %739 = vmatprep.subr.bf16.mxu0 %v655
      %740 = vmatpush1.bf16.msra.mxu0 %v654
      %741 = vmatprep.subr.bf16.mxu0 %v658
      %742 = vmatpush1.bf16.msra.mxu0 %v657
      %743 = vmatprep.subr.bf16.mxu0 %v661
      %744 = vmatpush1.bf16.msra.mxu0 %v660
      %745 = vmatprep.subr.bf16.mxu0 %v664
      %746 = vmatpush1.bf16.msra.mxu0 %v663
      %747 = vmatprep.subr.bf16.mxu0 %v667
      %748 = vmatpush1.bf16.msra.mxu0 %v666
      %749 = vmatprep.mubr.bf16.mxu0 %v458
      %750 = vmatmul.mubr.bf16.gmra.mrb[0].mxu0 %v457
      %v751 = vpop.f32.mrb[0].mxu0
      %v752 = vadd.f32 0.0, %v751
      %v753 = vpop.f32.mrb[0].mxu0
      %v754 = vadd.f32 0.0, %v753
      %v755 = vpop.f32.mrb[0].mxu0
      %v756 = vadd.f32 0.0, %v755
      %v757 = vpop.f32.mrb[0].mxu0
      %v758 = vadd.f32 0.0, %v757
      %759 = vdwg.mxu0
      %760 = vmatprep.subr.bf16.mxu0 0
      %761 = vmatpush1.bf16.msra.mxu0 %v623
      %762 = vmatprep.subr.bf16.mxu0 0
      %763 = vmatpush1.bf16.msra.mxu0 %v626
      %764 = vmatprep.subr.bf16.mxu0 0
      %765 = vmatpush1.bf16.msra.mxu0 %v629
      %766 = vmatprep.subr.bf16.mxu0 0
      %767 = vmatpush1.bf16.msra.mxu0 %v632
      %768 = vmatprep.subr.bf16.mxu0 0
      %769 = vmatpush1.bf16.msra.mxu0 %v635
      %770 = vmatprep.subr.bf16.mxu0 0
      %771 = vmatpush1.bf16.msra.mxu0 %v638
      %772 = vmatprep.subr.bf16.mxu0 0
      %773 = vmatpush1.bf16.msra.mxu0 %v641
      %774 = vmatprep.subr.bf16.mxu0 0
      %775 = vmatpush1.bf16.msra.mxu0 %v644
      %776 = vmatprep.subr.bf16.mxu0 0
      %777 = vmatpush1.bf16.msra.mxu0 %v647
      %778 = vmatprep.subr.bf16.mxu0 0
      %779 = vmatpush1.bf16.msra.mxu0 %v650
      %780 = vmatprep.subr.bf16.mxu0 0
      %781 = vmatpush1.bf16.msra.mxu0 %v653
      %782 = vmatprep.subr.bf16.mxu0 0
      %783 = vmatpush1.bf16.msra.mxu0 %v656
      %784 = vmatprep.subr.bf16.mxu0 0
      %785 = vmatpush1.bf16.msra.mxu0 %v659
      %786 = vmatprep.subr.bf16.mxu0 0
      %787 = vmatpush1.bf16.msra.mxu0 %v662
      %788 = vmatprep.subr.bf16.mxu0 0
      %789 = vmatpush1.bf16.msra.mxu0 %v665
      %790 = vmatprep.subr.bf16.mxu0 0
      %791 = vmatpush1.bf16.msra.mxu0 %v668
      %792 = vmatprep.mubr.bf16.mxu0 %v458
      %793 = vmatmul.mubr.bf16.gmra.mrb[0].mxu0 %v457
      %v794 = vpop.f32.mrb[0].mxu0
      %v795 = vadd.f32 0.0, %v794
      %v796 = vpop.f32.mrb[0].mxu0
      %v797 = vpop.f32.mrb[0].mxu0
      %v798 = vadd.f32 0.0, %v797
      %v799 = vpop.f32.mrb[0].mxu0
      %800 = vdwg.mxu0
      %801 = vst [vmem:[#allocation3] sm:$0xff] %v752
      %802 = vst [vmem:[#allocation3 + $0x8] sm:$0xff] %v754
      %803 = vst [vmem:[#allocation3 + $0x10] sm:$0xff] %v795
      %804 = vst [vmem:[#allocation3 + $0x18] sm:$0x7] %v756
      %805 = vst [vmem:[#allocation3 + $0x20] sm:$0x7] %v758
      %806 = vst [vmem:[#allocation3 + $0x28] sm:$0x7] %v798
      %v807 = vld [vmem:[#allocation3] sm:$0xff]
      %v808 = vld [vmem:[#allocation3 + $0x8] sm:$0xff]
      %v809 = vld [vmem:[#allocation3 + $0x10] sm:$0xff]
      %v810 = vld [vmem:[#allocation3 + $0x18] sm:$0x7]
      %v811 = vld [vmem:[#allocation3 + $0x20] sm:$0x7]
      %v812 = vld [vmem:[#allocation3 + $0x28] sm:$0x7]
      %vm813 = vcmask 1042432
      %v814 = vsel %vm813, %v812, 0.0
      %v817 = vrot.slane %v808, 7
      %v818 = vrot.slane %v811, 7
      %v819 = vsel %vm340, %v817, %v818
      %v822 = vsel %vm340, 0.0, %v817
      %vm823 = vcmask 1043456
      %v824 = vsel %vm823, %v819, 0.0
      %v825 = vadd.f32 %v809, %v822
      %v826 = vadd.f32 %v814, %v824
      %v829 = vrot.slane %v807, 6
      %v830 = vrot.slane %v810, 6
      %v831 = vsel %vm355, %v829, %v830
      %v834 = vsel %vm355, 0.0, %v829
      %v835 = vadd.f32 %v825, %v834
      %v836 = vadd.f32 %v826, %v831
      %v838 = vlaneseq
      %v839 = vshrl.u32 %v838, 7
      %v840 = vsub.s32 0, %v839
      %v841 = vrot.slane %v299, %v840
      %v843 = vadd.f32 %v835, %v841
      %v844 = vadd.f32 %v836, %v841
      %v845 = vpack.c.bf16 %v844, %v843
      %v847 = vunpack.c.l.b16 %v845
      %v848 = vunpack.c.h.b16 %v845
      %v849 = vpack.c.b16 %v847, %v847
      %v850 = vpack.c.b16 %v848, %v848
      %853 = vst [vmem:[%s289] sm:$0xf] %v849
      %vm854 = vcmask 1042432
      %vm855 = vsmask.f32 2304
      %vm856 = vmand %vm854, %vm855
      %v857 = vld [vmem:[%s289 + $0x4] sm:$0x7]
      %v858 = vsel %vm856, %v850, %v857
      %859 = vst [vmem:[%s289 + $0x4] sm:$0x7] %v858
      %vm860 = vcmask 1044480
      %v861 = vsel %vm860, %v844, 0.0
      %v862 = vadd.f32 %v843, %v861
      %v863 = vrot.slane %v862, 4
      %v864 = vadd.f32 %v862, %v863
      %v865 = vrot.slane %v864, 2
      %v866 = vadd.f32 %v864, %v865
      %v867 = vrot.slane %v866, 1
      %v868 = vadd.f32 %v866, %v867
      %v869 = vadd.f32 %v868, 0.0
      %v870 = vmul.f32 %v843, %v843
      %v871 = vmul.f32 %v844, %v844
      %v872 = vsel %vm860, %v871, 0.0
      %v873 = vadd.f32 %v870, %v872
      %v874 = vrot.slane %v873, 4
      %v875 = vadd.f32 %v873, %v874
      %v876 = vrot.slane %v875, 2
      %v877 = vadd.f32 %v875, %v876
      %v878 = vrot.slane %v877, 1
      %v879 = vadd.f32 %v877, %v878
      %v880 = vadd.f32 %v879, 0.0
      %881 = vst [vmem:[%s292] sm:$0x1] %v869
      %882 = vst [vmem:[%s295] sm:$0x1] %v880
      %p883 = scmp.lt.s32.totalorder %s19, 1
      %s884 = scalar_select %p883, %s19, 1
      %s885 = smul.addr %s884, 2
      %s886 = smul.addr %s885, 4
      %s887 = scalar_lea.vmem %s5, %s886
      %p888 = scmp.lt.s32.totalorder %s19, 1
      %s889 = scalar_select %p888, %s19, 1
      %s890 = scalar_lea.vmem %s6, %s889
      %p891 = scmp.lt.s32.totalorder %s19, 1
      %s892 = scalar_select %p891, %s19, 1
      %s893 = scalar_lea.vmem %s7, %s892
      // Predicated region
      $region41: #{cnn_forward.4} parent=39 // pred_check
        %p894 = pneg %p147
      $region42: #{cnn_forward.4} parent=39 // pred_check_branch
        %896 = sbr.rel (%p894) target = $region44
      $region43: #{cnn_forward.4} parent=39 // pred_region
        _
      $region44: #{cnn_forward.4} parent=39 // pred_fallthru
        _
      // Predicated region
      $region45: #{cnn_forward.4} parent=39 // pred_check
        %p897 = pneg %p173
      $region46: #{cnn_forward.4} parent=39 // pred_check_branch
        %899 = sbr.rel (%p897) target = $region48
      $region47: #{cnn_forward.4} parent=39 // pred_region
        _
      $region48: #{cnn_forward.4} parent=39 // pred_fallthru
        _
      // Predicated region
      $region49: #{cnn_forward.4} parent=39 // pred_check
        %p900 = pneg %p199
      $region50: #{cnn_forward.4} parent=39 // pred_check_branch
        %902 = sbr.rel (%p900) target = $region52
      $region51: #{cnn_forward.4} parent=39 // pred_region
        _
      $region52: #{cnn_forward.4} parent=39 // pred_fallthru
        _
    $region40: #{cnn_forward.4} parent=5 // pred_fallthru
      _
    %p903 = scmp.le.s32.totalorder 2, %s14
    // Predicated region
    $region53: #{cnn_forward.4} parent=5 // pred_check
      %p904 = pneg %p903
    $region54: #{cnn_forward.4} parent=5 // pred_check_branch
      %906 = sbr.rel (%p904) target = $region56
    $region55: #{cnn_forward.4} parent=5 // pred_region
      %s907 = ssub.s32 %s14, 2
      // Predicated region
      $region57: #{cnn_forward.4} parent=55 // pred_check
        %p908 = pneg %p153
      $region58: #{cnn_forward.4} parent=55 // pred_check_branch
        %910 = sbr.rel (%p908) target = $region60
      $region59: #{cnn_forward.4} parent=55 // pred_region
        %p911 = scmp.lt.s32.totalorder %s20, 1
        %s912 = scalar_select %p911, %s20, 1
        %s913 = smul.addr %s912, 2
        %s914 = smul.addr %s913, 4
        %s915 = scalar_lea.vmem %s5, %s914
      $region60: #{cnn_forward.4} parent=55 // pred_fallthru
        _
      // Predicated region
      $region61: #{cnn_forward.4} parent=55 // pred_check
        %p916 = pneg %p179
      $region62: #{cnn_forward.4} parent=55 // pred_check_branch
        %918 = sbr.rel (%p916) target = $region64
      $region63: #{cnn_forward.4} parent=55 // pred_region
        %p919 = scmp.lt.s32.totalorder %s20, 1
        %s920 = scalar_select %p919, %s20, 1
        %s921 = scalar_lea.vmem %s6, %s920
      $region64: #{cnn_forward.4} parent=55 // pred_fallthru
        _
      // Predicated region
      $region65: #{cnn_forward.4} parent=55 // pred_check
        %p922 = pneg %p205
      $region66: #{cnn_forward.4} parent=55 // pred_check_branch
        %924 = sbr.rel (%p922) target = $region68
      $region67: #{cnn_forward.4} parent=55 // pred_region
        %p925 = scmp.lt.s32.totalorder %s20, 1
        %s926 = scalar_select %p925, %s20, 1
        %s927 = scalar_lea.vmem %s7, %s926
      $region68: #{cnn_forward.4} parent=55 // pred_fallthru
        _
    $region56: #{cnn_forward.4} parent=5 // pred_fallthru
      _
  $region6: #{cnn_forward.4} parent=0 // loop_footer
    %s18 = sadd.s32 1, %s14
  $region7: #{cnn_forward.4} parent=0 // loop_footer_branch
    %13 = sbr.rel target = $region3
  $region8: #{cnn_forward.4} parent=0 // loop_exit
    _

</llo_original>
